<compile_context>
chip_gen: v6e
topology: v6e:2x2x1
jax: 0.10.0
libtpu: 0.0.40
codegen_flags: <defaults>
</compile_context>

<pallas_src>
import jax
import jax.numpy as jnp
from jax.experimental import pallas as pl
from jax.experimental.pallas import tpu as pltpu

# ---- small "ChemBERTa" config (synthetic) -----------------------------------
B = 2            # batch
S = 8            # padded sequence length
H = 32           # hidden size
NH = 4           # attention heads
DH = H // NH     # head dim
F = 64           # FFN intermediate size
L = 2            # encoder layers
NUM_TASKS = 3
VOCAB = 64
LN_EPS = 1e-12

# Packed per-layer vector params: (name, width) in lane-concatenation order.
_LVEC_FIELDS = (("bqkv", 3 * H), ("bo", H), ("ln1_g", H), ("ln1_b", H),
                ("b1", F), ("b2", H), ("ln2_g", H), ("ln2_b", H))
_LVEC_OFF = {}
_o = 0
for _n, _w in _LVEC_FIELDS:
    _LVEC_OFF[_n] = (_o, _w)
    _o += _w
LVEC_WIDTH = _o                      # 352
GVEC_WIDTH = 2 * H + NUM_TASKS       # emb_ln_g | emb_ln_b | fc_b


def _ln(x, g, b):
    # Single-pass LayerNorm: sum(x) and sum(x*x) are independent reductions
    # (can dual-issue on the XLU), var = E[x^2] - mu^2.
    inv_n = 1.0 / x.shape[-1]
    s1 = jnp.sum(x, axis=-1, keepdims=True)
    s2 = jnp.sum(x * x, axis=-1, keepdims=True)
    mu = s1 * inv_n
    var = s2 * inv_n - mu * mu
    return (x - mu) * jax.lax.rsqrt(var + LN_EPS) * g + b


def _softmax_lastdim(s):
    s = s - jnp.max(s, axis=-1, keepdims=True)
    p = jnp.exp(s)
    return p * pl.reciprocal(jnp.sum(p, axis=-1, keepdims=True), approx=True)


# ------------------------- fused forward kernel ------------------------------
def chemberta_fused_kernel(emb_ref, abias_ref, lvec_ref, gvec_ref,
                           wqkv_ref, wo_ref, w1_ref, w2_ref, fcw_ref, o_ref):
    bf = jnp.bfloat16

    # Attention bias, pre-broadcast in the wrapper to the head-major batched
    # shape [NH*B, S, S]; loaded ONCE and reused for every layer.
    abias = abias_ref[...]

    emb_g = gvec_ref[:, 0:H]
    emb_b = gvec_ref[:, H:2 * H]
    fc_b = gvec_ref[:, 2 * H:2 * H + NUM_TASKS]

    # Embedding LayerNorm; activations stay 2-D [B*S, H] f32 for the whole kernel.
    x2 = _ln(emb_ref[...], emb_g, emb_b)

    # TODO(synk): at real ChemBERTa sizes (H=384..768, L up to 12) the resident
    # stacked weights exceed v7x's 64 MiB VMEM; the layer loop should become a
    # grid=(L,) axis ("arbitrary") with per-layer weight BlockSpecs streamed and
    # double-buffered, carrying x2 in a persistent VMEM scratch.  At this toy
    # size a single ungridded call is faster (per-grid-step overhead dominates).
    for l in range(L):
        def lv(name, _l=l):
            off, width = _LVEC_OFF[name]
            return lvec_ref[_l, :, off:off + width]          # [1, width] static slice

        # ---- fused QKV projection: one [B*S,H] x [H,3H] bf16 MXU matmul ----
        xb = x2.astype(bf)                                   # single cast, reused
        qkv = (jnp.dot(xb, wqkv_ref[l], preferred_element_type=jnp.float32)
               + lv('bqkv'))                                 # [B*S, 3H] f32

        # ---- head-major batched attention: heads merged into the batch dim so
        #      each layer issues ONE scores einsum, ONE softmax, ONE ctx einsum ----
        def heads(base):
            hs = [qkv[:, base + h * DH: base + (h + 1) * DH] for h in range(NH)]
            return jnp.stack(hs, axis=0).reshape(NH * B, S, DH).astype(bf)

        q = heads(0)          # Q is pre-scaled by 1/sqrt(DH) (folded into wqkv)
        k = heads(H)
        v = heads(2 * H)
        s = jnp.einsum('bqd,bkd->bqk', q, k,
                       preferred_element_type=jnp.float32) + abias   # [NH*B,S,S]
        p = _softmax_lastdim(s)                                       # f32
        ctx = jnp.einsum('bqk,bkd->bqd', p.astype(bf), v,
                         preferred_element_type=jnp.float32)          # [NH*B,S,DH]

        # lane-concat heads back -> [B*S, H]; one fused [H,H] output projection
        ctx = ctx.reshape(NH, B * S, DH)
        ctx_all = jnp.concatenate([ctx[h] for h in range(NH)], axis=-1)
        attn = (jnp.dot(ctx_all.astype(bf), wo_ref[l],
                        preferred_element_type=jnp.float32) + lv('bo'))

        # ---- residual + LN, FFN (GELU), residual + LN (all f32 elementwise) ----
        x1 = _ln(x2 + attn, lv('ln1_g'), lv('ln1_b'))
        hmid = (jnp.dot(x1.astype(bf), w1_ref[l],
                        preferred_element_type=jnp.float32) + lv('b1'))
        # TODO(synk): HF RoBERTa uses the erf GELU; tanh approximation used here.
        hmid = jax.nn.gelu(hmid, approximate=True)
        ffn = (jnp.dot(hmid.astype(bf), w2_ref[l],
                       preferred_element_type=jnp.float32) + lv('b2'))
        x2 = _ln(x1 + ffn, lv('ln2_g'), lv('ln2_b'))

    # ---- fc head on the full [B*S, H] activation, then gather the CLS rows ----
    logits_all = (jnp.dot(x2.astype(bf), fcw_ref[...],
                          preferred_element_type=jnp.float32) + fc_b)   # [B*S, NT]
    o_ref[...] = logits_all.reshape(B, S, NUM_TASKS)[:, 0, :]


def _vmem_spec():
    return pl.BlockSpec(memory_space=pltpu.MemorySpace.VMEM)


# ------------------------------ parameters -----------------------------------
def init_params(key):
    ks = iter(jax.random.split(key, 20))
    bf = jnp.bfloat16

    def nrm(shape, dt=jnp.float32):
        return (0.02 * jax.random.normal(next(ks), shape, jnp.float32)).astype(dt)

    scale = 1.0 / (DH ** 0.5)

    # fused QKV projection weights; fold the attention scale into the Q third
    # once here (one-time transform, removes a per-scores-tile VPU multiply).
    wqkv = nrm((L, H, 3 * H))
    bqkv = nrm((L, 1, 3 * H))
    wqkv = wqkv.at[:, :, :H].multiply(scale)
    bqkv = bqkv.at[:, :, :H].multiply(scale)

    layer_vecs = {
        'bqkv': bqkv,
        'bo': nrm((L, 1, H)),
        'ln1_g': jnp.ones((L, 1, H), jnp.float32),
        'ln1_b': jnp.zeros((L, 1, H), jnp.float32),
        'b1': nrm((L, 1, F)),
        'b2': nrm((L, 1, H)),
        'ln2_g': jnp.ones((L, 1, H), jnp.float32),
        'ln2_b': jnp.zeros((L, 1, H), jnp.float32),
    }
    # pack the 8 tiny per-layer vectors into ONE array (one kernel-entry DMA)
    lvec = jnp.concatenate([layer_vecs[name] for name, _ in _LVEC_FIELDS],
                           axis=-1)                            # [L, 1, 352] f32
    assert lvec.shape == (L, 1, LVEC_WIDTH)

    # pack emb-LN params + fc bias into one tiny array
    gvec = jnp.concatenate([jnp.ones((1, H), jnp.float32),     # emb_ln_g
                            jnp.zeros((1, H), jnp.float32),    # emb_ln_b
                            jnp.zeros((1, NUM_TASKS), jnp.float32)],  # fc_b
                           axis=-1)                            # [1, 67] f32

    return {
        'word_emb': nrm((VOCAB, H)),
        'pos_emb': nrm((S, H)),
        'type_emb': nrm((1, H)),
        'lvec': lvec,
        'gvec': gvec,
        # MXU operands stored bf16 (f32 accumulation via preferred_element_type)
        'wqkv': wqkv.astype(bf),       # [L, H, 3H]
        'wo': nrm((L, H, H), bf),
        'w1': nrm((L, H, F), bf),
        'w2': nrm((L, F, H), bf),
        'fc_w': nrm((H, NUM_TASKS), bf),
    }


# ------------------------------- forward --------------------------------------
@jax.jit
def chemberta_classifier_forward(params, token_ids, attention_mask):
    # embedding gather + sums stay in plain JAX (XLA fuses them with the gather);
    # everything else (emb LN, L encoder layers, CLS gather, fc head) is ONE kernel.
    pos_ids = jnp.arange(S)
    emb = (params['word_emb'][token_ids]
           + params['pos_emb'][pos_ids][None, :, :]
           + params['type_emb'][0][None, None, :])
    emb2d = emb.reshape(B * S, H)                                      # layout plumbing in XLA

    # additive attention bias (HF extended mask), pre-broadcast to the
    # head-major batched shape so the kernel never re-materializes a broadcast.
    abias = (1.0 - attention_mask)[:, None, :] * jnp.float32(-1e9)     # [B, 1, S]
    abias_full = jnp.broadcast_to(abias[None, :, :, :],
                                  (NH, B, S, S)).reshape(NH * B, S, S)

    args = (emb2d, abias_full, params['lvec'], params['gvec'],
            params['wqkv'], params['wo'], params['w1'], params['w2'],
            params['fc_w'])

    return pl.pallas_call(
        chemberta_fused_kernel,
        out_shape=jax.ShapeDtypeStruct((B, NUM_TASKS), jnp.float32),
        in_specs=[_vmem_spec() for _ in args],
        out_specs=_vmem_spec(),
    )(*args)


if __name__ == "__main__":
    key = jax.random.PRNGKey(0)
    k_par, k_tok = jax.random.split(key)

    params = init_params(k_par)

    # simulated tokenizer output (deterministic): CLS id 0 + random ids, no padding
    token_ids = jax.random.randint(k_tok, (B, S), 1, VOCAB).at[:, 0].set(0)
    attention_mask = jnp.ones((B, S), jnp.float32)

    logits = chemberta_classifier_forward(params, token_ids, attention_mask)
    logits = jax.block_until_ready(logits)
    assert logits.shape == (B, NUM_TASKS) and logits.dtype == jnp.float32
    print("KERNEL_OK")
</pallas_src>

<mosaic_0001>
module attributes {stable_mosaic.version = 11 : i64} {
  func.func @chemberta_fused_kernel(%arg0: memref<16x32xf32, #tpu.memory_space<vmem>>, %arg1: memref<8x8x8xf32, #tpu.memory_space<vmem>>, %arg2: memref<2x1x352xf32, #tpu.memory_space<vmem>>, %arg3: memref<1x67xf32, #tpu.memory_space<vmem>>, %arg4: memref<2x32x96xbf16, #tpu.memory_space<vmem>>, %arg5: memref<2x32x32xbf16, #tpu.memory_space<vmem>>, %arg6: memref<2x32x64xbf16, #tpu.memory_space<vmem>>, %arg7: memref<2x64x32xbf16, #tpu.memory_space<vmem>>, %arg8: memref<32x3xbf16, #tpu.memory_space<vmem>>, %arg9: memref<2x3xf32, #tpu.memory_space<vmem>>) attributes {dimension_semantics = [], scalar_prefetch = 0 : i64, scratch_operands = 0 : i64, tpu.core_type = #tpu.core_type<tc>} {
    %c0 = arith.constant 0 : index
    %c0_0 = arith.constant 0 : index
    %c0_1 = arith.constant 0 : index
    %0 = vector.load %arg1[%c0, %c0_0, %c0_1] : memref<8x8x8xf32, #tpu.memory_space<vmem>>, vector<8x8x8xf32>
    %c0_2 = arith.constant 0 : index
    %c0_3 = arith.constant 0 : index
    %1 = vector.load %arg3[%c0_2, %c0_3] : memref<1x67xf32, #tpu.memory_space<vmem>>, vector<1x32xf32>
    %c0_4 = arith.constant 0 : index
    %c32 = arith.constant 32 : index
    %2 = vector.load %arg3[%c0_4, %c32] : memref<1x67xf32, #tpu.memory_space<vmem>>, vector<1x32xf32>
    %c0_5 = arith.constant 0 : index
    %c64 = arith.constant 64 : index
    %3 = vector.load %arg3[%c0_5, %c64] : memref<1x67xf32, #tpu.memory_space<vmem>>, vector<1x3xf32>
    %c0_6 = arith.constant 0 : index
    %c0_7 = arith.constant 0 : index
    %4 = vector.load %arg0[%c0_6, %c0_7] : memref<16x32xf32, #tpu.memory_space<vmem>>, vector<16x32xf32>
    %cst = arith.constant dense<0.000000e+00> : vector<16xf32>
    %5 = vector.multi_reduction <add>, %4, %cst [1] : vector<16x32xf32> to vector<16xf32>
    %6 = vector.shape_cast %5 : vector<16xf32> to vector<16x1xf32>
    %7 = arith.mulf %4, %4 : vector<16x32xf32>
    %cst_8 = arith.constant dense<0.000000e+00> : vector<16xf32>
    %8 = vector.multi_reduction <add>, %7, %cst_8 [1] : vector<16x32xf32> to vector<16xf32>
    %9 = vector.shape_cast %8 : vector<16xf32> to vector<16x1xf32>
    %cst_9 = arith.constant 3.125000e-02 : f32
    %10 = vector.broadcast %cst_9 : f32 to vector<16x1xf32>
    %11 = arith.mulf %6, %10 : vector<16x1xf32>
    %cst_10 = arith.constant 3.125000e-02 : f32
    %12 = vector.broadcast %cst_10 : f32 to vector<16x1xf32>
    %13 = arith.mulf %9, %12 : vector<16x1xf32>
    %14 = arith.mulf %11, %11 : vector<16x1xf32>
    %15 = arith.subf %13, %14 : vector<16x1xf32>
    %16 = vector.broadcast %11 : vector<16x1xf32> to vector<16x32xf32>
    %17 = arith.subf %4, %16 : vector<16x32xf32>
    %cst_11 = arith.constant 9.99999996E-13 : f32
    %18 = vector.broadcast %cst_11 : f32 to vector<16x1xf32>
    %19 = arith.addf %15, %18 : vector<16x1xf32>
    %20 = math.rsqrt %19 : vector<16x1xf32>
    %21 = vector.broadcast %20 : vector<16x1xf32> to vector<16x32xf32>
    %22 = arith.mulf %17, %21 : vector<16x32xf32>
    %23 = vector.broadcast %1 : vector<1x32xf32> to vector<16x32xf32>
    %24 = arith.mulf %22, %23 : vector<16x32xf32>
    %25 = vector.broadcast %2 : vector<1x32xf32> to vector<16x32xf32>
    %26 = arith.addf %24, %25 : vector<16x32xf32>
    %27 = arith.truncf %26 : vector<16x32xf32> to vector<16x32xbf16>
    %c0_12 = arith.constant 0 : index
    %c0_13 = arith.constant 0 : index
    %c0_14 = arith.constant 0 : index
    %28 = vector.load %arg4[%c0_12, %c0_13, %c0_14] : memref<2x32x96xbf16, #tpu.memory_space<vmem>>, vector<1x32x96xbf16>
    %29 = vector.shape_cast %28 : vector<1x32x96xbf16> to vector<32x96xbf16>
    %cst_15 = arith.constant dense<0.000000e+00> : vector<16x96xf32>
    %30 = tpu.matmul %27, %29, %cst_15 {dimension_numbers = #tpu.dot_dimension_numbers<[1], [0], [0], [1], [0, 0, 1, 1], [], []>} : vector<16x32xbf16>, vector<32x96xbf16>, vector<16x96xf32> -> vector<16x96xf32>
    %c0_16 = arith.constant 0 : index
    %c0_17 = arith.constant 0 : index
    %c0_18 = arith.constant 0 : index
    %31 = vector.load %arg2[%c0_16, %c0_17, %c0_18] : memref<2x1x352xf32, #tpu.memory_space<vmem>>, vector<1x1x96xf32>
    %32 = vector.shape_cast %31 : vector<1x1x96xf32> to vector<1x96xf32>
    %33 = vector.broadcast %32 : vector<1x96xf32> to vector<16x96xf32>
    %34 = arith.addf %30, %33 : vector<16x96xf32>
    %35 = vector.extract_strided_slice %34 {offsets = [0, 0], sizes = [16, 8], strides = [1, 1]} : vector<16x96xf32> to vector<16x8xf32>
    %36 = vector.extract_strided_slice %34 {offsets = [0, 8], sizes = [16, 8], strides = [1, 1]} : vector<16x96xf32> to vector<16x8xf32>
    %37 = vector.extract_strided_slice %34 {offsets = [0, 16], sizes = [16, 8], strides = [1, 1]} : vector<16x96xf32> to vector<16x8xf32>
    %38 = vector.extract_strided_slice %34 {offsets = [0, 24], sizes = [16, 8], strides = [1, 1]} : vector<16x96xf32> to vector<16x8xf32>
    %39 = vector.shape_cast %35 : vector<16x8xf32> to vector<1x16x8xf32>
    %40 = vector.shape_cast %36 : vector<16x8xf32> to vector<1x16x8xf32>
    %41 = vector.shape_cast %37 : vector<16x8xf32> to vector<1x16x8xf32>
    %42 = vector.shape_cast %38 : vector<16x8xf32> to vector<1x16x8xf32>
    %43 = tpu.concatenate %39, %40, %41, %42 in 0 : vector<1x16x8xf32>, vector<1x16x8xf32>, vector<1x16x8xf32>, vector<1x16x8xf32> -> vector<4x16x8xf32>
    %44 = vector.shape_cast %43 : vector<4x16x8xf32> to vector<8x8x8xf32>
    %45 = arith.truncf %44 : vector<8x8x8xf32> to vector<8x8x8xbf16>
    %46 = vector.extract_strided_slice %34 {offsets = [0, 32], sizes = [16, 8], strides = [1, 1]} : vector<16x96xf32> to vector<16x8xf32>
    %47 = vector.extract_strided_slice %34 {offsets = [0, 40], sizes = [16, 8], strides = [1, 1]} : vector<16x96xf32> to vector<16x8xf32>
    %48 = vector.extract_strided_slice %34 {offsets = [0, 48], sizes = [16, 8], strides = [1, 1]} : vector<16x96xf32> to vector<16x8xf32>
    %49 = vector.extract_strided_slice %34 {offsets = [0, 56], sizes = [16, 8], strides = [1, 1]} : vector<16x96xf32> to vector<16x8xf32>
    %50 = vector.shape_cast %46 : vector<16x8xf32> to vector<1x16x8xf32>
    %51 = vector.shape_cast %47 : vector<16x8xf32> to vector<1x16x8xf32>
    %52 = vector.shape_cast %48 : vector<16x8xf32> to vector<1x16x8xf32>
    %53 = vector.shape_cast %49 : vector<16x8xf32> to vector<1x16x8xf32>
    %54 = tpu.concatenate %50, %51, %52, %53 in 0 : vector<1x16x8xf32>, vector<1x16x8xf32>, vector<1x16x8xf32>, vector<1x16x8xf32> -> vector<4x16x8xf32>
    %55 = vector.shape_cast %54 : vector<4x16x8xf32> to vector<8x8x8xf32>
    %56 = arith.truncf %55 : vector<8x8x8xf32> to vector<8x8x8xbf16>
    %57 = vector.extract_strided_slice %34 {offsets = [0, 64], sizes = [16, 8], strides = [1, 1]} : vector<16x96xf32> to vector<16x8xf32>
    %58 = vector.extract_strided_slice %34 {offsets = [0, 72], sizes = [16, 8], strides = [1, 1]} : vector<16x96xf32> to vector<16x8xf32>
    %59 = vector.extract_strided_slice %34 {offsets = [0, 80], sizes = [16, 8], strides = [1, 1]} : vector<16x96xf32> to vector<16x8xf32>
    %60 = vector.extract_strided_slice %34 {offsets = [0, 88], sizes = [16, 8], strides = [1, 1]} : vector<16x96xf32> to vector<16x8xf32>
    %61 = vector.shape_cast %57 : vector<16x8xf32> to vector<1x16x8xf32>
    %62 = vector.shape_cast %58 : vector<16x8xf32> to vector<1x16x8xf32>
    %63 = vector.shape_cast %59 : vector<16x8xf32> to vector<1x16x8xf32>
    %64 = vector.shape_cast %60 : vector<16x8xf32> to vector<1x16x8xf32>
    %65 = tpu.concatenate %61, %62, %63, %64 in 0 : vector<1x16x8xf32>, vector<1x16x8xf32>, vector<1x16x8xf32>, vector<1x16x8xf32> -> vector<4x16x8xf32>
    %66 = vector.shape_cast %65 : vector<4x16x8xf32> to vector<8x8x8xf32>
    %67 = arith.truncf %66 : vector<8x8x8xf32> to vector<8x8x8xbf16>
    "tpu.trace_start"() <{level = 10 : i32, message = "bqd,bkd->bqk"}> : () -> ()
    %cst_19 = arith.constant dense<0.000000e+00> : vector<8x8x8xf32>
    %68 = tpu.matmul %45, %56, %cst_19 {dimension_numbers = #tpu.dot_dimension_numbers<[2], [2], [1], [1], [0, 0, 0, 1, 1, 1], [0], [0]>} : vector<8x8x8xbf16>, vector<8x8x8xbf16>, vector<8x8x8xf32> -> vector<8x8x8xf32>
    "tpu.trace_stop"() : () -> ()
    %69 = arith.addf %68, %0 : vector<8x8x8xf32>
    %cst_20 = arith.constant dense<0xFF800000> : vector<8x8xf32>
    %70 = vector.multi_reduction <maximumf>, %69, %cst_20 [2] : vector<8x8x8xf32> to vector<8x8xf32>
    %71 = vector.shape_cast %70 : vector<8x8xf32> to vector<8x8x1xf32>
    %72 = vector.broadcast %71 : vector<8x8x1xf32> to vector<8x8x8xf32>
    %73 = arith.subf %69, %72 : vector<8x8x8xf32>
    %74 = math.exp %73 : vector<8x8x8xf32>
    %cst_21 = arith.constant dense<0.000000e+00> : vector<8x8xf32>
    %75 = vector.multi_reduction <add>, %74, %cst_21 [2] : vector<8x8x8xf32> to vector<8x8xf32>
    %76 = vector.shape_cast %75 : vector<8x8xf32> to vector<8x8x1xf32>
    %77 = tpu.reciprocal %76 {approx = true} : vector<8x8x1xf32> -> vector<8x8x1xf32>
    %78 = vector.broadcast %77 : vector<8x8x1xf32> to vector<8x8x8xf32>
    %79 = arith.mulf %74, %78 : vector<8x8x8xf32>
    %80 = arith.truncf %79 : vector<8x8x8xf32> to vector<8x8x8xbf16>
    "tpu.trace_start"() <{level = 10 : i32, message = "bqk,bkd->bqd"}> : () -> ()
    %cst_22 = arith.constant dense<0.000000e+00> : vector<8x8x8xf32>
    %81 = tpu.matmul %80, %67, %cst_22 {dimension_numbers = #tpu.dot_dimension_numbers<[2], [1], [1], [2], [0, 0, 0, 1, 1, 2], [0], [0]>} : vector<8x8x8xbf16>, vector<8x8x8xbf16>, vector<8x8x8xf32> -> vector<8x8x8xf32>
    "tpu.trace_stop"() : () -> ()
    %82 = vector.shape_cast %81 : vector<8x8x8xf32> to vector<4x16x8xf32>
    %83 = vector.extract_strided_slice %82 {offsets = [0, 0, 0], sizes = [1, 16, 8], strides = [1, 1, 1]} : vector<4x16x8xf32> to vector<1x16x8xf32>
    %84 = vector.shape_cast %83 : vector<1x16x8xf32> to vector<16x8xf32>
    %85 = vector.extract_strided_slice %82 {offsets = [1, 0, 0], sizes = [1, 16, 8], strides = [1, 1, 1]} : vector<4x16x8xf32> to vector<1x16x8xf32>
    %86 = vector.shape_cast %85 : vector<1x16x8xf32> to vector<16x8xf32>
    %87 = vector.extract_strided_slice %82 {offsets = [2, 0, 0], sizes = [1, 16, 8], strides = [1, 1, 1]} : vector<4x16x8xf32> to vector<1x16x8xf32>
    %88 = vector.shape_cast %87 : vector<1x16x8xf32> to vector<16x8xf32>
    %89 = vector.extract_strided_slice %82 {offsets = [3, 0, 0], sizes = [1, 16, 8], strides = [1, 1, 1]} : vector<4x16x8xf32> to vector<1x16x8xf32>
    %90 = vector.shape_cast %89 : vector<1x16x8xf32> to vector<16x8xf32>
    %91 = tpu.concatenate %84, %86, %88, %90 in 1 : vector<16x8xf32>, vector<16x8xf32>, vector<16x8xf32>, vector<16x8xf32> -> vector<16x32xf32>
    %92 = arith.truncf %91 : vector<16x32xf32> to vector<16x32xbf16>
    %c0_23 = arith.constant 0 : index
    %c0_24 = arith.constant 0 : index
    %c0_25 = arith.constant 0 : index
    %93 = vector.load %arg5[%c0_23, %c0_24, %c0_25] : memref<2x32x32xbf16, #tpu.memory_space<vmem>>, vector<1x32x32xbf16>
    %94 = vector.shape_cast %93 : vector<1x32x32xbf16> to vector<32x32xbf16>
    %cst_26 = arith.constant dense<0.000000e+00> : vector<16x32xf32>
    %95 = tpu.matmul %92, %94, %cst_26 {dimension_numbers = #tpu.dot_dimension_numbers<[1], [0], [0], [1], [0, 0, 1, 1], [], []>} : vector<16x32xbf16>, vector<32x32xbf16>, vector<16x32xf32> -> vector<16x32xf32>
    %c0_27 = arith.constant 0 : index
    %c0_28 = arith.constant 0 : index
    %c96 = arith.constant 96 : index
    %96 = vector.load %arg2[%c0_27, %c0_28, %c96] : memref<2x1x352xf32, #tpu.memory_space<vmem>>, vector<1x1x32xf32>
    %97 = vector.shape_cast %96 : vector<1x1x32xf32> to vector<1x32xf32>
    %98 = vector.broadcast %97 : vector<1x32xf32> to vector<16x32xf32>
    %99 = arith.addf %95, %98 : vector<16x32xf32>
    %100 = arith.addf %26, %99 : vector<16x32xf32>
    %c0_29 = arith.constant 0 : index
    %c0_30 = arith.constant 0 : index
    %c128 = arith.constant 128 : index
    %101 = vector.load %arg2[%c0_29, %c0_30, %c128] : memref<2x1x352xf32, #tpu.memory_space<vmem>>, vector<1x1x32xf32>
    %102 = vector.shape_cast %101 : vector<1x1x32xf32> to vector<1x32xf32>
    %c0_31 = arith.constant 0 : index
    %c0_32 = arith.constant 0 : index
    %c160 = arith.constant 160 : index
    %103 = vector.load %arg2[%c0_31, %c0_32, %c160] : memref<2x1x352xf32, #tpu.memory_space<vmem>>, vector<1x1x32xf32>
    %104 = vector.shape_cast %103 : vector<1x1x32xf32> to vector<1x32xf32>
    %cst_33 = arith.constant dense<0.000000e+00> : vector<16xf32>
    %105 = vector.multi_reduction <add>, %100, %cst_33 [1] : vector<16x32xf32> to vector<16xf32>
    %106 = vector.shape_cast %105 : vector<16xf32> to vector<16x1xf32>
    %107 = arith.mulf %100, %100 : vector<16x32xf32>
    %cst_34 = arith.constant dense<0.000000e+00> : vector<16xf32>
    %108 = vector.multi_reduction <add>, %107, %cst_34 [1] : vector<16x32xf32> to vector<16xf32>
    %109 = vector.shape_cast %108 : vector<16xf32> to vector<16x1xf32>
    %cst_35 = arith.constant 3.125000e-02 : f32
    %110 = vector.broadcast %cst_35 : f32 to vector<16x1xf32>
    %111 = arith.mulf %106, %110 : vector<16x1xf32>
    %cst_36 = arith.constant 3.125000e-02 : f32
    %112 = vector.broadcast %cst_36 : f32 to vector<16x1xf32>
    %113 = arith.mulf %109, %112 : vector<16x1xf32>
    %114 = arith.mulf %111, %111 : vector<16x1xf32>
    %115 = arith.subf %113, %114 : vector<16x1xf32>
    %116 = vector.broadcast %111 : vector<16x1xf32> to vector<16x32xf32>
    %117 = arith.subf %100, %116 : vector<16x32xf32>
    %cst_37 = arith.constant 9.99999996E-13 : f32
    %118 = vector.broadcast %cst_37 : f32 to vector<16x1xf32>
    %119 = arith.addf %115, %118 : vector<16x1xf32>
    %120 = math.rsqrt %119 : vector<16x1xf32>
    %121 = vector.broadcast %120 : vector<16x1xf32> to vector<16x32xf32>
    %122 = arith.mulf %117, %121 : vector<16x32xf32>
    %123 = vector.broadcast %102 : vector<1x32xf32> to vector<16x32xf32>
    %124 = arith.mulf %122, %123 : vector<16x32xf32>
    %125 = vector.broadcast %104 : vector<1x32xf32> to vector<16x32xf32>
    %126 = arith.addf %124, %125 : vector<16x32xf32>
    %127 = arith.truncf %126 : vector<16x32xf32> to vector<16x32xbf16>
    %c0_38 = arith.constant 0 : index
    %c0_39 = arith.constant 0 : index
    %c0_40 = arith.constant 0 : index
    %128 = vector.load %arg6[%c0_38, %c0_39, %c0_40] : memref<2x32x64xbf16, #tpu.memory_space<vmem>>, vector<1x32x64xbf16>
    %129 = vector.shape_cast %128 : vector<1x32x64xbf16> to vector<32x64xbf16>
    %cst_41 = arith.constant dense<0.000000e+00> : vector<16x64xf32>
    %130 = tpu.matmul %127, %129, %cst_41 {dimension_numbers = #tpu.dot_dimension_numbers<[1], [0], [0], [1], [0, 0, 1, 1], [], []>} : vector<16x32xbf16>, vector<32x64xbf16>, vector<16x64xf32> -> vector<16x64xf32>
    %c0_42 = arith.constant 0 : index
    %c0_43 = arith.constant 0 : index
    %c192 = arith.constant 192 : index
    %131 = vector.load %arg2[%c0_42, %c0_43, %c192] : memref<2x1x352xf32, #tpu.memory_space<vmem>>, vector<1x1x64xf32>
    %132 = vector.shape_cast %131 : vector<1x1x64xf32> to vector<1x64xf32>
    %133 = vector.broadcast %132 : vector<1x64xf32> to vector<16x64xf32>
    %134 = arith.addf %130, %133 : vector<16x64xf32>
    %135 = arith.mulf %134, %134 : vector<16x64xf32>
    %136 = arith.mulf %134, %135 : vector<16x64xf32>
    %cst_44 = arith.constant 4.471500e-02 : f32
    %137 = vector.broadcast %cst_44 : f32 to vector<16x64xf32>
    %138 = arith.mulf %137, %136 : vector<16x64xf32>
    %139 = arith.addf %134, %138 : vector<16x64xf32>
    %cst_45 = arith.constant 0.797884583 : f32
    %140 = vector.broadcast %cst_45 : f32 to vector<16x64xf32>
    %141 = arith.mulf %140, %139 : vector<16x64xf32>
    %142 = math.tanh %141 : vector<16x64xf32>
    %cst_46 = arith.constant 1.000000e+00 : f32
    %143 = vector.broadcast %cst_46 : f32 to vector<16x64xf32>
    %144 = arith.addf %143, %142 : vector<16x64xf32>
    %cst_47 = arith.constant 5.000000e-01 : f32
    %145 = vector.broadcast %cst_47 : f32 to vector<16x64xf32>
    %146 = arith.mulf %145, %144 : vector<16x64xf32>
    %147 = arith.mulf %134, %146 : vector<16x64xf32>
    %148 = arith.truncf %147 : vector<16x64xf32> to vector<16x64xbf16>
    %c0_48 = arith.constant 0 : index
    %c0_49 = arith.constant 0 : index
    %c0_50 = arith.constant 0 : index
    %149 = vector.load %arg7[%c0_48, %c0_49, %c0_50] : memref<2x64x32xbf16, #tpu.memory_space<vmem>>, vector<1x64x32xbf16>
    %150 = vector.shape_cast %149 : vector<1x64x32xbf16> to vector<64x32xbf16>
    %cst_51 = arith.constant dense<0.000000e+00> : vector<16x32xf32>
    %151 = tpu.matmul %148, %150, %cst_51 {dimension_numbers = #tpu.dot_dimension_numbers<[1], [0], [0], [1], [0, 0, 1, 1], [], []>} : vector<16x64xbf16>, vector<64x32xbf16>, vector<16x32xf32> -> vector<16x32xf32>
    %c0_52 = arith.constant 0 : index
    %c0_53 = arith.constant 0 : index
    %c256 = arith.constant 256 : index
    %152 = vector.load %arg2[%c0_52, %c0_53, %c256] : memref<2x1x352xf32, #tpu.memory_space<vmem>>, vector<1x1x32xf32>
    %153 = vector.shape_cast %152 : vector<1x1x32xf32> to vector<1x32xf32>
    %154 = vector.broadcast %153 : vector<1x32xf32> to vector<16x32xf32>
    %155 = arith.addf %151, %154 : vector<16x32xf32>
    %156 = arith.addf %126, %155 : vector<16x32xf32>
    %c0_54 = arith.constant 0 : index
    %c0_55 = arith.constant 0 : index
    %c288 = arith.constant 288 : index
    %157 = vector.load %arg2[%c0_54, %c0_55, %c288] : memref<2x1x352xf32, #tpu.memory_space<vmem>>, vector<1x1x32xf32>
    %158 = vector.shape_cast %157 : vector<1x1x32xf32> to vector<1x32xf32>
    %c0_56 = arith.constant 0 : index
    %c0_57 = arith.constant 0 : index
    %c320 = arith.constant 320 : index
    %159 = vector.load %arg2[%c0_56, %c0_57, %c320] : memref<2x1x352xf32, #tpu.memory_space<vmem>>, vector<1x1x32xf32>
    %160 = vector.shape_cast %159 : vector<1x1x32xf32> to vector<1x32xf32>
    %cst_58 = arith.constant dense<0.000000e+00> : vector<16xf32>
    %161 = vector.multi_reduction <add>, %156, %cst_58 [1] : vector<16x32xf32> to vector<16xf32>
    %162 = vector.shape_cast %161 : vector<16xf32> to vector<16x1xf32>
    %163 = arith.mulf %156, %156 : vector<16x32xf32>
    %cst_59 = arith.constant dense<0.000000e+00> : vector<16xf32>
    %164 = vector.multi_reduction <add>, %163, %cst_59 [1] : vector<16x32xf32> to vector<16xf32>
    %165 = vector.shape_cast %164 : vector<16xf32> to vector<16x1xf32>
    %cst_60 = arith.constant 3.125000e-02 : f32
    %166 = vector.broadcast %cst_60 : f32 to vector<16x1xf32>
    %167 = arith.mulf %162, %166 : vector<16x1xf32>
    %cst_61 = arith.constant 3.125000e-02 : f32
    %168 = vector.broadcast %cst_61 : f32 to vector<16x1xf32>
    %169 = arith.mulf %165, %168 : vector<16x1xf32>
    %170 = arith.mulf %167, %167 : vector<16x1xf32>
    %171 = arith.subf %169, %170 : vector<16x1xf32>
    %172 = vector.broadcast %167 : vector<16x1xf32> to vector<16x32xf32>
    %173 = arith.subf %156, %172 : vector<16x32xf32>
    %cst_62 = arith.constant 9.99999996E-13 : f32
    %174 = vector.broadcast %cst_62 : f32 to vector<16x1xf32>
    %175 = arith.addf %171, %174 : vector<16x1xf32>
    %176 = math.rsqrt %175 : vector<16x1xf32>
    %177 = vector.broadcast %176 : vector<16x1xf32> to vector<16x32xf32>
    %178 = arith.mulf %173, %177 : vector<16x32xf32>
    %179 = vector.broadcast %158 : vector<1x32xf32> to vector<16x32xf32>
    %180 = arith.mulf %178, %179 : vector<16x32xf32>
    %181 = vector.broadcast %160 : vector<1x32xf32> to vector<16x32xf32>
    %182 = arith.addf %180, %181 : vector<16x32xf32>
    %183 = arith.truncf %182 : vector<16x32xf32> to vector<16x32xbf16>
    %c1 = arith.constant 1 : index
    %c0_63 = arith.constant 0 : index
    %c0_64 = arith.constant 0 : index
    %184 = vector.load %arg4[%c1, %c0_63, %c0_64] : memref<2x32x96xbf16, #tpu.memory_space<vmem>>, vector<1x32x96xbf16>
    %185 = vector.shape_cast %184 : vector<1x32x96xbf16> to vector<32x96xbf16>
    %cst_65 = arith.constant dense<0.000000e+00> : vector<16x96xf32>
    %186 = tpu.matmul %183, %185, %cst_65 {dimension_numbers = #tpu.dot_dimension_numbers<[1], [0], [0], [1], [0, 0, 1, 1], [], []>} : vector<16x32xbf16>, vector<32x96xbf16>, vector<16x96xf32> -> vector<16x96xf32>
    %c1_66 = arith.constant 1 : index
    %c0_67 = arith.constant 0 : index
    %c0_68 = arith.constant 0 : index
    %187 = vector.load %arg2[%c1_66, %c0_67, %c0_68] : memref<2x1x352xf32, #tpu.memory_space<vmem>>, vector<1x1x96xf32>
    %188 = vector.shape_cast %187 : vector<1x1x96xf32> to vector<1x96xf32>
    %189 = vector.broadcast %188 : vector<1x96xf32> to vector<16x96xf32>
    %190 = arith.addf %186, %189 : vector<16x96xf32>
    %191 = vector.extract_strided_slice %190 {offsets = [0, 0], sizes = [16, 8], strides = [1, 1]} : vector<16x96xf32> to vector<16x8xf32>
    %192 = vector.extract_strided_slice %190 {offsets = [0, 8], sizes = [16, 8], strides = [1, 1]} : vector<16x96xf32> to vector<16x8xf32>
    %193 = vector.extract_strided_slice %190 {offsets = [0, 16], sizes = [16, 8], strides = [1, 1]} : vector<16x96xf32> to vector<16x8xf32>
    %194 = vector.extract_strided_slice %190 {offsets = [0, 24], sizes = [16, 8], strides = [1, 1]} : vector<16x96xf32> to vector<16x8xf32>
    %195 = vector.shape_cast %191 : vector<16x8xf32> to vector<1x16x8xf32>
    %196 = vector.shape_cast %192 : vector<16x8xf32> to vector<1x16x8xf32>
    %197 = vector.shape_cast %193 : vector<16x8xf32> to vector<1x16x8xf32>
    %198 = vector.shape_cast %194 : vector<16x8xf32> to vector<1x16x8xf32>
    %199 = tpu.concatenate %195, %196, %197, %198 in 0 : vector<1x16x8xf32>, vector<1x16x8xf32>, vector<1x16x8xf32>, vector<1x16x8xf32> -> vector<4x16x8xf32>
    %200 = vector.shape_cast %199 : vector<4x16x8xf32> to vector<8x8x8xf32>
    %201 = arith.truncf %200 : vector<8x8x8xf32> to vector<8x8x8xbf16>
    %202 = vector.extract_strided_slice %190 {offsets = [0, 32], sizes = [16, 8], strides = [1, 1]} : vector<16x96xf32> to vector<16x8xf32>
    %203 = vector.extract_strided_slice %190 {offsets = [0, 40], sizes = [16, 8], strides = [1, 1]} : vector<16x96xf32> to vector<16x8xf32>
    %204 = vector.extract_strided_slice %190 {offsets = [0, 48], sizes = [16, 8], strides = [1, 1]} : vector<16x96xf32> to vector<16x8xf32>
    %205 = vector.extract_strided_slice %190 {offsets = [0, 56], sizes = [16, 8], strides = [1, 1]} : vector<16x96xf32> to vector<16x8xf32>
    %206 = vector.shape_cast %202 : vector<16x8xf32> to vector<1x16x8xf32>
    %207 = vector.shape_cast %203 : vector<16x8xf32> to vector<1x16x8xf32>
    %208 = vector.shape_cast %204 : vector<16x8xf32> to vector<1x16x8xf32>
    %209 = vector.shape_cast %205 : vector<16x8xf32> to vector<1x16x8xf32>
    %210 = tpu.concatenate %206, %207, %208, %209 in 0 : vector<1x16x8xf32>, vector<1x16x8xf32>, vector<1x16x8xf32>, vector<1x16x8xf32> -> vector<4x16x8xf32>
    %211 = vector.shape_cast %210 : vector<4x16x8xf32> to vector<8x8x8xf32>
    %212 = arith.truncf %211 : vector<8x8x8xf32> to vector<8x8x8xbf16>
    %213 = vector.extract_strided_slice %190 {offsets = [0, 64], sizes = [16, 8], strides = [1, 1]} : vector<16x96xf32> to vector<16x8xf32>
    %214 = vector.extract_strided_slice %190 {offsets = [0, 72], sizes = [16, 8], strides = [1, 1]} : vector<16x96xf32> to vector<16x8xf32>
    %215 = vector.extract_strided_slice %190 {offsets = [0, 80], sizes = [16, 8], strides = [1, 1]} : vector<16x96xf32> to vector<16x8xf32>
    %216 = vector.extract_strided_slice %190 {offsets = [0, 88], sizes = [16, 8], strides = [1, 1]} : vector<16x96xf32> to vector<16x8xf32>
    %217 = vector.shape_cast %213 : vector<16x8xf32> to vector<1x16x8xf32>
    %218 = vector.shape_cast %214 : vector<16x8xf32> to vector<1x16x8xf32>
    %219 = vector.shape_cast %215 : vector<16x8xf32> to vector<1x16x8xf32>
    %220 = vector.shape_cast %216 : vector<16x8xf32> to vector<1x16x8xf32>
    %221 = tpu.concatenate %217, %218, %219, %220 in 0 : vector<1x16x8xf32>, vector<1x16x8xf32>, vector<1x16x8xf32>, vector<1x16x8xf32> -> vector<4x16x8xf32>
    %222 = vector.shape_cast %221 : vector<4x16x8xf32> to vector<8x8x8xf32>
    %223 = arith.truncf %222 : vector<8x8x8xf32> to vector<8x8x8xbf16>
    "tpu.trace_start"() <{level = 10 : i32, message = "bqd,bkd->bqk"}> : () -> ()
    %cst_69 = arith.constant dense<0.000000e+00> : vector<8x8x8xf32>
    %224 = tpu.matmul %201, %212, %cst_69 {dimension_numbers = #tpu.dot_dimension_numbers<[2], [2], [1], [1], [0, 0, 0, 1, 1, 1], [0], [0]>} : vector<8x8x8xbf16>, vector<8x8x8xbf16>, vector<8x8x8xf32> -> vector<8x8x8xf32>
    "tpu.trace_stop"() : () -> ()
    %225 = arith.addf %224, %0 : vector<8x8x8xf32>
    %cst_70 = arith.constant dense<0xFF800000> : vector<8x8xf32>
    %226 = vector.multi_reduction <maximumf>, %225, %cst_70 [2] : vector<8x8x8xf32> to vector<8x8xf32>
    %227 = vector.shape_cast %226 : vector<8x8xf32> to vector<8x8x1xf32>
    %228 = vector.broadcast %227 : vector<8x8x1xf32> to vector<8x8x8xf32>
    %229 = arith.subf %225, %228 : vector<8x8x8xf32>
    %230 = math.exp %229 : vector<8x8x8xf32>
    %cst_71 = arith.constant dense<0.000000e+00> : vector<8x8xf32>
    %231 = vector.multi_reduction <add>, %230, %cst_71 [2] : vector<8x8x8xf32> to vector<8x8xf32>
    %232 = vector.shape_cast %231 : vector<8x8xf32> to vector<8x8x1xf32>
    %233 = tpu.reciprocal %232 {approx = true} : vector<8x8x1xf32> -> vector<8x8x1xf32>
    %234 = vector.broadcast %233 : vector<8x8x1xf32> to vector<8x8x8xf32>
    %235 = arith.mulf %230, %234 : vector<8x8x8xf32>
    %236 = arith.truncf %235 : vector<8x8x8xf32> to vector<8x8x8xbf16>
    "tpu.trace_start"() <{level = 10 : i32, message = "bqk,bkd->bqd"}> : () -> ()
    %cst_72 = arith.constant dense<0.000000e+00> : vector<8x8x8xf32>
    %237 = tpu.matmul %236, %223, %cst_72 {dimension_numbers = #tpu.dot_dimension_numbers<[2], [1], [1], [2], [0, 0, 0, 1, 1, 2], [0], [0]>} : vector<8x8x8xbf16>, vector<8x8x8xbf16>, vector<8x8x8xf32> -> vector<8x8x8xf32>
    "tpu.trace_stop"() : () -> ()
    %238 = vector.shape_cast %237 : vector<8x8x8xf32> to vector<4x16x8xf32>
    %239 = vector.extract_strided_slice %238 {offsets = [0, 0, 0], sizes = [1, 16, 8], strides = [1, 1, 1]} : vector<4x16x8xf32> to vector<1x16x8xf32>
    %240 = vector.shape_cast %239 : vector<1x16x8xf32> to vector<16x8xf32>
    %241 = vector.extract_strided_slice %238 {offsets = [1, 0, 0], sizes = [1, 16, 8], strides = [1, 1, 1]} : vector<4x16x8xf32> to vector<1x16x8xf32>
    %242 = vector.shape_cast %241 : vector<1x16x8xf32> to vector<16x8xf32>
    %243 = vector.extract_strided_slice %238 {offsets = [2, 0, 0], sizes = [1, 16, 8], strides = [1, 1, 1]} : vector<4x16x8xf32> to vector<1x16x8xf32>
    %244 = vector.shape_cast %243 : vector<1x16x8xf32> to vector<16x8xf32>
    %245 = vector.extract_strided_slice %238 {offsets = [3, 0, 0], sizes = [1, 16, 8], strides = [1, 1, 1]} : vector<4x16x8xf32> to vector<1x16x8xf32>
    %246 = vector.shape_cast %245 : vector<1x16x8xf32> to vector<16x8xf32>
    %247 = tpu.concatenate %240, %242, %244, %246 in 1 : vector<16x8xf32>, vector<16x8xf32>, vector<16x8xf32>, vector<16x8xf32> -> vector<16x32xf32>
    %248 = arith.truncf %247 : vector<16x32xf32> to vector<16x32xbf16>
    %c1_73 = arith.constant 1 : index
    %c0_74 = arith.constant 0 : index
    %c0_75 = arith.constant 0 : index
    %249 = vector.load %arg5[%c1_73, %c0_74, %c0_75] : memref<2x32x32xbf16, #tpu.memory_space<vmem>>, vector<1x32x32xbf16>
    %250 = vector.shape_cast %249 : vector<1x32x32xbf16> to vector<32x32xbf16>
    %cst_76 = arith.constant dense<0.000000e+00> : vector<16x32xf32>
    %251 = tpu.matmul %248, %250, %cst_76 {dimension_numbers = #tpu.dot_dimension_numbers<[1], [0], [0], [1], [0, 0, 1, 1], [], []>} : vector<16x32xbf16>, vector<32x32xbf16>, vector<16x32xf32> -> vector<16x32xf32>
    %c1_77 = arith.constant 1 : index
    %c0_78 = arith.constant 0 : index
    %c96_79 = arith.constant 96 : index
    %252 = vector.load %arg2[%c1_77, %c0_78, %c96_79] : memref<2x1x352xf32, #tpu.memory_space<vmem>>, vector<1x1x32xf32>
    %253 = vector.shape_cast %252 : vector<1x1x32xf32> to vector<1x32xf32>
    %254 = vector.broadcast %253 : vector<1x32xf32> to vector<16x32xf32>
    %255 = arith.addf %251, %254 : vector<16x32xf32>
    %256 = arith.addf %182, %255 : vector<16x32xf32>
    %c1_80 = arith.constant 1 : index
    %c0_81 = arith.constant 0 : index
    %c128_82 = arith.constant 128 : index
    %257 = vector.load %arg2[%c1_80, %c0_81, %c128_82] : memref<2x1x352xf32, #tpu.memory_space<vmem>>, vector<1x1x32xf32>
    %258 = vector.shape_cast %257 : vector<1x1x32xf32> to vector<1x32xf32>
    %c1_83 = arith.constant 1 : index
    %c0_84 = arith.constant 0 : index
    %c160_85 = arith.constant 160 : index
    %259 = vector.load %arg2[%c1_83, %c0_84, %c160_85] : memref<2x1x352xf32, #tpu.memory_space<vmem>>, vector<1x1x32xf32>
    %260 = vector.shape_cast %259 : vector<1x1x32xf32> to vector<1x32xf32>
    %cst_86 = arith.constant dense<0.000000e+00> : vector<16xf32>
    %261 = vector.multi_reduction <add>, %256, %cst_86 [1] : vector<16x32xf32> to vector<16xf32>
    %262 = vector.shape_cast %261 : vector<16xf32> to vector<16x1xf32>
    %263 = arith.mulf %256, %256 : vector<16x32xf32>
    %cst_87 = arith.constant dense<0.000000e+00> : vector<16xf32>
    %264 = vector.multi_reduction <add>, %263, %cst_87 [1] : vector<16x32xf32> to vector<16xf32>
    %265 = vector.shape_cast %264 : vector<16xf32> to vector<16x1xf32>
    %cst_88 = arith.constant 3.125000e-02 : f32
    %266 = vector.broadcast %cst_88 : f32 to vector<16x1xf32>
    %267 = arith.mulf %262, %266 : vector<16x1xf32>
    %cst_89 = arith.constant 3.125000e-02 : f32
    %268 = vector.broadcast %cst_89 : f32 to vector<16x1xf32>
    %269 = arith.mulf %265, %268 : vector<16x1xf32>
    %270 = arith.mulf %267, %267 : vector<16x1xf32>
    %271 = arith.subf %269, %270 : vector<16x1xf32>
    %272 = vector.broadcast %267 : vector<16x1xf32> to vector<16x32xf32>
    %273 = arith.subf %256, %272 : vector<16x32xf32>
    %cst_90 = arith.constant 9.99999996E-13 : f32
    %274 = vector.broadcast %cst_90 : f32 to vector<16x1xf32>
    %275 = arith.addf %271, %274 : vector<16x1xf32>
    %276 = math.rsqrt %275 : vector<16x1xf32>
    %277 = vector.broadcast %276 : vector<16x1xf32> to vector<16x32xf32>
    %278 = arith.mulf %273, %277 : vector<16x32xf32>
    %279 = vector.broadcast %258 : vector<1x32xf32> to vector<16x32xf32>
    %280 = arith.mulf %278, %279 : vector<16x32xf32>
    %281 = vector.broadcast %260 : vector<1x32xf32> to vector<16x32xf32>
    %282 = arith.addf %280, %281 : vector<16x32xf32>
    %283 = arith.truncf %282 : vector<16x32xf32> to vector<16x32xbf16>
    %c1_91 = arith.constant 1 : index
    %c0_92 = arith.constant 0 : index
    %c0_93 = arith.constant 0 : index
    %284 = vector.load %arg6[%c1_91, %c0_92, %c0_93] : memref<2x32x64xbf16, #tpu.memory_space<vmem>>, vector<1x32x64xbf16>
    %285 = vector.shape_cast %284 : vector<1x32x64xbf16> to vector<32x64xbf16>
    %cst_94 = arith.constant dense<0.000000e+00> : vector<16x64xf32>
    %286 = tpu.matmul %283, %285, %cst_94 {dimension_numbers = #tpu.dot_dimension_numbers<[1], [0], [0], [1], [0, 0, 1, 1], [], []>} : vector<16x32xbf16>, vector<32x64xbf16>, vector<16x64xf32> -> vector<16x64xf32>
    %c1_95 = arith.constant 1 : index
    %c0_96 = arith.constant 0 : index
    %c192_97 = arith.constant 192 : index
    %287 = vector.load %arg2[%c1_95, %c0_96, %c192_97] : memref<2x1x352xf32, #tpu.memory_space<vmem>>, vector<1x1x64xf32>
    %288 = vector.shape_cast %287 : vector<1x1x64xf32> to vector<1x64xf32>
    %289 = vector.broadcast %288 : vector<1x64xf32> to vector<16x64xf32>
    %290 = arith.addf %286, %289 : vector<16x64xf32>
    %291 = arith.mulf %290, %290 : vector<16x64xf32>
    %292 = arith.mulf %290, %291 : vector<16x64xf32>
    %cst_98 = arith.constant 4.471500e-02 : f32
    %293 = vector.broadcast %cst_98 : f32 to vector<16x64xf32>
    %294 = arith.mulf %293, %292 : vector<16x64xf32>
    %295 = arith.addf %290, %294 : vector<16x64xf32>
    %cst_99 = arith.constant 0.797884583 : f32
    %296 = vector.broadcast %cst_99 : f32 to vector<16x64xf32>
    %297 = arith.mulf %296, %295 : vector<16x64xf32>
    %298 = math.tanh %297 : vector<16x64xf32>
    %cst_100 = arith.constant 1.000000e+00 : f32
    %299 = vector.broadcast %cst_100 : f32 to vector<16x64xf32>
    %300 = arith.addf %299, %298 : vector<16x64xf32>
    %cst_101 = arith.constant 5.000000e-01 : f32
    %301 = vector.broadcast %cst_101 : f32 to vector<16x64xf32>
    %302 = arith.mulf %301, %300 : vector<16x64xf32>
    %303 = arith.mulf %290, %302 : vector<16x64xf32>
    %304 = arith.truncf %303 : vector<16x64xf32> to vector<16x64xbf16>
    %c1_102 = arith.constant 1 : index
    %c0_103 = arith.constant 0 : index
    %c0_104 = arith.constant 0 : index
    %305 = vector.load %arg7[%c1_102, %c0_103, %c0_104] : memref<2x64x32xbf16, #tpu.memory_space<vmem>>, vector<1x64x32xbf16>
    %306 = vector.shape_cast %305 : vector<1x64x32xbf16> to vector<64x32xbf16>
    %cst_105 = arith.constant dense<0.000000e+00> : vector<16x32xf32>
    %307 = tpu.matmul %304, %306, %cst_105 {dimension_numbers = #tpu.dot_dimension_numbers<[1], [0], [0], [1], [0, 0, 1, 1], [], []>} : vector<16x64xbf16>, vector<64x32xbf16>, vector<16x32xf32> -> vector<16x32xf32>
    %c1_106 = arith.constant 1 : index
    %c0_107 = arith.constant 0 : index
    %c256_108 = arith.constant 256 : index
    %308 = vector.load %arg2[%c1_106, %c0_107, %c256_108] : memref<2x1x352xf32, #tpu.memory_space<vmem>>, vector<1x1x32xf32>
    %309 = vector.shape_cast %308 : vector<1x1x32xf32> to vector<1x32xf32>
    %310 = vector.broadcast %309 : vector<1x32xf32> to vector<16x32xf32>
    %311 = arith.addf %307, %310 : vector<16x32xf32>
    %312 = arith.addf %282, %311 : vector<16x32xf32>
    %c1_109 = arith.constant 1 : index
    %c0_110 = arith.constant 0 : index
    %c288_111 = arith.constant 288 : index
    %313 = vector.load %arg2[%c1_109, %c0_110, %c288_111] : memref<2x1x352xf32, #tpu.memory_space<vmem>>, vector<1x1x32xf32>
    %314 = vector.shape_cast %313 : vector<1x1x32xf32> to vector<1x32xf32>
    %c1_112 = arith.constant 1 : index
    %c0_113 = arith.constant 0 : index
    %c320_114 = arith.constant 320 : index
    %315 = vector.load %arg2[%c1_112, %c0_113, %c320_114] : memref<2x1x352xf32, #tpu.memory_space<vmem>>, vector<1x1x32xf32>
    %316 = vector.shape_cast %315 : vector<1x1x32xf32> to vector<1x32xf32>
    %cst_115 = arith.constant dense<0.000000e+00> : vector<16xf32>
    %317 = vector.multi_reduction <add>, %312, %cst_115 [1] : vector<16x32xf32> to vector<16xf32>
    %318 = vector.shape_cast %317 : vector<16xf32> to vector<16x1xf32>
    %319 = arith.mulf %312, %312 : vector<16x32xf32>
    %cst_116 = arith.constant dense<0.000000e+00> : vector<16xf32>
    %320 = vector.multi_reduction <add>, %319, %cst_116 [1] : vector<16x32xf32> to vector<16xf32>
    %321 = vector.shape_cast %320 : vector<16xf32> to vector<16x1xf32>
    %cst_117 = arith.constant 3.125000e-02 : f32
    %322 = vector.broadcast %cst_117 : f32 to vector<16x1xf32>
    %323 = arith.mulf %318, %322 : vector<16x1xf32>
    %cst_118 = arith.constant 3.125000e-02 : f32
    %324 = vector.broadcast %cst_118 : f32 to vector<16x1xf32>
    %325 = arith.mulf %321, %324 : vector<16x1xf32>
    %326 = arith.mulf %323, %323 : vector<16x1xf32>
    %327 = arith.subf %325, %326 : vector<16x1xf32>
    %328 = vector.broadcast %323 : vector<16x1xf32> to vector<16x32xf32>
    %329 = arith.subf %312, %328 : vector<16x32xf32>
    %cst_119 = arith.constant 9.99999996E-13 : f32
    %330 = vector.broadcast %cst_119 : f32 to vector<16x1xf32>
    %331 = arith.addf %327, %330 : vector<16x1xf32>
    %332 = math.rsqrt %331 : vector<16x1xf32>
    %333 = vector.broadcast %332 : vector<16x1xf32> to vector<16x32xf32>
    %334 = arith.mulf %329, %333 : vector<16x32xf32>
    %335 = vector.broadcast %314 : vector<1x32xf32> to vector<16x32xf32>
    %336 = arith.mulf %334, %335 : vector<16x32xf32>
    %337 = vector.broadcast %316 : vector<1x32xf32> to vector<16x32xf32>
    %338 = arith.addf %336, %337 : vector<16x32xf32>
    %339 = arith.truncf %338 : vector<16x32xf32> to vector<16x32xbf16>
    %c0_120 = arith.constant 0 : index
    %c0_121 = arith.constant 0 : index
    %340 = vector.load %arg8[%c0_120, %c0_121] : memref<32x3xbf16, #tpu.memory_space<vmem>>, vector<32x3xbf16>
    %cst_122 = arith.constant dense<0.000000e+00> : vector<16x3xf32>
    %341 = tpu.matmul %339, %340, %cst_122 {dimension_numbers = #tpu.dot_dimension_numbers<[1], [0], [0], [1], [0, 0, 1, 1], [], []>} : vector<16x32xbf16>, vector<32x3xbf16>, vector<16x3xf32> -> vector<16x3xf32>
    %342 = vector.broadcast %3 : vector<1x3xf32> to vector<16x3xf32>
    %343 = arith.addf %341, %342 : vector<16x3xf32>
    %344 = vector.shape_cast %343 : vector<16x3xf32> to vector<2x8x3xf32>
    %345 = vector.extract_strided_slice %344 {offsets = [0, 0, 0], sizes = [2, 1, 3], strides = [1, 1, 1]} : vector<2x8x3xf32> to vector<2x1x3xf32>
    %346 = vector.shape_cast %345 : vector<2x1x3xf32> to vector<2x3xf32>
    %c0_123 = arith.constant 0 : index
    %c0_124 = arith.constant 0 : index
    %347 = vector.load %arg9[%c0_123, %c0_124] : memref<2x3xf32, #tpu.memory_space<vmem>>, vector<2x3xf32>
    tpu.vector_store %arg9[%c0_123, %c0_124], %346 {strides = array<i32>} : memref<2x3xf32, #tpu.memory_space<vmem>>, vector<2x3xf32>,
    return
  }
}

</mosaic_0001>

<llo_original>
// kernel: chemberta_classifier_forward.1
$region0: #{chemberta_classifier_forward.1}
  #allocation0 [shape = 'u32[]', space=smem, size = 0x4, offset = 0x4, fixed_abs, tag = 'smem constant byte address 0x4 - core index']
  #allocation1 [shape = 'u32[144,128]{1,0:T(1,128)}', space=vmem, size = 0x12000, scoped, tag = 'internal scratch']
  %s0 = inlined_call_operand.vmem [shape: f32[16,32], index: 0, kind: input, shape index: {}]
  %s1 = inlined_call_operand.vmem [shape: f32[8,8,8], index: 1, kind: input, shape index: {}]
  %s2 = inlined_call_operand.vmem [shape: f32[2,1,352], index: 2, kind: input, shape index: {}]
  %s3 = inlined_call_operand.vmem [shape: f32[1,67], index: 3, kind: input, shape index: {}]
  %s4 = inlined_call_operand.vmem [shape: bf16[2,32,96], index: 4, kind: input, shape index: {}]
  %s5 = inlined_call_operand.vmem [shape: bf16[2,32,32], index: 5, kind: input, shape index: {}]
  %s6 = inlined_call_operand.vmem [shape: bf16[2,32,64], index: 6, kind: input, shape index: {}]
  %s7 = inlined_call_operand.vmem [shape: bf16[2,64,32], index: 7, kind: input, shape index: {}]
  %s8 = inlined_call_operand.vmem [shape: bf16[32,3], index: 8, kind: input, shape index: {}]
  %s9 = inlined_call_operand.hbm [shape: f32[2,3], index: 9, kind: output, shape index: {}]
  %s10 = sld [smem:[#allocation0]]
  $region46: #{chemberta_classifier_forward.1} parent=0
    _
  %s12 = ssub.s32 1, %s10
  %s13 = scalar_select 0, %s12, %s10
  $region1: #{chemberta_classifier_forward.1} parent=0
    #allocation2 [shape = 'u8[1024]{0}', space=vmem, size = 0x400, scoped, tag = 'output window, operand 0, single buffered']
    #allocation3 [shape = 's32[1]{0}', space=sflag, size = 0x4, scoped, tag = 'scoped memory for chemberta_classifier_forward.1']
    %14 = vsyncpa [#allocation3], 0
    // Predicated region
    $region2: #{chemberta_classifier_forward.1} parent=1 // pred_check
      _
    $region3: #{chemberta_classifier_forward.1} parent=1 // pred_check_branch
      %16 = sbr.rel (0) target = $region5
    $region4: #{chemberta_classifier_forward.1} parent=1 // pred_region
      _
    $region5: #{chemberta_classifier_forward.1} parent=1 // pred_fallthru
      _
    // Predicated region
    $region6: #{chemberta_classifier_forward.1} parent=1 // pred_check
      _
    $region7: #{chemberta_classifier_forward.1} parent=1 // pred_check_branch
      %18 = sbr.rel (0) target = $region9
    $region8: #{chemberta_classifier_forward.1} parent=1 // pred_region
      _
    $region9: #{chemberta_classifier_forward.1} parent=1 // pred_fallthru
      _
    // Predicated region
    $region10: #{chemberta_classifier_forward.1} parent=1 // pred_check
      _
    $region11: #{chemberta_classifier_forward.1} parent=1 // pred_check_branch
      %20 = sbr.rel (0) target = $region13
    $region12: #{chemberta_classifier_forward.1} parent=1 // pred_region
      _
    $region13: #{chemberta_classifier_forward.1} parent=1 // pred_fallthru
      _
    // Predicated region
    $region14: #{chemberta_classifier_forward.1} parent=1 // pred_check
      _
    $region15: #{chemberta_classifier_forward.1} parent=1 // pred_check_branch
      %22 = sbr.rel (0) target = $region17
    $region16: #{chemberta_classifier_forward.1} parent=1 // pred_region
      _
    $region17: #{chemberta_classifier_forward.1} parent=1 // pred_fallthru
      _
    // Predicated region
    $region18: #{chemberta_classifier_forward.1} parent=1 // pred_check
      _
    $region19: #{chemberta_classifier_forward.1} parent=1 // pred_check_branch
      %24 = sbr.rel (0) target = $region21
    $region20: #{chemberta_classifier_forward.1} parent=1 // pred_region
      _
    $region21: #{chemberta_classifier_forward.1} parent=1 // pred_fallthru
      _
    // Predicated region
    $region22: #{chemberta_classifier_forward.1} parent=1 // pred_check
      _
    $region23: #{chemberta_classifier_forward.1} parent=1 // pred_check_branch
      %26 = sbr.rel (0) target = $region25
    $region24: #{chemberta_classifier_forward.1} parent=1 // pred_region
      _
    $region25: #{chemberta_classifier_forward.1} parent=1 // pred_fallthru
      _
    // Predicated region
    $region26: #{chemberta_classifier_forward.1} parent=1 // pred_check
      _
    $region27: #{chemberta_classifier_forward.1} parent=1 // pred_check_branch
      %28 = sbr.rel (0) target = $region29
    $region28: #{chemberta_classifier_forward.1} parent=1 // pred_region
      _
    $region29: #{chemberta_classifier_forward.1} parent=1 // pred_fallthru
      _
    // Predicated region
    $region30: #{chemberta_classifier_forward.1} parent=1 // pred_check
      _
    $region31: #{chemberta_classifier_forward.1} parent=1 // pred_check_branch
      %30 = sbr.rel (0) target = $region33
    $region32: #{chemberta_classifier_forward.1} parent=1 // pred_region
      _
    $region33: #{chemberta_classifier_forward.1} parent=1 // pred_fallthru
      _
    // Predicated region
    $region34: #{chemberta_classifier_forward.1} parent=1 // pred_check
      _
    $region35: #{chemberta_classifier_forward.1} parent=1 // pred_check_branch
      %32 = sbr.rel (0) target = $region37
    $region36: #{chemberta_classifier_forward.1} parent=1 // pred_region
      _
    $region37: #{chemberta_classifier_forward.1} parent=1 // pred_fallthru
      _
    %v34 = vld [vmem:[%s1] sm:$0xff]
    %v35 = vld [vmem:[%s1 + $0x8] sm:$0xff]
    %v36 = vld [vmem:[%s1 + $0x10] sm:$0xff]
    %v37 = vld [vmem:[%s1 + $0x18] sm:$0xff]
    %v38 = vld [vmem:[%s1 + $0x20] sm:$0xff]
    %v39 = vld [vmem:[%s1 + $0x28] sm:$0xff]
    %v40 = vld [vmem:[%s1 + $0x30] sm:$0xff]
    %v41 = vld [vmem:[%s1 + $0x38] sm:$0xff]
    %v42 = vld [vmem:[%s3] sm:$0x1]
    %v43 = vld [vmem:[%s0] sm:$0xff]
    %v44 = vld [vmem:[%s0 + $0x8] sm:$0xff]
    %vm45 = vcmask 261120
    %v46 = vsel %vm45, %v43, 0.0
    %47 = vadd.xlane.f32.xlu0 %v46
    %v48 = vpop.xlane.xlu0 %47
    %v49 = vsel %vm45, %v44, 0.0
    %50 = vadd.xlane.f32.xlu0 %v49
    %v51 = vpop.xlane.xlu0 %50
    %v52 = vmul.f32 %v43, %v43
    %v53 = vmul.f32 %v44, %v44
    %v54 = vsel %vm45, %v52, 0.0
    %55 = vadd.xlane.f32.xlu0 %v54
    %v56 = vpop.xlane.xlu0 %55
    %v57 = vsel %vm45, %v53, 0.0
    %58 = vadd.xlane.f32.xlu0 %v57
    %v59 = vpop.xlane.xlu0 %58
    %v60 = vmul.f32 %v48, 0.03125
    %v61 = vmul.f32 %v51, 0.03125
    %v62 = vmul.f32 %v56, 0.03125
    %v63 = vmul.f32 %v59, 0.03125
    %v64 = vmul.f32 %v60, %v60
    %v65 = vmul.f32 %v61, %v61
    %v66 = vsub.f32 %v62, %v64
    %v67 = vsub.f32 %v63, %v65
    %v68 = vsub.f32 %v43, %v60
    %v69 = vsub.f32 %v44, %v61
    %v70 = vadd.f32 %v66, 1e-12
    %v71 = vadd.f32 %v67, 1e-12
    %v72 = vrsqrt.pop %v70
    %v73 = vrsqrt.pop %v71
    %v74 = vmul.f32 %v68, %v72
    %v75 = vmul.f32 %v69, %v73
    %v77 = vlaneseq
    %v78 = vshrl.u32 %v77, 7
    %v79 = vsub.s32 0, %v78
    %v80 = vrot.slane %v42, %v79
    %v82 = vmul.f32 %v74, %v80
    %v83 = vmul.f32 %v75, %v80
    %84 = vrot.lane.b32.xlu0 %v80, 96
    %v85 = vpop.permute.xlu0 %84
    %v87 = vadd.f32 %v82, %v85
    %v88 = vadd.f32 %v83, %v85
    %v89 = vpack.c.bf16 %v88, %v87
    %v90 = vld [vmem:[%s4] sm:$0xf]
    %v91 = vld [vmem:[%s4 + $0x4] sm:$0xf]
    %v92 = vld [vmem:[%s4 + $0x8] sm:$0xf]
    %v93 = vld [vmem:[%s4 + $0xc] sm:$0xf]
    %v94 = vld [vmem:[%s2] sm:$0x1]
    %v96 = vlaneseq
    %v97 = vshrl.u32 %v96, 7
    %v98 = vsub.s32 0, %v97
    %v99 = vrot.slane %v94, %v98
    %v105 = vunpack.c.l.b16 %v90
    %v106 = vunpack.c.l.b16 %v91
    %v107 = vunpack.c.l.b16 %v92
    %v108 = vunpack.c.l.b16 %v93
    %v109 = vpack.c.b16 %v106, %v105
    %v110 = vpack.c.b16 %v108, %v107
    %v114 = vsel %vm45, %v89, 0
    %116 = vmatprep.subr.bf16.mxu0 0
    %117 = vmatpush1.bf16.msra.mxu0 0
    %118 = vmatprep.subr.bf16.mxu0 0
    %119 = vmatpush1.bf16.msra.mxu0 0
    %120 = vmatprep.subr.bf16.mxu0 0
    %121 = vmatpush1.bf16.msra.mxu0 0
    %122 = vmatprep.subr.bf16.mxu0 0
    %123 = vmatpush1.bf16.msra.mxu0 0
    %124 = vmatprep.subr.bf16.mxu0 0
    %125 = vmatpush1.bf16.msra.mxu0 0
    %126 = vmatprep.subr.bf16.mxu0 0
    %127 = vmatpush1.bf16.msra.mxu0 0
    %128 = vmatprep.subr.bf16.mxu0 0
    %129 = vmatpush1.bf16.msra.mxu0 %v110
    %130 = vmatprep.subr.bf16.mxu0 0
    %131 = vmatpush1.bf16.msra.mxu0 %v109
    %132 = vmatprep.subr.bf16.mxu0 0
    %133 = vmatpush2.bf16.msra.mxu0 0
    %134 = vmatprep.subr.bf16.mxu0 0
    %135 = vmatpush2.bf16.msra.mxu0 0
    %136 = vmatprep.subr.bf16.mxu0 0
    %137 = vmatpush2.bf16.msra.mxu0 0
    %138 = vmatprep.subr.bf16.mxu0 0
    %139 = vmatpush2.bf16.msra.mxu0 0
    %140 = vmatprep.subr.bf16.mxu0 0
    %141 = vmatpush2.bf16.msra.mxu0 0
    %142 = vmatprep.subr.bf16.mxu0 0
    %143 = vmatpush2.bf16.msra.mxu0 0
    %144 = vmatprep.subr.bf16.mxu0 0
    %145 = vmatpush2.bf16.msra.mxu0 0
    %146 = vmatprep.subr.bf16.mxu0 0
    %147 = vmatpush2.bf16.msra.mxu0 0
    %148 = vmatprep.mubr.bf16.mxu0 0
    %149 = vmatmul.mubr.bf16.gmra.mxu0 %v114
    %v150 = vpop.f32.mrf.mxu0
    %v151 = vadd.f32 %v99, %v150
    %v152 = vpop.f32.mrf.mxu0
    %v153 = vpop.f32.mrf.mxu0
    %v154 = vadd.f32 %v99, %v153
    %v155 = vpop.f32.mrf.mxu0
    %156 = vdwg.mxu0
    %159 = vrot.lane.b32.xlu0 %v151, 120
    %v160 = vpop.permute.xlu0 %159
    %161 = vrot.lane.b32.xlu0 %v154, 120
    %v162 = vpop.permute.xlu0 %161
    %165 = vrot.lane.b32.xlu0 %v151, 112
    %v166 = vpop.permute.xlu0 %165
    %167 = vrot.lane.b32.xlu0 %v154, 112
    %v168 = vpop.permute.xlu0 %167
    %171 = vrot.lane.b32.xlu0 %v151, 104
    %v172 = vpop.permute.xlu0 %171
    %173 = vrot.lane.b32.xlu0 %v154, 104
    %v174 = vpop.permute.xlu0 %173
    %v177 = vpack.c.bf16 %v151, %v151
    %v178 = vpack.c.bf16 %v154, %v154
    %v179 = vpack.c.bf16 %v160, %v160
    %v180 = vpack.c.bf16 %v162, %v162
    %v181 = vpack.c.bf16 %v166, %v166
    %v182 = vpack.c.bf16 %v168, %v168
    %v183 = vpack.c.bf16 %v172, %v172
    %v184 = vpack.c.bf16 %v174, %v174
    %186 = vrot.lane.b32.xlu0 %v177, 96
    %v187 = vpop.permute.xlu0 %186
    %vm188 = vcmask 64512
    %v190 = vsel %vm188, %v177, 0
    %v193 = vsel %vm188, %v187, 0
    %195 = vmatprep.subr.bf16.mxu0 0
    %196 = vmatpush1.bf16.xpose.msra.mxu0 0
    %197 = vmatprep.subr.bf16.mxu0 0
    %198 = vmatpush1.bf16.xpose.msra.mxu0 0
    %199 = vmatprep.subr.bf16.mxu0 0
    %200 = vmatpush1.bf16.xpose.msra.mxu0 0
    %201 = vmatprep.subr.bf16.mxu0 0
    %202 = vmatpush1.bf16.xpose.msra.mxu0 0
    %203 = vmatprep.subr.bf16.mxu0 0
    %204 = vmatpush1.bf16.xpose.msra.mxu0 0
    %205 = vmatprep.subr.bf16.mxu0 0
    %206 = vmatpush1.bf16.xpose.msra.mxu0 0
    %207 = vmatprep.subr.bf16.mxu0 0
    %208 = vmatpush1.bf16.xpose.msra.mxu0 0
    %209 = vmatprep.subr.bf16.mxu0 0
    %210 = vmatpush1.bf16.xpose.msra.mxu0 %v193
    %211 = vmatprep.subr.bf16.mxu0 0
    %212 = vmatpush2.bf16.xpose.msra.mxu0 0
    %213 = vmatprep.subr.bf16.mxu0 0
    %214 = vmatpush2.bf16.xpose.msra.mxu0 0
    %215 = vmatprep.subr.bf16.mxu0 0
    %216 = vmatpush2.bf16.xpose.msra.mxu0 0
    %217 = vmatprep.subr.bf16.mxu0 0
    %218 = vmatpush2.bf16.xpose.msra.mxu0 0
    %219 = vmatprep.subr.bf16.mxu0 0
    %220 = vmatpush2.bf16.xpose.msra.mxu0 0
    %221 = vmatprep.subr.bf16.mxu0 0
    %222 = vmatpush2.bf16.xpose.msra.mxu0 0
    %223 = vmatprep.subr.bf16.mxu0 0
    %224 = vmatpush2.bf16.xpose.msra.mxu0 0
    %225 = vmatprep.subr.bf16.mxu0 0
    %226 = vmatpush2.bf16.xpose.msra.mxu0 0
    %227 = vmatprep.mubr.bf16.mxu0 0
    %228 = vmatmul.mubr.bf16.gmra.mxu0 %v190
    %v229 = vpop.f32.mrf.mxu0
    %v230 = vadd.f32 %v34, %v229
    %v231 = vpop.f32.mrf.mxu0
    %v232 = vpop.f32.mrf.mxu0
    %v233 = vpop.f32.mrf.mxu0
    %234 = vdwg.mxu0
    %236 = vrot.lane.b32.xlu0 %v178, 96
    %v237 = vpop.permute.xlu0 %236
    %v239 = vsel %vm188, %v178, 0
    %v242 = vsel %vm188, %v237, 0
    %244 = vmatprep.subr.bf16.mxu0 0
    %245 = vmatpush1.bf16.xpose.msra.mxu0 0
    %246 = vmatprep.subr.bf16.mxu0 0
    %247 = vmatpush1.bf16.xpose.msra.mxu0 0
    %248 = vmatprep.subr.bf16.mxu0 0
    %249 = vmatpush1.bf16.xpose.msra.mxu0 0
    %250 = vmatprep.subr.bf16.mxu0 0
    %251 = vmatpush1.bf16.xpose.msra.mxu0 0
    %252 = vmatprep.subr.bf16.mxu0 0
    %253 = vmatpush1.bf16.xpose.msra.mxu0 0
    %254 = vmatprep.subr.bf16.mxu0 0
    %255 = vmatpush1.bf16.xpose.msra.mxu0 0
    %256 = vmatprep.subr.bf16.mxu0 0
    %257 = vmatpush1.bf16.xpose.msra.mxu0 0
    %258 = vmatprep.subr.bf16.mxu0 0
    %259 = vmatpush1.bf16.xpose.msra.mxu0 %v242
    %260 = vmatprep.subr.bf16.mxu0 0
    %261 = vmatpush2.bf16.xpose.msra.mxu0 0
    %262 = vmatprep.subr.bf16.mxu0 0
    %263 = vmatpush2.bf16.xpose.msra.mxu0 0
    %264 = vmatprep.subr.bf16.mxu0 0
    %265 = vmatpush2.bf16.xpose.msra.mxu0 0
    %266 = vmatprep.subr.bf16.mxu0 0
    %267 = vmatpush2.bf16.xpose.msra.mxu0 0
    %268 = vmatprep.subr.bf16.mxu0 0
    %269 = vmatpush2.bf16.xpose.msra.mxu0 0
    %270 = vmatprep.subr.bf16.mxu0 0
    %271 = vmatpush2.bf16.xpose.msra.mxu0 0
    %272 = vmatprep.subr.bf16.mxu0 0
    %273 = vmatpush2.bf16.xpose.msra.mxu0 0
    %274 = vmatprep.subr.bf16.mxu0 0
    %275 = vmatpush2.bf16.xpose.msra.mxu0 0
    %276 = vmatprep.mubr.bf16.mxu0 0
    %277 = vmatmul.mubr.bf16.gmra.mxu0 %v239
    %v278 = vpop.f32.mrf.mxu0
    %v279 = vadd.f32 %v35, %v278
    %v280 = vpop.f32.mrf.mxu0
    %v281 = vpop.f32.mrf.mxu0
    %v282 = vpop.f32.mrf.mxu0
    %283 = vdwg.mxu0
    %285 = vrot.lane.b32.xlu0 %v179, 96
    %v286 = vpop.permute.xlu0 %285
    %v288 = vsel %vm188, %v179, 0
    %v291 = vsel %vm188, %v286, 0
    %293 = vmatprep.subr.bf16.mxu0 0
    %294 = vmatpush1.bf16.xpose.msra.mxu0 0
    %295 = vmatprep.subr.bf16.mxu0 0
    %296 = vmatpush1.bf16.xpose.msra.mxu0 0
    %297 = vmatprep.subr.bf16.mxu0 0
    %298 = vmatpush1.bf16.xpose.msra.mxu0 0
    %299 = vmatprep.subr.bf16.mxu0 0
    %300 = vmatpush1.bf16.xpose.msra.mxu0 0
    %301 = vmatprep.subr.bf16.mxu0 0
    %302 = vmatpush1.bf16.xpose.msra.mxu0 0
    %303 = vmatprep.subr.bf16.mxu0 0
    %304 = vmatpush1.bf16.xpose.msra.mxu0 0
    %305 = vmatprep.subr.bf16.mxu0 0
    %306 = vmatpush1.bf16.xpose.msra.mxu0 0
    %307 = vmatprep.subr.bf16.mxu0 0
    %308 = vmatpush1.bf16.xpose.msra.mxu0 %v291
    %309 = vmatprep.subr.bf16.mxu0 0
    %310 = vmatpush2.bf16.xpose.msra.mxu0 0
    %311 = vmatprep.subr.bf16.mxu0 0
    %312 = vmatpush2.bf16.xpose.msra.mxu0 0
    %313 = vmatprep.subr.bf16.mxu0 0
    %314 = vmatpush2.bf16.xpose.msra.mxu0 0
    %315 = vmatprep.subr.bf16.mxu0 0
    %316 = vmatpush2.bf16.xpose.msra.mxu0 0
    %317 = vmatprep.subr.bf16.mxu0 0
    %318 = vmatpush2.bf16.xpose.msra.mxu0 0
    %319 = vmatprep.subr.bf16.mxu0 0
    %320 = vmatpush2.bf16.xpose.msra.mxu0 0
    %321 = vmatprep.subr.bf16.mxu0 0
    %322 = vmatpush2.bf16.xpose.msra.mxu0 0
    %323 = vmatprep.subr.bf16.mxu0 0
    %324 = vmatpush2.bf16.xpose.msra.mxu0 0
    %325 = vmatprep.mubr.bf16.mxu0 0
    %326 = vmatmul.mubr.bf16.gmra.mxu0 %v288
    %v327 = vpop.f32.mrf.mxu0
    %v328 = vadd.f32 %v36, %v327
    %v329 = vpop.f32.mrf.mxu0
    %v330 = vpop.f32.mrf.mxu0
    %v331 = vpop.f32.mrf.mxu0
    %332 = vdwg.mxu0
    %334 = vrot.lane.b32.xlu0 %v180, 96
    %v335 = vpop.permute.xlu0 %334
    %v337 = vsel %vm188, %v180, 0
    %v340 = vsel %vm188, %v335, 0
    %342 = vmatprep.subr.bf16.mxu0 0
    %343 = vmatpush1.bf16.xpose.msra.mxu0 0
    %344 = vmatprep.subr.bf16.mxu0 0
    %345 = vmatpush1.bf16.xpose.msra.mxu0 0
    %346 = vmatprep.subr.bf16.mxu0 0
    %347 = vmatpush1.bf16.xpose.msra.mxu0 0
    %348 = vmatprep.subr.bf16.mxu0 0
    %349 = vmatpush1.bf16.xpose.msra.mxu0 0
    %350 = vmatprep.subr.bf16.mxu0 0
    %351 = vmatpush1.bf16.xpose.msra.mxu0 0
    %352 = vmatprep.subr.bf16.mxu0 0
    %353 = vmatpush1.bf16.xpose.msra.mxu0 0
    %354 = vmatprep.subr.bf16.mxu0 0
    %355 = vmatpush1.bf16.xpose.msra.mxu0 0
    %356 = vmatprep.subr.bf16.mxu0 0
    %357 = vmatpush1.bf16.xpose.msra.mxu0 %v340
    %358 = vmatprep.subr.bf16.mxu0 0
    %359 = vmatpush2.bf16.xpose.msra.mxu0 0
    %360 = vmatprep.subr.bf16.mxu0 0
    %361 = vmatpush2.bf16.xpose.msra.mxu0 0
    %362 = vmatprep.subr.bf16.mxu0 0
    %363 = vmatpush2.bf16.xpose.msra.mxu0 0
    %364 = vmatprep.subr.bf16.mxu0 0
    %365 = vmatpush2.bf16.xpose.msra.mxu0 0
    %366 = vmatprep.subr.bf16.mxu0 0
    %367 = vmatpush2.bf16.xpose.msra.mxu0 0
    %368 = vmatprep.subr.bf16.mxu0 0
    %369 = vmatpush2.bf16.xpose.msra.mxu0 0
    %370 = vmatprep.subr.bf16.mxu0 0
    %371 = vmatpush2.bf16.xpose.msra.mxu0 0
    %372 = vmatprep.subr.bf16.mxu0 0
    %373 = vmatpush2.bf16.xpose.msra.mxu0 0
    %374 = vmatprep.mubr.bf16.mxu0 0
    %375 = vmatmul.mubr.bf16.gmra.mxu0 %v337
    %v376 = vpop.f32.mrf.mxu0
    %v377 = vadd.f32 %v37, %v376
    %v378 = vpop.f32.mrf.mxu0
    %v379 = vpop.f32.mrf.mxu0
    %v380 = vpop.f32.mrf.mxu0
    %381 = vdwg.mxu0
    %383 = vrot.lane.b32.xlu0 %v181, 96
    %v384 = vpop.permute.xlu0 %383
    %v386 = vsel %vm188, %v181, 0
    %v389 = vsel %vm188, %v384, 0
    %391 = vmatprep.subr.bf16.mxu0 0
    %392 = vmatpush1.bf16.xpose.msra.mxu0 0
    %393 = vmatprep.subr.bf16.mxu0 0
    %394 = vmatpush1.bf16.xpose.msra.mxu0 0
    %395 = vmatprep.subr.bf16.mxu0 0
    %396 = vmatpush1.bf16.xpose.msra.mxu0 0
    %397 = vmatprep.subr.bf16.mxu0 0
    %398 = vmatpush1.bf16.xpose.msra.mxu0 0
    %399 = vmatprep.subr.bf16.mxu0 0
    %400 = vmatpush1.bf16.xpose.msra.mxu0 0
    %401 = vmatprep.subr.bf16.mxu0 0
    %402 = vmatpush1.bf16.xpose.msra.mxu0 0
    %403 = vmatprep.subr.bf16.mxu0 0
    %404 = vmatpush1.bf16.xpose.msra.mxu0 0
    %405 = vmatprep.subr.bf16.mxu0 0
    %406 = vmatpush1.bf16.xpose.msra.mxu0 %v389
    %407 = vmatprep.subr.bf16.mxu0 0
    %408 = vmatpush2.bf16.xpose.msra.mxu0 0
    %409 = vmatprep.subr.bf16.mxu0 0
    %410 = vmatpush2.bf16.xpose.msra.mxu0 0
    %411 = vmatprep.subr.bf16.mxu0 0
    %412 = vmatpush2.bf16.xpose.msra.mxu0 0
    %413 = vmatprep.subr.bf16.mxu0 0
    %414 = vmatpush2.bf16.xpose.msra.mxu0 0
    %415 = vmatprep.subr.bf16.mxu0 0
    %416 = vmatpush2.bf16.xpose.msra.mxu0 0
    %417 = vmatprep.subr.bf16.mxu0 0
    %418 = vmatpush2.bf16.xpose.msra.mxu0 0
    %419 = vmatprep.subr.bf16.mxu0 0
    %420 = vmatpush2.bf16.xpose.msra.mxu0 0
    %421 = vmatprep.subr.bf16.mxu0 0
    %422 = vmatpush2.bf16.xpose.msra.mxu0 0
    %423 = vmatprep.mubr.bf16.mxu0 0
    %424 = vmatmul.mubr.bf16.gmra.mxu0 %v386
    %v425 = vpop.f32.mrf.mxu0
    %v426 = vadd.f32 %v38, %v425
    %v427 = vpop.f32.mrf.mxu0
    %v428 = vpop.f32.mrf.mxu0
    %v429 = vpop.f32.mrf.mxu0
    %430 = vdwg.mxu0
    %432 = vrot.lane.b32.xlu0 %v182, 96
    %v433 = vpop.permute.xlu0 %432
    %v435 = vsel %vm188, %v182, 0
    %v438 = vsel %vm188, %v433, 0
    %440 = vmatprep.subr.bf16.mxu0 0
    %441 = vmatpush1.bf16.xpose.msra.mxu0 0
    %442 = vmatprep.subr.bf16.mxu0 0
    %443 = vmatpush1.bf16.xpose.msra.mxu0 0
    %444 = vmatprep.subr.bf16.mxu0 0
    %445 = vmatpush1.bf16.xpose.msra.mxu0 0
    %446 = vmatprep.subr.bf16.mxu0 0
    %447 = vmatpush1.bf16.xpose.msra.mxu0 0
    %448 = vmatprep.subr.bf16.mxu0 0
    %449 = vmatpush1.bf16.xpose.msra.mxu0 0
    %450 = vmatprep.subr.bf16.mxu0 0
    %451 = vmatpush1.bf16.xpose.msra.mxu0 0
    %452 = vmatprep.subr.bf16.mxu0 0
    %453 = vmatpush1.bf16.xpose.msra.mxu0 0
    %454 = vmatprep.subr.bf16.mxu0 0
    %455 = vmatpush1.bf16.xpose.msra.mxu0 %v438
    %456 = vmatprep.subr.bf16.mxu0 0
    %457 = vmatpush2.bf16.xpose.msra.mxu0 0
    %458 = vmatprep.subr.bf16.mxu0 0
    %459 = vmatpush2.bf16.xpose.msra.mxu0 0
    %460 = vmatprep.subr.bf16.mxu0 0
    %461 = vmatpush2.bf16.xpose.msra.mxu0 0
    %462 = vmatprep.subr.bf16.mxu0 0
    %463 = vmatpush2.bf16.xpose.msra.mxu0 0
    %464 = vmatprep.subr.bf16.mxu0 0
    %465 = vmatpush2.bf16.xpose.msra.mxu0 0
    %466 = vmatprep.subr.bf16.mxu0 0
    %467 = vmatpush2.bf16.xpose.msra.mxu0 0
    %468 = vmatprep.subr.bf16.mxu0 0
    %469 = vmatpush2.bf16.xpose.msra.mxu0 0
    %470 = vmatprep.subr.bf16.mxu0 0
    %471 = vmatpush2.bf16.xpose.msra.mxu0 0
    %472 = vmatprep.mubr.bf16.mxu0 0
    %473 = vmatmul.mubr.bf16.gmra.mxu0 %v435
    %v474 = vpop.f32.mrf.mxu0
    %v475 = vadd.f32 %v39, %v474
    %v476 = vpop.f32.mrf.mxu0
    %v477 = vpop.f32.mrf.mxu0
    %v478 = vpop.f32.mrf.mxu0
    %479 = vdwg.mxu0
    %481 = vrot.lane.b32.xlu0 %v183, 96
    %v482 = vpop.permute.xlu0 %481
    %v484 = vsel %vm188, %v183, 0
    %v487 = vsel %vm188, %v482, 0
    %489 = vmatprep.subr.bf16.mxu0 0
    %490 = vmatpush1.bf16.xpose.msra.mxu0 0
    %491 = vmatprep.subr.bf16.mxu0 0
    %492 = vmatpush1.bf16.xpose.msra.mxu0 0
    %493 = vmatprep.subr.bf16.mxu0 0
    %494 = vmatpush1.bf16.xpose.msra.mxu0 0
    %495 = vmatprep.subr.bf16.mxu0 0
    %496 = vmatpush1.bf16.xpose.msra.mxu0 0
    %497 = vmatprep.subr.bf16.mxu0 0
    %498 = vmatpush1.bf16.xpose.msra.mxu0 0
    %499 = vmatprep.subr.bf16.mxu0 0
    %500 = vmatpush1.bf16.xpose.msra.mxu0 0
    %501 = vmatprep.subr.bf16.mxu0 0
    %502 = vmatpush1.bf16.xpose.msra.mxu0 0
    %503 = vmatprep.subr.bf16.mxu0 0
    %504 = vmatpush1.bf16.xpose.msra.mxu0 %v487
    %505 = vmatprep.subr.bf16.mxu0 0
    %506 = vmatpush2.bf16.xpose.msra.mxu0 0
    %507 = vmatprep.subr.bf16.mxu0 0
    %508 = vmatpush2.bf16.xpose.msra.mxu0 0
    %509 = vmatprep.subr.bf16.mxu0 0
    %510 = vmatpush2.bf16.xpose.msra.mxu0 0
    %511 = vmatprep.subr.bf16.mxu0 0
    %512 = vmatpush2.bf16.xpose.msra.mxu0 0
    %513 = vmatprep.subr.bf16.mxu0 0
    %514 = vmatpush2.bf16.xpose.msra.mxu0 0
    %515 = vmatprep.subr.bf16.mxu0 0
    %516 = vmatpush2.bf16.xpose.msra.mxu0 0
    %517 = vmatprep.subr.bf16.mxu0 0
    %518 = vmatpush2.bf16.xpose.msra.mxu0 0
    %519 = vmatprep.subr.bf16.mxu0 0
    %520 = vmatpush2.bf16.xpose.msra.mxu0 0
    %521 = vmatprep.mubr.bf16.mxu0 0
    %522 = vmatmul.mubr.bf16.gmra.mxu0 %v484
    %v523 = vpop.f32.mrf.mxu0
    %v524 = vadd.f32 %v40, %v523
    %v525 = vpop.f32.mrf.mxu0
    %v526 = vpop.f32.mrf.mxu0
    %v527 = vpop.f32.mrf.mxu0
    %528 = vdwg.mxu0
    %530 = vrot.lane.b32.xlu0 %v184, 96
    %v531 = vpop.permute.xlu0 %530
    %v533 = vsel %vm188, %v184, 0
    %v536 = vsel %vm188, %v531, 0
    %538 = vmatprep.subr.bf16.mxu0 0
    %539 = vmatpush1.bf16.xpose.msra.mxu0 0
    %540 = vmatprep.subr.bf16.mxu0 0
    %541 = vmatpush1.bf16.xpose.msra.mxu0 0
    %542 = vmatprep.subr.bf16.mxu0 0
    %543 = vmatpush1.bf16.xpose.msra.mxu0 0
    %544 = vmatprep.subr.bf16.mxu0 0
    %545 = vmatpush1.bf16.xpose.msra.mxu0 0
    %546 = vmatprep.subr.bf16.mxu0 0
    %547 = vmatpush1.bf16.xpose.msra.mxu0 0
    %548 = vmatprep.subr.bf16.mxu0 0
    %549 = vmatpush1.bf16.xpose.msra.mxu0 0
    %550 = vmatprep.subr.bf16.mxu0 0
    %551 = vmatpush1.bf16.xpose.msra.mxu0 0
    %552 = vmatprep.subr.bf16.mxu0 0
    %553 = vmatpush1.bf16.xpose.msra.mxu0 %v536
    %554 = vmatprep.subr.bf16.mxu0 0
    %555 = vmatpush2.bf16.xpose.msra.mxu0 0
    %556 = vmatprep.subr.bf16.mxu0 0
    %557 = vmatpush2.bf16.xpose.msra.mxu0 0
    %558 = vmatprep.subr.bf16.mxu0 0
    %559 = vmatpush2.bf16.xpose.msra.mxu0 0
    %560 = vmatprep.subr.bf16.mxu0 0
    %561 = vmatpush2.bf16.xpose.msra.mxu0 0
    %562 = vmatprep.subr.bf16.mxu0 0
    %563 = vmatpush2.bf16.xpose.msra.mxu0 0
    %564 = vmatprep.subr.bf16.mxu0 0
    %565 = vmatpush2.bf16.xpose.msra.mxu0 0
    %566 = vmatprep.subr.bf16.mxu0 0
    %567 = vmatpush2.bf16.xpose.msra.mxu0 0
    %568 = vmatprep.subr.bf16.mxu0 0
    %569 = vmatpush2.bf16.xpose.msra.mxu0 0
    %570 = vmatprep.mubr.bf16.mxu0 0
    %571 = vmatmul.mubr.bf16.gmra.mxu0 %v533
    %v572 = vpop.f32.mrf.mxu0
    %v573 = vadd.f32 %v41, %v572
    %v574 = vpop.f32.mrf.mxu0
    %v575 = vpop.f32.mrf.mxu0
    %v576 = vpop.f32.mrf.mxu0
    %577 = vdwg.mxu0
    %v578 = vsel %vm188, %v230, -inf
    %579 = vmax.xlane.f32.xlu0 %v578
    %v580 = vpop.xlane.xlu0 %579
    %v581 = vsel %vm188, %v279, -inf
    %582 = vmax.xlane.f32.xlu0 %v581
    %v583 = vpop.xlane.xlu0 %582
    %v584 = vsel %vm188, %v328, -inf
    %585 = vmax.xlane.f32.xlu0 %v584
    %v586 = vpop.xlane.xlu0 %585
    %v587 = vsel %vm188, %v377, -inf
    %588 = vmax.xlane.f32.xlu0 %v587
    %v589 = vpop.xlane.xlu0 %588
    %v590 = vsel %vm188, %v426, -inf
    %591 = vmax.xlane.f32.xlu0 %v590
    %v592 = vpop.xlane.xlu0 %591
    %v593 = vsel %vm188, %v475, -inf
    %594 = vmax.xlane.f32.xlu0 %v593
    %v595 = vpop.xlane.xlu0 %594
    %v596 = vsel %vm188, %v524, -inf
    %597 = vmax.xlane.f32.xlu0 %v596
    %v598 = vpop.xlane.xlu0 %597
    %v599 = vsel %vm188, %v573, -inf
    %600 = vmax.xlane.f32.xlu0 %v599
    %v601 = vpop.xlane.xlu0 %600
    %v602 = vsub.f32 %v230, %v580
    %v603 = vsub.f32 %v279, %v583
    %v604 = vsub.f32 %v328, %v586
    %v605 = vsub.f32 %v377, %v589
    %v606 = vsub.f32 %v426, %v592
    %v607 = vsub.f32 %v475, %v595
    %v608 = vsub.f32 %v524, %v598
    %v609 = vsub.f32 %v573, %v601
    %v610 = vmul.f32 %v602, 1.442695
    %v611 = vpow.pop %v610
    %v612 = vmul.f32 %v603, 1.442695
    %v613 = vpow.pop %v612
    %v614 = vmul.f32 %v604, 1.442695
    %v615 = vpow.pop %v614
    %v616 = vmul.f32 %v605, 1.442695
    %v617 = vpow.pop %v616
    %v618 = vmul.f32 %v606, 1.442695
    %v619 = vpow.pop %v618
    %v620 = vmul.f32 %v607, 1.442695
    %v621 = vpow.pop %v620
    %v622 = vmul.f32 %v608, 1.442695
    %v623 = vpow.pop %v622
    %v624 = vmul.f32 %v609, 1.442695
    %v625 = vpow.pop %v624
    %v626 = vsel %vm188, %v611, 0.0
    %627 = vadd.xlane.f32.xlu0 %v626
    %v628 = vpop.xlane.xlu0 %627
    %v629 = vsel %vm188, %v613, 0.0
    %630 = vadd.xlane.f32.xlu0 %v629
    %v631 = vpop.xlane.xlu0 %630
    %v632 = vsel %vm188, %v615, 0.0
    %633 = vadd.xlane.f32.xlu0 %v632
    %v634 = vpop.xlane.xlu0 %633
    %v635 = vsel %vm188, %v617, 0.0
    %636 = vadd.xlane.f32.xlu0 %v635
    %v637 = vpop.xlane.xlu0 %636
    %v638 = vsel %vm188, %v619, 0.0
    %639 = vadd.xlane.f32.xlu0 %v638
    %v640 = vpop.xlane.xlu0 %639
    %v641 = vsel %vm188, %v621, 0.0
    %642 = vadd.xlane.f32.xlu0 %v641
    %v643 = vpop.xlane.xlu0 %642
    %v644 = vsel %vm188, %v623, 0.0
    %645 = vadd.xlane.f32.xlu0 %v644
    %v646 = vpop.xlane.xlu0 %645
    %v647 = vsel %vm188, %v625, 0.0
    %648 = vadd.xlane.f32.xlu0 %v647
    %v649 = vpop.xlane.xlu0 %648
    %v650 = vrcp.pop %v628
    %v651 = vrcp.pop %v631
    %v652 = vrcp.pop %v634
    %v653 = vrcp.pop %v637
    %v654 = vrcp.pop %v640
    %v655 = vrcp.pop %v643
    %v656 = vrcp.pop %v646
    %v657 = vrcp.pop %v649
    %v658 = vmul.f32 %v611, %v650
    %v659 = vmul.f32 %v613, %v651
    %v660 = vmul.f32 %v615, %v652
    %v661 = vmul.f32 %v617, %v653
    %v662 = vmul.f32 %v619, %v654
    %v663 = vmul.f32 %v621, %v655
    %v664 = vmul.f32 %v623, %v656
    %v665 = vmul.f32 %v625, %v657
    %v666 = vpack.c.bf16 %v658, %v658
    %v667 = vpack.c.bf16 %v659, %v659
    %v668 = vpack.c.bf16 %v660, %v660
    %v669 = vpack.c.bf16 %v661, %v661
    %v670 = vpack.c.bf16 %v662, %v662
    %v671 = vpack.c.bf16 %v663, %v663
    %v672 = vpack.c.bf16 %v664, %v664
    %v673 = vpack.c.bf16 %v665, %v665
    %674 = vrot.lane.b32.xlu0 %v177, 64
    %v675 = vpop.permute.xlu0 %674
    %v677 = vsel %vm188, %v666, 0
    %vm679 = vcmask 1043456
    %v681 = vsel %vm679, %v675, 0
    %683 = vmatprep.subr.bf16.mxu0 0
    %684 = vmatpush1.bf16.msra.mxu0 0
    %685 = vmatprep.subr.bf16.mxu0 0
    %686 = vmatpush1.bf16.msra.mxu0 0
    %687 = vmatprep.subr.bf16.mxu0 0
    %688 = vmatpush1.bf16.msra.mxu0 0
    %689 = vmatprep.subr.bf16.mxu0 0
    %690 = vmatpush1.bf16.msra.mxu0 0
    %691 = vmatprep.subr.bf16.mxu0 0
    %692 = vmatpush1.bf16.msra.mxu0 0
    %693 = vmatprep.subr.bf16.mxu0 0
    %694 = vmatpush1.bf16.msra.mxu0 0
    %695 = vmatprep.subr.bf16.mxu0 0
    %696 = vmatpush1.bf16.msra.mxu0 0
    %697 = vmatprep.subr.bf16.mxu0 0
    %698 = vmatpush1.bf16.msra.mxu0 %v681
    %699 = vmatprep.subr.bf16.mxu0 0
    %700 = vmatpush2.bf16.msra.mxu0 0
    %701 = vmatprep.subr.bf16.mxu0 0
    %702 = vmatpush2.bf16.msra.mxu0 0
    %703 = vmatprep.subr.bf16.mxu0 0
    %704 = vmatpush2.bf16.msra.mxu0 0
    %705 = vmatprep.subr.bf16.mxu0 0
    %706 = vmatpush2.bf16.msra.mxu0 0
    %707 = vmatprep.subr.bf16.mxu0 0
    %708 = vmatpush2.bf16.msra.mxu0 0
    %709 = vmatprep.subr.bf16.mxu0 0
    %710 = vmatpush2.bf16.msra.mxu0 0
    %711 = vmatprep.subr.bf16.mxu0 0
    %712 = vmatpush2.bf16.msra.mxu0 0
    %713 = vmatprep.subr.bf16.mxu0 0
    %714 = vmatpush2.bf16.msra.mxu0 0
    %715 = vmatprep.mubr.bf16.mxu0 0
    %716 = vmatmul.mubr.bf16.gmra.mxu0 %v677
    %v717 = vpop.f32.mrf.mxu0
    %v718 = vadd.f32 0.0, %v717
    %v719 = vpop.f32.mrf.mxu0
    %v720 = vpop.f32.mrf.mxu0
    %v721 = vpop.f32.mrf.mxu0
    %722 = vdwg.mxu0
    %723 = vrot.lane.b32.xlu0 %v178, 64
    %v724 = vpop.permute.xlu0 %723
    %v726 = vsel %vm188, %v667, 0
    %v729 = vsel %vm679, %v724, 0
    %731 = vmatprep.subr.bf16.mxu0 0
    %732 = vmatpush1.bf16.msra.mxu0 0
    %733 = vmatprep.subr.bf16.mxu0 0
    %734 = vmatpush1.bf16.msra.mxu0 0
    %735 = vmatprep.subr.bf16.mxu0 0
    %736 = vmatpush1.bf16.msra.mxu0 0
    %737 = vmatprep.subr.bf16.mxu0 0
    %738 = vmatpush1.bf16.msra.mxu0 0
    %739 = vmatprep.subr.bf16.mxu0 0
    %740 = vmatpush1.bf16.msra.mxu0 0
    %741 = vmatprep.subr.bf16.mxu0 0
    %742 = vmatpush1.bf16.msra.mxu0 0
    %743 = vmatprep.subr.bf16.mxu0 0
    %744 = vmatpush1.bf16.msra.mxu0 0
    %745 = vmatprep.subr.bf16.mxu0 0
    %746 = vmatpush1.bf16.msra.mxu0 %v729
    %747 = vmatprep.subr.bf16.mxu0 0
    %748 = vmatpush2.bf16.msra.mxu0 0
    %749 = vmatprep.subr.bf16.mxu0 0
    %750 = vmatpush2.bf16.msra.mxu0 0
    %751 = vmatprep.subr.bf16.mxu0 0
    %752 = vmatpush2.bf16.msra.mxu0 0
    %753 = vmatprep.subr.bf16.mxu0 0
    %754 = vmatpush2.bf16.msra.mxu0 0
    %755 = vmatprep.subr.bf16.mxu0 0
    %756 = vmatpush2.bf16.msra.mxu0 0
    %757 = vmatprep.subr.bf16.mxu0 0
    %758 = vmatpush2.bf16.msra.mxu0 0
    %759 = vmatprep.subr.bf16.mxu0 0
    %760 = vmatpush2.bf16.msra.mxu0 0
    %761 = vmatprep.subr.bf16.mxu0 0
    %762 = vmatpush2.bf16.msra.mxu0 0
    %763 = vmatprep.mubr.bf16.mxu0 0
    %764 = vmatmul.mubr.bf16.gmra.mxu0 %v726
    %v765 = vpop.f32.mrf.mxu0
    %v766 = vadd.f32 0.0, %v765
    %v767 = vpop.f32.mrf.mxu0
    %v768 = vpop.f32.mrf.mxu0
    %v769 = vpop.f32.mrf.mxu0
    %770 = vdwg.mxu0
    %771 = vrot.lane.b32.xlu0 %v179, 64
    %v772 = vpop.permute.xlu0 %771
    %v774 = vsel %vm188, %v668, 0
    %v777 = vsel %vm679, %v772, 0
    %779 = vmatprep.subr.bf16.mxu0 0
    %780 = vmatpush1.bf16.msra.mxu0 0
    %781 = vmatprep.subr.bf16.mxu0 0
    %782 = vmatpush1.bf16.msra.mxu0 0
    %783 = vmatprep.subr.bf16.mxu0 0
    %784 = vmatpush1.bf16.msra.mxu0 0
    %785 = vmatprep.subr.bf16.mxu0 0
    %786 = vmatpush1.bf16.msra.mxu0 0
    %787 = vmatprep.subr.bf16.mxu0 0
    %788 = vmatpush1.bf16.msra.mxu0 0
    %789 = vmatprep.subr.bf16.mxu0 0
    %790 = vmatpush1.bf16.msra.mxu0 0
    %791 = vmatprep.subr.bf16.mxu0 0
    %792 = vmatpush1.bf16.msra.mxu0 0
    %793 = vmatprep.subr.bf16.mxu0 0
    %794 = vmatpush1.bf16.msra.mxu0 %v777
    %795 = vmatprep.subr.bf16.mxu0 0
    %796 = vmatpush2.bf16.msra.mxu0 0
    %797 = vmatprep.subr.bf16.mxu0 0
    %798 = vmatpush2.bf16.msra.mxu0 0
    %799 = vmatprep.subr.bf16.mxu0 0
    %800 = vmatpush2.bf16.msra.mxu0 0
    %801 = vmatprep.subr.bf16.mxu0 0
    %802 = vmatpush2.bf16.msra.mxu0 0
    %803 = vmatprep.subr.bf16.mxu0 0
    %804 = vmatpush2.bf16.msra.mxu0 0
    %805 = vmatprep.subr.bf16.mxu0 0
    %806 = vmatpush2.bf16.msra.mxu0 0
    %807 = vmatprep.subr.bf16.mxu0 0
    %808 = vmatpush2.bf16.msra.mxu0 0
    %809 = vmatprep.subr.bf16.mxu0 0
    %810 = vmatpush2.bf16.msra.mxu0 0
    %811 = vmatprep.mubr.bf16.mxu0 0
    %812 = vmatmul.mubr.bf16.gmra.mxu0 %v774
    %v813 = vpop.f32.mrf.mxu0
    %v814 = vadd.f32 0.0, %v813
    %v815 = vpop.f32.mrf.mxu0
    %v816 = vpop.f32.mrf.mxu0
    %v817 = vpop.f32.mrf.mxu0
    %818 = vdwg.mxu0
    %819 = vrot.lane.b32.xlu0 %v180, 64
    %v820 = vpop.permute.xlu0 %819
    %v822 = vsel %vm188, %v669, 0
    %v825 = vsel %vm679, %v820, 0
    %827 = vmatprep.subr.bf16.mxu0 0
    %828 = vmatpush1.bf16.msra.mxu0 0
    %829 = vmatprep.subr.bf16.mxu0 0
    %830 = vmatpush1.bf16.msra.mxu0 0
    %831 = vmatprep.subr.bf16.mxu0 0
    %832 = vmatpush1.bf16.msra.mxu0 0
    %833 = vmatprep.subr.bf16.mxu0 0
    %834 = vmatpush1.bf16.msra.mxu0 0
    %835 = vmatprep.subr.bf16.mxu0 0
    %836 = vmatpush1.bf16.msra.mxu0 0
    %837 = vmatprep.subr.bf16.mxu0 0
    %838 = vmatpush1.bf16.msra.mxu0 0
    %839 = vmatprep.subr.bf16.mxu0 0
    %840 = vmatpush1.bf16.msra.mxu0 0
    %841 = vmatprep.subr.bf16.mxu0 0
    %842 = vmatpush1.bf16.msra.mxu0 %v825
    %843 = vmatprep.subr.bf16.mxu0 0
    %844 = vmatpush2.bf16.msra.mxu0 0
    %845 = vmatprep.subr.bf16.mxu0 0
    %846 = vmatpush2.bf16.msra.mxu0 0
    %847 = vmatprep.subr.bf16.mxu0 0
    %848 = vmatpush2.bf16.msra.mxu0 0
    %849 = vmatprep.subr.bf16.mxu0 0
    %850 = vmatpush2.bf16.msra.mxu0 0
    %851 = vmatprep.subr.bf16.mxu0 0
    %852 = vmatpush2.bf16.msra.mxu0 0
    %853 = vmatprep.subr.bf16.mxu0 0
    %854 = vmatpush2.bf16.msra.mxu0 0
    %855 = vmatprep.subr.bf16.mxu0 0
    %856 = vmatpush2.bf16.msra.mxu0 0
    %857 = vmatprep.subr.bf16.mxu0 0
    %858 = vmatpush2.bf16.msra.mxu0 0
    %859 = vmatprep.mubr.bf16.mxu0 0
    %860 = vmatmul.mubr.bf16.gmra.mxu0 %v822
    %v861 = vpop.f32.mrf.mxu0
    %v862 = vadd.f32 0.0, %v861
    %v863 = vpop.f32.mrf.mxu0
    %v864 = vpop.f32.mrf.mxu0
    %v865 = vpop.f32.mrf.mxu0
    %866 = vdwg.mxu0
    %867 = vrot.lane.b32.xlu0 %v181, 64
    %v868 = vpop.permute.xlu0 %867
    %v870 = vsel %vm188, %v670, 0
    %v873 = vsel %vm679, %v868, 0
    %875 = vmatprep.subr.bf16.mxu0 0
    %876 = vmatpush1.bf16.msra.mxu0 0
    %877 = vmatprep.subr.bf16.mxu0 0
    %878 = vmatpush1.bf16.msra.mxu0 0
    %879 = vmatprep.subr.bf16.mxu0 0
    %880 = vmatpush1.bf16.msra.mxu0 0
    %881 = vmatprep.subr.bf16.mxu0 0
    %882 = vmatpush1.bf16.msra.mxu0 0
    %883 = vmatprep.subr.bf16.mxu0 0
    %884 = vmatpush1.bf16.msra.mxu0 0
    %885 = vmatprep.subr.bf16.mxu0 0
    %886 = vmatpush1.bf16.msra.mxu0 0
    %887 = vmatprep.subr.bf16.mxu0 0
    %888 = vmatpush1.bf16.msra.mxu0 0
    %889 = vmatprep.subr.bf16.mxu0 0
    %890 = vmatpush1.bf16.msra.mxu0 %v873
    %891 = vmatprep.subr.bf16.mxu0 0
    %892 = vmatpush2.bf16.msra.mxu0 0
    %893 = vmatprep.subr.bf16.mxu0 0
    %894 = vmatpush2.bf16.msra.mxu0 0
    %895 = vmatprep.subr.bf16.mxu0 0
    %896 = vmatpush2.bf16.msra.mxu0 0
    %897 = vmatprep.subr.bf16.mxu0 0
    %898 = vmatpush2.bf16.msra.mxu0 0
    %899 = vmatprep.subr.bf16.mxu0 0
    %900 = vmatpush2.bf16.msra.mxu0 0
    %901 = vmatprep.subr.bf16.mxu0 0
    %902 = vmatpush2.bf16.msra.mxu0 0
    %903 = vmatprep.subr.bf16.mxu0 0
    %904 = vmatpush2.bf16.msra.mxu0 0
    %905 = vmatprep.subr.bf16.mxu0 0
    %906 = vmatpush2.bf16.msra.mxu0 0
    %907 = vmatprep.mubr.bf16.mxu0 0
    %908 = vmatmul.mubr.bf16.gmra.mxu0 %v870
    %v909 = vpop.f32.mrf.mxu0
    %v910 = vadd.f32 0.0, %v909
    %v911 = vpop.f32.mrf.mxu0
    %v912 = vpop.f32.mrf.mxu0
    %v913 = vpop.f32.mrf.mxu0
    %914 = vdwg.mxu0
    %915 = vrot.lane.b32.xlu0 %v182, 64
    %v916 = vpop.permute.xlu0 %915
    %v918 = vsel %vm188, %v671, 0
    %v921 = vsel %vm679, %v916, 0
    %923 = vmatprep.subr.bf16.mxu0 0
    %924 = vmatpush1.bf16.msra.mxu0 0
    %925 = vmatprep.subr.bf16.mxu0 0
    %926 = vmatpush1.bf16.msra.mxu0 0
    %927 = vmatprep.subr.bf16.mxu0 0
    %928 = vmatpush1.bf16.msra.mxu0 0
    %929 = vmatprep.subr.bf16.mxu0 0
    %930 = vmatpush1.bf16.msra.mxu0 0
    %931 = vmatprep.subr.bf16.mxu0 0
    %932 = vmatpush1.bf16.msra.mxu0 0
    %933 = vmatprep.subr.bf16.mxu0 0
    %934 = vmatpush1.bf16.msra.mxu0 0
    %935 = vmatprep.subr.bf16.mxu0 0
    %936 = vmatpush1.bf16.msra.mxu0 0
    %937 = vmatprep.subr.bf16.mxu0 0
    %938 = vmatpush1.bf16.msra.mxu0 %v921
    %939 = vmatprep.subr.bf16.mxu0 0
    %940 = vmatpush2.bf16.msra.mxu0 0
    %941 = vmatprep.subr.bf16.mxu0 0
    %942 = vmatpush2.bf16.msra.mxu0 0
    %943 = vmatprep.subr.bf16.mxu0 0
    %944 = vmatpush2.bf16.msra.mxu0 0
    %945 = vmatprep.subr.bf16.mxu0 0
    %946 = vmatpush2.bf16.msra.mxu0 0
    %947 = vmatprep.subr.bf16.mxu0 0
    %948 = vmatpush2.bf16.msra.mxu0 0
    %949 = vmatprep.subr.bf16.mxu0 0
    %950 = vmatpush2.bf16.msra.mxu0 0
    %951 = vmatprep.subr.bf16.mxu0 0
    %952 = vmatpush2.bf16.msra.mxu0 0
    %953 = vmatprep.subr.bf16.mxu0 0
    %954 = vmatpush2.bf16.msra.mxu0 0
    %955 = vmatprep.mubr.bf16.mxu0 0
    %956 = vmatmul.mubr.bf16.gmra.mxu0 %v918
    %v957 = vpop.f32.mrf.mxu0
    %v958 = vadd.f32 0.0, %v957
    %v959 = vpop.f32.mrf.mxu0
    %v960 = vpop.f32.mrf.mxu0
    %v961 = vpop.f32.mrf.mxu0
    %962 = vdwg.mxu0
    %963 = vrot.lane.b32.xlu0 %v183, 64
    %v964 = vpop.permute.xlu0 %963
    %v966 = vsel %vm188, %v672, 0
    %v969 = vsel %vm679, %v964, 0
    %971 = vmatprep.subr.bf16.mxu0 0
    %972 = vmatpush1.bf16.msra.mxu0 0
    %973 = vmatprep.subr.bf16.mxu0 0
    %974 = vmatpush1.bf16.msra.mxu0 0
    %975 = vmatprep.subr.bf16.mxu0 0
    %976 = vmatpush1.bf16.msra.mxu0 0
    %977 = vmatprep.subr.bf16.mxu0 0
    %978 = vmatpush1.bf16.msra.mxu0 0
    %979 = vmatprep.subr.bf16.mxu0 0
    %980 = vmatpush1.bf16.msra.mxu0 0
    %981 = vmatprep.subr.bf16.mxu0 0
    %982 = vmatpush1.bf16.msra.mxu0 0
    %983 = vmatprep.subr.bf16.mxu0 0
    %984 = vmatpush1.bf16.msra.mxu0 0
    %985 = vmatprep.subr.bf16.mxu0 0
    %986 = vmatpush1.bf16.msra.mxu0 %v969
    %987 = vmatprep.subr.bf16.mxu0 0
    %988 = vmatpush2.bf16.msra.mxu0 0
    %989 = vmatprep.subr.bf16.mxu0 0
    %990 = vmatpush2.bf16.msra.mxu0 0
    %991 = vmatprep.subr.bf16.mxu0 0
    %992 = vmatpush2.bf16.msra.mxu0 0
    %993 = vmatprep.subr.bf16.mxu0 0
    %994 = vmatpush2.bf16.msra.mxu0 0
    %995 = vmatprep.subr.bf16.mxu0 0
    %996 = vmatpush2.bf16.msra.mxu0 0
    %997 = vmatprep.subr.bf16.mxu0 0
    %998 = vmatpush2.bf16.msra.mxu0 0
    %999 = vmatprep.subr.bf16.mxu0 0
    %1000 = vmatpush2.bf16.msra.mxu0 0
    %1001 = vmatprep.subr.bf16.mxu0 0
    %1002 = vmatpush2.bf16.msra.mxu0 0
    %1003 = vmatprep.mubr.bf16.mxu0 0
    %1004 = vmatmul.mubr.bf16.gmra.mxu0 %v966
    %v1005 = vpop.f32.mrf.mxu0
    %v1006 = vadd.f32 0.0, %v1005
    %v1007 = vpop.f32.mrf.mxu0
    %v1008 = vpop.f32.mrf.mxu0
    %v1009 = vpop.f32.mrf.mxu0
    %1010 = vdwg.mxu0
    %1011 = vrot.lane.b32.xlu0 %v184, 64
    %v1012 = vpop.permute.xlu0 %1011
    %v1014 = vsel %vm188, %v673, 0
    %v1017 = vsel %vm679, %v1012, 0
    %1019 = vmatprep.subr.bf16.mxu0 0
    %1020 = vmatpush1.bf16.msra.mxu0 0
    %1021 = vmatprep.subr.bf16.mxu0 0
    %1022 = vmatpush1.bf16.msra.mxu0 0
    %1023 = vmatprep.subr.bf16.mxu0 0
    %1024 = vmatpush1.bf16.msra.mxu0 0
    %1025 = vmatprep.subr.bf16.mxu0 0
    %1026 = vmatpush1.bf16.msra.mxu0 0
    %1027 = vmatprep.subr.bf16.mxu0 0
    %1028 = vmatpush1.bf16.msra.mxu0 0
    %1029 = vmatprep.subr.bf16.mxu0 0
    %1030 = vmatpush1.bf16.msra.mxu0 0
    %1031 = vmatprep.subr.bf16.mxu0 0
    %1032 = vmatpush1.bf16.msra.mxu0 0
    %1033 = vmatprep.subr.bf16.mxu0 0
    %1034 = vmatpush1.bf16.msra.mxu0 %v1017
    %1035 = vmatprep.subr.bf16.mxu0 0
    %1036 = vmatpush2.bf16.msra.mxu0 0
    %1037 = vmatprep.subr.bf16.mxu0 0
    %1038 = vmatpush2.bf16.msra.mxu0 0
    %1039 = vmatprep.subr.bf16.mxu0 0
    %1040 = vmatpush2.bf16.msra.mxu0 0
    %1041 = vmatprep.subr.bf16.mxu0 0
    %1042 = vmatpush2.bf16.msra.mxu0 0
    %1043 = vmatprep.subr.bf16.mxu0 0
    %1044 = vmatpush2.bf16.msra.mxu0 0
    %1045 = vmatprep.subr.bf16.mxu0 0
    %1046 = vmatpush2.bf16.msra.mxu0 0
    %1047 = vmatprep.subr.bf16.mxu0 0
    %1048 = vmatpush2.bf16.msra.mxu0 0
    %1049 = vmatprep.subr.bf16.mxu0 0
    %1050 = vmatpush2.bf16.msra.mxu0 0
    %1051 = vmatprep.mubr.bf16.mxu0 0
    %1052 = vmatmul.mubr.bf16.gmra.mxu0 %v1014
    %v1053 = vpop.f32.mrf.mxu0
    %v1054 = vadd.f32 0.0, %v1053
    %v1055 = vpop.f32.mrf.mxu0
    %v1056 = vpop.f32.mrf.mxu0
    %v1057 = vpop.f32.mrf.mxu0
    %1058 = vdwg.mxu0
    %1061 = vrot.lane.b32.xlu0 %v814, 8
    %v1062 = vpop.permute.xlu0 %1061
    %1063 = vrot.lane.b32.xlu0 %v862, 8
    %v1064 = vpop.permute.xlu0 %1063
    %1069 = vrot.lane.b32.xlu0 %v910, 16
    %v1070 = vpop.permute.xlu0 %1069
    %1071 = vrot.lane.b32.xlu0 %v958, 16
    %v1072 = vpop.permute.xlu0 %1071
    %1077 = vrot.lane.b32.xlu0 %v1006, 24
    %v1078 = vpop.permute.xlu0 %1077
    %1079 = vrot.lane.b32.xlu0 %v1054, 24
    %v1080 = vpop.permute.xlu0 %1079
    %v1083 = vsel %vm188, %v718, %v1062
    %v1084 = vsel %vm188, %v766, %v1064
    %vm1085 = vcmask 130048
    %v1086 = vsel %vm1085, %v1083, %v1070
    %v1087 = vsel %vm1085, %v1084, %v1072
    %vm1088 = vcmask 195584
    %v1089 = vsel %vm1088, %v1086, %v1078
    %v1090 = vsel %vm1088, %v1087, %v1080
    %v1091 = vpack.c.bf16 %v1090, %v1089
    %v1092 = vld [vmem:[%s5] sm:$0xf]
    %v1093 = vld [vmem:[%s5 + $0x4] sm:$0xf]
    %v1094 = vld [vmem:[%s5 + $0x8] sm:$0xf]
    %v1095 = vld [vmem:[%s5 + $0xc] sm:$0xf]
    %v1096 = vld [vmem:[%s2] sm:$0x1]
    %v1098 = vlaneseq
    %v1099 = vshrl.u32 %v1098, 7
    %v1100 = vsub.s32 0, %v1099
    %v1101 = vrot.slane %v1096, %v1100
    %v1106 = vunpack.c.l.b16 %v1092
    %v1107 = vunpack.c.l.b16 %v1093
    %v1108 = vunpack.c.l.b16 %v1094
    %v1109 = vunpack.c.l.b16 %v1095
    %v1110 = vpack.c.b16 %v1107, %v1106
    %v1111 = vpack.c.b16 %v1109, %v1108
    %1114 = vrot.lane.b32.xlu0 %v1101, 32
    %v1115 = vpop.permute.xlu0 %1114
    %v1118 = vsel %vm45, %v1091, 0
    %1120 = vmatprep.subr.bf16.mxu0 0
    %1121 = vmatpush1.bf16.msra.mxu0 0
    %1122 = vmatprep.subr.bf16.mxu0 0
    %1123 = vmatpush1.bf16.msra.mxu0 0
    %1124 = vmatprep.subr.bf16.mxu0 0
    %1125 = vmatpush1.bf16.msra.mxu0 0
    %1126 = vmatprep.subr.bf16.mxu0 0
    %1127 = vmatpush1.bf16.msra.mxu0 0
    %1128 = vmatprep.subr.bf16.mxu0 0
    %1129 = vmatpush1.bf16.msra.mxu0 0
    %1130 = vmatprep.subr.bf16.mxu0 0
    %1131 = vmatpush1.bf16.msra.mxu0 0
    %1132 = vmatprep.subr.bf16.mxu0 0
    %1133 = vmatpush1.bf16.msra.mxu0 %v1111
    %1134 = vmatprep.subr.bf16.mxu0 0
    %1135 = vmatpush1.bf16.msra.mxu0 %v1110
    %1136 = vmatprep.subr.bf16.mxu0 0
    %1137 = vmatpush2.bf16.msra.mxu0 0
    %1138 = vmatprep.subr.bf16.mxu0 0
    %1139 = vmatpush2.bf16.msra.mxu0 0
    %1140 = vmatprep.subr.bf16.mxu0 0
    %1141 = vmatpush2.bf16.msra.mxu0 0
    %1142 = vmatprep.subr.bf16.mxu0 0
    %1143 = vmatpush2.bf16.msra.mxu0 0
    %1144 = vmatprep.subr.bf16.mxu0 0
    %1145 = vmatpush2.bf16.msra.mxu0 0
    %1146 = vmatprep.subr.bf16.mxu0 0
    %1147 = vmatpush2.bf16.msra.mxu0 0
    %1148 = vmatprep.subr.bf16.mxu0 0
    %1149 = vmatpush2.bf16.msra.mxu0 0
    %1150 = vmatprep.subr.bf16.mxu0 0
    %1151 = vmatpush2.bf16.msra.mxu0 0
    %1152 = vmatprep.mubr.bf16.mxu0 0
    %1153 = vmatmul.mubr.bf16.gmra.mxu0 %v1118
    %v1154 = vpop.f32.mrf.mxu0
    %v1155 = vadd.f32 %v1115, %v1154
    %v1156 = vpop.f32.mrf.mxu0
    %v1157 = vpop.f32.mrf.mxu0
    %v1158 = vadd.f32 %v1115, %v1157
    %v1159 = vpop.f32.mrf.mxu0
    %1160 = vdwg.mxu0
    %v1161 = vadd.f32 %v87, %v1155
    %v1162 = vadd.f32 %v88, %v1158
    %v1163 = vld [vmem:[%s2 + $0x1] sm:$0x1]
    %v1164 = vsel %vm45, %v1161, 0.0
    %1165 = vadd.xlane.f32.xlu0 %v1164
    %v1166 = vpop.xlane.xlu0 %1165
    %v1167 = vsel %vm45, %v1162, 0.0
    %1168 = vadd.xlane.f32.xlu0 %v1167
    %v1169 = vpop.xlane.xlu0 %1168
    %v1170 = vmul.f32 %v1161, %v1161
    %v1171 = vmul.f32 %v1162, %v1162
    %v1172 = vsel %vm45, %v1170, 0.0
    %1173 = vadd.xlane.f32.xlu0 %v1172
    %v1174 = vpop.xlane.xlu0 %1173
    %v1175 = vsel %vm45, %v1171, 0.0
    %1176 = vadd.xlane.f32.xlu0 %v1175
    %v1177 = vpop.xlane.xlu0 %1176
    %v1178 = vmul.f32 %v1166, 0.03125
    %v1179 = vmul.f32 %v1169, 0.03125
    %v1180 = vmul.f32 %v1174, 0.03125
    %v1181 = vmul.f32 %v1177, 0.03125
    %v1182 = vmul.f32 %v1178, %v1178
    %v1183 = vmul.f32 %v1179, %v1179
    %v1184 = vsub.f32 %v1180, %v1182
    %v1185 = vsub.f32 %v1181, %v1183
    %v1186 = vsub.f32 %v1161, %v1178
    %v1187 = vsub.f32 %v1162, %v1179
    %v1188 = vadd.f32 %v1184, 1e-12
    %v1189 = vadd.f32 %v1185, 1e-12
    %v1190 = vrsqrt.pop %v1188
    %v1191 = vrsqrt.pop %v1189
    %v1192 = vmul.f32 %v1186, %v1190
    %v1193 = vmul.f32 %v1187, %v1191
    %v1195 = vlaneseq
    %v1196 = vshrl.u32 %v1195, 7
    %v1197 = vsub.s32 0, %v1196
    %v1198 = vrot.slane %v1163, %v1197
    %v1200 = vmul.f32 %v1192, %v1198
    %v1201 = vmul.f32 %v1193, %v1198
    %1202 = vrot.lane.b32.xlu0 %v1198, 96
    %v1203 = vpop.permute.xlu0 %1202
    %v1205 = vadd.f32 %v1200, %v1203
    %v1206 = vadd.f32 %v1201, %v1203
    %v1207 = vpack.c.bf16 %v1206, %v1205
    %v1208 = vld [vmem:[%s6] sm:$0xf]
    %v1209 = vld [vmem:[%s6 + $0x4] sm:$0xf]
    %v1210 = vld [vmem:[%s6 + $0x8] sm:$0xf]
    %v1211 = vld [vmem:[%s6 + $0xc] sm:$0xf]
    %v1216 = vunpack.c.l.b16 %v1208
    %v1217 = vunpack.c.l.b16 %v1209
    %v1218 = vunpack.c.l.b16 %v1210
    %v1219 = vunpack.c.l.b16 %v1211
    %v1220 = vpack.c.b16 %v1217, %v1216
    %v1221 = vpack.c.b16 %v1219, %v1218
    %1224 = vrot.lane.b32.xlu0 %v1198, 64
    %v1225 = vpop.permute.xlu0 %1224
    %v1228 = vsel %vm45, %v1207, 0
    %1230 = vmatprep.subr.bf16.mxu0 0
    %1231 = vmatpush1.bf16.msra.mxu0 0
    %1232 = vmatprep.subr.bf16.mxu0 0
    %1233 = vmatpush1.bf16.msra.mxu0 0
    %1234 = vmatprep.subr.bf16.mxu0 0
    %1235 = vmatpush1.bf16.msra.mxu0 0
    %1236 = vmatprep.subr.bf16.mxu0 0
    %1237 = vmatpush1.bf16.msra.mxu0 0
    %1238 = vmatprep.subr.bf16.mxu0 0
    %1239 = vmatpush1.bf16.msra.mxu0 0
    %1240 = vmatprep.subr.bf16.mxu0 0
    %1241 = vmatpush1.bf16.msra.mxu0 0
    %1242 = vmatprep.subr.bf16.mxu0 0
    %1243 = vmatpush1.bf16.msra.mxu0 %v1221
    %1244 = vmatprep.subr.bf16.mxu0 0
    %1245 = vmatpush1.bf16.msra.mxu0 %v1220
    %1246 = vmatprep.subr.bf16.mxu0 0
    %1247 = vmatpush2.bf16.msra.mxu0 0
    %1248 = vmatprep.subr.bf16.mxu0 0
    %1249 = vmatpush2.bf16.msra.mxu0 0
    %1250 = vmatprep.subr.bf16.mxu0 0
    %1251 = vmatpush2.bf16.msra.mxu0 0
    %1252 = vmatprep.subr.bf16.mxu0 0
    %1253 = vmatpush2.bf16.msra.mxu0 0
    %1254 = vmatprep.subr.bf16.mxu0 0
    %1255 = vmatpush2.bf16.msra.mxu0 0
    %1256 = vmatprep.subr.bf16.mxu0 0
    %1257 = vmatpush2.bf16.msra.mxu0 0
    %1258 = vmatprep.subr.bf16.mxu0 0
    %1259 = vmatpush2.bf16.msra.mxu0 0
    %1260 = vmatprep.subr.bf16.mxu0 0
    %1261 = vmatpush2.bf16.msra.mxu0 0
    %1262 = vmatprep.mubr.bf16.mxu0 0
    %1263 = vmatmul.mubr.bf16.gmra.mxu0 %v1228
    %v1264 = vpop.f32.mrf.mxu0
    %v1265 = vadd.f32 %v1225, %v1264
    %v1266 = vpop.f32.mrf.mxu0
    %v1267 = vpop.f32.mrf.mxu0
    %v1268 = vadd.f32 %v1225, %v1267
    %v1269 = vpop.f32.mrf.mxu0
    %1270 = vdwg.mxu0
    %v1271 = vmul.f32 %v1265, %v1265
    %v1272 = vmul.f32 %v1268, %v1268
    %v1273 = vmul.f32 %v1265, %v1271
    %v1274 = vmul.f32 %v1268, %v1272
    %v1275 = vmul.f32 %v1273, 0.044715
    %v1276 = vmul.f32 %v1274, 0.044715
    %v1277 = vadd.f32 %v1265, %v1275
    %v1278 = vadd.f32 %v1268, %v1276
    %v1279 = vmul.f32 %v1277, 0.7978846
    %v1280 = vmul.f32 %v1278, 0.7978846
    %v1281 = vtanh.pop %v1279
    %v1282 = vtanh.pop %v1280
    %v1283 = vadd.f32 %v1281, 1.0
    %v1284 = vadd.f32 %v1282, 1.0
    %v1285 = vmul.f32 %v1283, 0.5
    %v1286 = vmul.f32 %v1284, 0.5
    %v1287 = vmul.f32 %v1265, %v1285
    %v1288 = vmul.f32 %v1268, %v1286
    %v1289 = vpack.c.bf16 %v1288, %v1287
    %v1290 = vld [vmem:[%s7] sm:$0xf]
    %v1291 = vld [vmem:[%s7 + $0x4] sm:$0xf]
    %v1292 = vld [vmem:[%s7 + $0x8] sm:$0xf]
    %v1293 = vld [vmem:[%s7 + $0xc] sm:$0xf]
    %v1294 = vld [vmem:[%s7 + $0x10] sm:$0xf]
    %v1295 = vld [vmem:[%s7 + $0x14] sm:$0xf]
    %v1296 = vld [vmem:[%s7 + $0x18] sm:$0xf]
    %v1297 = vld [vmem:[%s7 + $0x1c] sm:$0xf]
    %v1298 = vld [vmem:[%s2 + $0x2] sm:$0x1]
    %v1300 = vlaneseq
    %v1301 = vshrl.u32 %v1300, 7
    %v1302 = vsub.s32 0, %v1301
    %v1303 = vrot.slane %v1298, %v1302
    %v1313 = vunpack.c.l.b16 %v1290
    %v1314 = vunpack.c.l.b16 %v1291
    %v1315 = vunpack.c.l.b16 %v1292
    %v1316 = vunpack.c.l.b16 %v1293
    %v1317 = vunpack.c.l.b16 %v1294
    %v1318 = vunpack.c.l.b16 %v1295
    %v1319 = vunpack.c.l.b16 %v1296
    %v1320 = vunpack.c.l.b16 %v1297
    %v1321 = vpack.c.b16 %v1314, %v1313
    %v1322 = vpack.c.b16 %v1316, %v1315
    %v1323 = vpack.c.b16 %v1318, %v1317
    %v1324 = vpack.c.b16 %v1320, %v1319
    %vm1329 = vcmask 523264
    %v1331 = vsel %vm1329, %v1289, 0
    %1333 = vmatprep.subr.bf16.mxu0 0
    %1334 = vmatpush1.bf16.msra.mxu0 0
    %1335 = vmatprep.subr.bf16.mxu0 0
    %1336 = vmatpush1.bf16.msra.mxu0 0
    %1337 = vmatprep.subr.bf16.mxu0 0
    %1338 = vmatpush1.bf16.msra.mxu0 0
    %1339 = vmatprep.subr.bf16.mxu0 0
    %1340 = vmatpush1.bf16.msra.mxu0 0
    %1341 = vmatprep.subr.bf16.mxu0 0
    %1342 = vmatpush1.bf16.msra.mxu0 %v1324
    %1343 = vmatprep.subr.bf16.mxu0 0
    %1344 = vmatpush1.bf16.msra.mxu0 %v1323
    %1345 = vmatprep.subr.bf16.mxu0 0
    %1346 = vmatpush1.bf16.msra.mxu0 %v1322
    %1347 = vmatprep.subr.bf16.mxu0 0
    %1348 = vmatpush1.bf16.msra.mxu0 %v1321
    %1349 = vmatprep.subr.bf16.mxu0 0
    %1350 = vmatpush2.bf16.msra.mxu0 0
    %1351 = vmatprep.subr.bf16.mxu0 0
    %1352 = vmatpush2.bf16.msra.mxu0 0
    %1353 = vmatprep.subr.bf16.mxu0 0
    %1354 = vmatpush2.bf16.msra.mxu0 0
    %1355 = vmatprep.subr.bf16.mxu0 0
    %1356 = vmatpush2.bf16.msra.mxu0 0
    %1357 = vmatprep.subr.bf16.mxu0 0
    %1358 = vmatpush2.bf16.msra.mxu0 0
    %1359 = vmatprep.subr.bf16.mxu0 0
    %1360 = vmatpush2.bf16.msra.mxu0 0
    %1361 = vmatprep.subr.bf16.mxu0 0
    %1362 = vmatpush2.bf16.msra.mxu0 0
    %1363 = vmatprep.subr.bf16.mxu0 0
    %1364 = vmatpush2.bf16.msra.mxu0 0
    %1365 = vmatprep.mubr.bf16.mxu0 0
    %1366 = vmatmul.mubr.bf16.gmra.mxu0 %v1331
    %v1367 = vpop.f32.mrf.mxu0
    %v1368 = vadd.f32 %v1303, %v1367
    %v1369 = vpop.f32.mrf.mxu0
    %v1370 = vpop.f32.mrf.mxu0
    %v1371 = vadd.f32 %v1303, %v1370
    %v1372 = vpop.f32.mrf.mxu0
    %1373 = vdwg.mxu0
    %v1374 = vadd.f32 %v1205, %v1368
    %v1375 = vadd.f32 %v1206, %v1371
    %v1376 = vsel %vm45, %v1374, 0.0
    %1377 = vadd.xlane.f32.xlu0 %v1376
    %v1378 = vpop.xlane.xlu0 %1377
    %v1379 = vsel %vm45, %v1375, 0.0
    %1380 = vadd.xlane.f32.xlu0 %v1379
    %v1381 = vpop.xlane.xlu0 %1380
    %v1382 = vmul.f32 %v1374, %v1374
    %v1383 = vmul.f32 %v1375, %v1375
    %v1384 = vsel %vm45, %v1382, 0.0
    %1385 = vadd.xlane.f32.xlu0 %v1384
    %v1386 = vpop.xlane.xlu0 %1385
    %v1387 = vsel %vm45, %v1383, 0.0
    %1388 = vadd.xlane.f32.xlu0 %v1387
    %v1389 = vpop.xlane.xlu0 %1388
    %v1390 = vmul.f32 %v1378, 0.03125
    %v1391 = vmul.f32 %v1381, 0.03125
    %v1392 = vmul.f32 %v1386, 0.03125
    %v1393 = vmul.f32 %v1389, 0.03125
    %v1394 = vmul.f32 %v1390, %v1390
    %v1395 = vmul.f32 %v1391, %v1391
    %v1396 = vsub.f32 %v1392, %v1394
    %v1397 = vsub.f32 %v1393, %v1395
    %v1398 = vsub.f32 %v1374, %v1390
    %v1399 = vsub.f32 %v1375, %v1391
    %v1400 = vadd.f32 %v1396, 1e-12
    %v1401 = vadd.f32 %v1397, 1e-12
    %v1402 = vrsqrt.pop %v1400
    %v1403 = vrsqrt.pop %v1401
    %v1404 = vmul.f32 %v1398, %v1402
    %v1405 = vmul.f32 %v1399, %v1403
    %1406 = vrot.lane.b32.xlu0 %v1303, 96
    %v1407 = vpop.permute.xlu0 %1406
    %v1409 = vmul.f32 %v1404, %v1407
    %v1410 = vmul.f32 %v1405, %v1407
    %1411 = vrot.lane.b32.xlu0 %v1303, 64
    %v1412 = vpop.permute.xlu0 %1411
    %v1414 = vadd.f32 %v1409, %v1412
    %v1415 = vadd.f32 %v1410, %v1412
    %v1416 = vpack.c.bf16 %v1415, %v1414
    %s1417 = scalar_lea.vmem %s4, 16
    %v1418 = vld [vmem:[%s1417] sm:$0xf]
    %v1419 = vld [vmem:[%s1417 + $0x4] sm:$0xf]
    %v1420 = vld [vmem:[%s1417 + $0x8] sm:$0xf]
    %v1421 = vld [vmem:[%s1417 + $0xc] sm:$0xf]
    %s1422 = scalar_lea.vmem %s2, 3
    %v1423 = vld [vmem:[%s1422] sm:$0x1]
    %v1425 = vlaneseq
    %v1426 = vshrl.u32 %v1425, 7
    %v1427 = vsub.s32 0, %v1426
    %v1428 = vrot.slane %v1423, %v1427
    %v1434 = vunpack.c.l.b16 %v1418
    %v1435 = vunpack.c.l.b16 %v1419
    %v1436 = vunpack.c.l.b16 %v1420
    %v1437 = vunpack.c.l.b16 %v1421
    %v1438 = vpack.c.b16 %v1435, %v1434
    %v1439 = vpack.c.b16 %v1437, %v1436
    %v1443 = vsel %vm45, %v1416, 0
    %1445 = vmatprep.subr.bf16.mxu0 0
    %1446 = vmatpush1.bf16.msra.mxu0 0
    %1447 = vmatprep.subr.bf16.mxu0 0
    %1448 = vmatpush1.bf16.msra.mxu0 0
    %1449 = vmatprep.subr.bf16.mxu0 0
    %1450 = vmatpush1.bf16.msra.mxu0 0
    %1451 = vmatprep.subr.bf16.mxu0 0
    %1452 = vmatpush1.bf16.msra.mxu0 0
    %1453 = vmatprep.subr.bf16.mxu0 0
    %1454 = vmatpush1.bf16.msra.mxu0 0
    %1455 = vmatprep.subr.bf16.mxu0 0
    %1456 = vmatpush1.bf16.msra.mxu0 0
    %1457 = vmatprep.subr.bf16.mxu0 0
    %1458 = vmatpush1.bf16.msra.mxu0 %v1439
    %1459 = vmatprep.subr.bf16.mxu0 0
    %1460 = vmatpush1.bf16.msra.mxu0 %v1438
    %1461 = vmatprep.subr.bf16.mxu0 0
    %1462 = vmatpush2.bf16.msra.mxu0 0
    %1463 = vmatprep.subr.bf16.mxu0 0
    %1464 = vmatpush2.bf16.msra.mxu0 0
    %1465 = vmatprep.subr.bf16.mxu0 0
    %1466 = vmatpush2.bf16.msra.mxu0 0
    %1467 = vmatprep.subr.bf16.mxu0 0
    %1468 = vmatpush2.bf16.msra.mxu0 0
    %1469 = vmatprep.subr.bf16.mxu0 0
    %1470 = vmatpush2.bf16.msra.mxu0 0
    %1471 = vmatprep.subr.bf16.mxu0 0
    %1472 = vmatpush2.bf16.msra.mxu0 0
    %1473 = vmatprep.subr.bf16.mxu0 0
    %1474 = vmatpush2.bf16.msra.mxu0 0
    %1475 = vmatprep.subr.bf16.mxu0 0
    %1476 = vmatpush2.bf16.msra.mxu0 0
    %1477 = vmatprep.mubr.bf16.mxu0 0
    %1478 = vmatmul.mubr.bf16.gmra.mxu0 %v1443
    %v1479 = vpop.f32.mrf.mxu0
    %v1480 = vadd.f32 %v1428, %v1479
    %v1481 = vpop.f32.mrf.mxu0
    %v1482 = vpop.f32.mrf.mxu0
    %v1483 = vadd.f32 %v1428, %v1482
    %v1484 = vpop.f32.mrf.mxu0
    %1485 = vdwg.mxu0
    %1488 = vrot.lane.b32.xlu0 %v1480, 120
    %v1489 = vpop.permute.xlu0 %1488
    %1490 = vrot.lane.b32.xlu0 %v1483, 120
    %v1491 = vpop.permute.xlu0 %1490
    %1494 = vrot.lane.b32.xlu0 %v1480, 112
    %v1495 = vpop.permute.xlu0 %1494
    %1496 = vrot.lane.b32.xlu0 %v1483, 112
    %v1497 = vpop.permute.xlu0 %1496
    %1500 = vrot.lane.b32.xlu0 %v1480, 104
    %v1501 = vpop.permute.xlu0 %1500
    %1502 = vrot.lane.b32.xlu0 %v1483, 104
    %v1503 = vpop.permute.xlu0 %1502
    %v1506 = vpack.c.bf16 %v1480, %v1480
    %v1507 = vpack.c.bf16 %v1483, %v1483
    %v1508 = vpack.c.bf16 %v1489, %v1489
    %v1509 = vpack.c.bf16 %v1491, %v1491
    %v1510 = vpack.c.bf16 %v1495, %v1495
    %v1511 = vpack.c.bf16 %v1497, %v1497
    %v1512 = vpack.c.bf16 %v1501, %v1501
    %v1513 = vpack.c.bf16 %v1503, %v1503
    %1515 = vrot.lane.b32.xlu0 %v1506, 96
    %v1516 = vpop.permute.xlu0 %1515
    %v1518 = vsel %vm188, %v1506, 0
    %v1521 = vsel %vm188, %v1516, 0
    %1523 = vmatprep.subr.bf16.mxu0 0
    %1524 = vmatpush1.bf16.xpose.msra.mxu0 0
    %1525 = vmatprep.subr.bf16.mxu0 0
    %1526 = vmatpush1.bf16.xpose.msra.mxu0 0
    %1527 = vmatprep.subr.bf16.mxu0 0
    %1528 = vmatpush1.bf16.xpose.msra.mxu0 0
    %1529 = vmatprep.subr.bf16.mxu0 0
    %1530 = vmatpush1.bf16.xpose.msra.mxu0 0
    %1531 = vmatprep.subr.bf16.mxu0 0
    %1532 = vmatpush1.bf16.xpose.msra.mxu0 0
    %1533 = vmatprep.subr.bf16.mxu0 0
    %1534 = vmatpush1.bf16.xpose.msra.mxu0 0
    %1535 = vmatprep.subr.bf16.mxu0 0
    %1536 = vmatpush1.bf16.xpose.msra.mxu0 0
    %1537 = vmatprep.subr.bf16.mxu0 0
    %1538 = vmatpush1.bf16.xpose.msra.mxu0 %v1521
    %1539 = vmatprep.subr.bf16.mxu0 0
    %1540 = vmatpush2.bf16.xpose.msra.mxu0 0
    %1541 = vmatprep.subr.bf16.mxu0 0
    %1542 = vmatpush2.bf16.xpose.msra.mxu0 0
    %1543 = vmatprep.subr.bf16.mxu0 0
    %1544 = vmatpush2.bf16.xpose.msra.mxu0 0
    %1545 = vmatprep.subr.bf16.mxu0 0
    %1546 = vmatpush2.bf16.xpose.msra.mxu0 0
    %1547 = vmatprep.subr.bf16.mxu0 0
    %1548 = vmatpush2.bf16.xpose.msra.mxu0 0
    %1549 = vmatprep.subr.bf16.mxu0 0
    %1550 = vmatpush2.bf16.xpose.msra.mxu0 0
    %1551 = vmatprep.subr.bf16.mxu0 0
    %1552 = vmatpush2.bf16.xpose.msra.mxu0 0
    %1553 = vmatprep.subr.bf16.mxu0 0
    %1554 = vmatpush2.bf16.xpose.msra.mxu0 0
    %1555 = vmatprep.mubr.bf16.mxu0 0
    %1556 = vmatmul.mubr.bf16.gmra.mxu0 %v1518
    %v1557 = vpop.f32.mrf.mxu0
    %v1558 = vadd.f32 %v34, %v1557
    %v1559 = vpop.f32.mrf.mxu0
    %v1560 = vpop.f32.mrf.mxu0
    %v1561 = vpop.f32.mrf.mxu0
    %1562 = vdwg.mxu0
    %1564 = vrot.lane.b32.xlu0 %v1507, 96
    %v1565 = vpop.permute.xlu0 %1564
    %v1567 = vsel %vm188, %v1507, 0
    %v1570 = vsel %vm188, %v1565, 0
    %1572 = vmatprep.subr.bf16.mxu0 0
    %1573 = vmatpush1.bf16.xpose.msra.mxu0 0
    %1574 = vmatprep.subr.bf16.mxu0 0
    %1575 = vmatpush1.bf16.xpose.msra.mxu0 0
    %1576 = vmatprep.subr.bf16.mxu0 0
    %1577 = vmatpush1.bf16.xpose.msra.mxu0 0
    %1578 = vmatprep.subr.bf16.mxu0 0
    %1579 = vmatpush1.bf16.xpose.msra.mxu0 0
    %1580 = vmatprep.subr.bf16.mxu0 0
    %1581 = vmatpush1.bf16.xpose.msra.mxu0 0
    %1582 = vmatprep.subr.bf16.mxu0 0
    %1583 = vmatpush1.bf16.xpose.msra.mxu0 0
    %1584 = vmatprep.subr.bf16.mxu0 0
    %1585 = vmatpush1.bf16.xpose.msra.mxu0 0
    %1586 = vmatprep.subr.bf16.mxu0 0
    %1587 = vmatpush1.bf16.xpose.msra.mxu0 %v1570
    %1588 = vmatprep.subr.bf16.mxu0 0
    %1589 = vmatpush2.bf16.xpose.msra.mxu0 0
    %1590 = vmatprep.subr.bf16.mxu0 0
    %1591 = vmatpush2.bf16.xpose.msra.mxu0 0
    %1592 = vmatprep.subr.bf16.mxu0 0
    %1593 = vmatpush2.bf16.xpose.msra.mxu0 0
    %1594 = vmatprep.subr.bf16.mxu0 0
    %1595 = vmatpush2.bf16.xpose.msra.mxu0 0
    %1596 = vmatprep.subr.bf16.mxu0 0
    %1597 = vmatpush2.bf16.xpose.msra.mxu0 0
    %1598 = vmatprep.subr.bf16.mxu0 0
    %1599 = vmatpush2.bf16.xpose.msra.mxu0 0
    %1600 = vmatprep.subr.bf16.mxu0 0
    %1601 = vmatpush2.bf16.xpose.msra.mxu0 0
    %1602 = vmatprep.subr.bf16.mxu0 0
    %1603 = vmatpush2.bf16.xpose.msra.mxu0 0
    %1604 = vmatprep.mubr.bf16.mxu0 0
    %1605 = vmatmul.mubr.bf16.gmra.mxu0 %v1567
    %v1606 = vpop.f32.mrf.mxu0
    %v1607 = vadd.f32 %v35, %v1606
    %v1608 = vpop.f32.mrf.mxu0
    %v1609 = vpop.f32.mrf.mxu0
    %v1610 = vpop.f32.mrf.mxu0
    %1611 = vdwg.mxu0
    %1613 = vrot.lane.b32.xlu0 %v1508, 96
    %v1614 = vpop.permute.xlu0 %1613
    %v1616 = vsel %vm188, %v1508, 0
    %v1619 = vsel %vm188, %v1614, 0
    %1621 = vmatprep.subr.bf16.mxu0 0
    %1622 = vmatpush1.bf16.xpose.msra.mxu0 0
    %1623 = vmatprep.subr.bf16.mxu0 0
    %1624 = vmatpush1.bf16.xpose.msra.mxu0 0
    %1625 = vmatprep.subr.bf16.mxu0 0
    %1626 = vmatpush1.bf16.xpose.msra.mxu0 0
    %1627 = vmatprep.subr.bf16.mxu0 0
    %1628 = vmatpush1.bf16.xpose.msra.mxu0 0
    %1629 = vmatprep.subr.bf16.mxu0 0
    %1630 = vmatpush1.bf16.xpose.msra.mxu0 0
    %1631 = vmatprep.subr.bf16.mxu0 0
    %1632 = vmatpush1.bf16.xpose.msra.mxu0 0
    %1633 = vmatprep.subr.bf16.mxu0 0
    %1634 = vmatpush1.bf16.xpose.msra.mxu0 0
    %1635 = vmatprep.subr.bf16.mxu0 0
    %1636 = vmatpush1.bf16.xpose.msra.mxu0 %v1619
    %1637 = vmatprep.subr.bf16.mxu0 0
    %1638 = vmatpush2.bf16.xpose.msra.mxu0 0
    %1639 = vmatprep.subr.bf16.mxu0 0
    %1640 = vmatpush2.bf16.xpose.msra.mxu0 0
    %1641 = vmatprep.subr.bf16.mxu0 0
    %1642 = vmatpush2.bf16.xpose.msra.mxu0 0
    %1643 = vmatprep.subr.bf16.mxu0 0
    %1644 = vmatpush2.bf16.xpose.msra.mxu0 0
    %1645 = vmatprep.subr.bf16.mxu0 0
    %1646 = vmatpush2.bf16.xpose.msra.mxu0 0
    %1647 = vmatprep.subr.bf16.mxu0 0
    %1648 = vmatpush2.bf16.xpose.msra.mxu0 0
    %1649 = vmatprep.subr.bf16.mxu0 0
    %1650 = vmatpush2.bf16.xpose.msra.mxu0 0
    %1651 = vmatprep.subr.bf16.mxu0 0
    %1652 = vmatpush2.bf16.xpose.msra.mxu0 0
    %1653 = vmatprep.mubr.bf16.mxu0 0
    %1654 = vmatmul.mubr.bf16.gmra.mxu0 %v1616
    %v1655 = vpop.f32.mrf.mxu0
    %v1656 = vadd.f32 %v36, %v1655
    %v1657 = vpop.f32.mrf.mxu0
    %v1658 = vpop.f32.mrf.mxu0
    %v1659 = vpop.f32.mrf.mxu0
    %1660 = vdwg.mxu0
    %1662 = vrot.lane.b32.xlu0 %v1509, 96
    %v1663 = vpop.permute.xlu0 %1662
    %v1665 = vsel %vm188, %v1509, 0
    %v1668 = vsel %vm188, %v1663, 0
    %1670 = vmatprep.subr.bf16.mxu0 0
    %1671 = vmatpush1.bf16.xpose.msra.mxu0 0
    %1672 = vmatprep.subr.bf16.mxu0 0
    %1673 = vmatpush1.bf16.xpose.msra.mxu0 0
    %1674 = vmatprep.subr.bf16.mxu0 0
    %1675 = vmatpush1.bf16.xpose.msra.mxu0 0
    %1676 = vmatprep.subr.bf16.mxu0 0
    %1677 = vmatpush1.bf16.xpose.msra.mxu0 0
    %1678 = vmatprep.subr.bf16.mxu0 0
    %1679 = vmatpush1.bf16.xpose.msra.mxu0 0
    %1680 = vmatprep.subr.bf16.mxu0 0
    %1681 = vmatpush1.bf16.xpose.msra.mxu0 0
    %1682 = vmatprep.subr.bf16.mxu0 0
    %1683 = vmatpush1.bf16.xpose.msra.mxu0 0
    %1684 = vmatprep.subr.bf16.mxu0 0
    %1685 = vmatpush1.bf16.xpose.msra.mxu0 %v1668
    %1686 = vmatprep.subr.bf16.mxu0 0
    %1687 = vmatpush2.bf16.xpose.msra.mxu0 0
    %1688 = vmatprep.subr.bf16.mxu0 0
    %1689 = vmatpush2.bf16.xpose.msra.mxu0 0
    %1690 = vmatprep.subr.bf16.mxu0 0
    %1691 = vmatpush2.bf16.xpose.msra.mxu0 0
    %1692 = vmatprep.subr.bf16.mxu0 0
    %1693 = vmatpush2.bf16.xpose.msra.mxu0 0
    %1694 = vmatprep.subr.bf16.mxu0 0
    %1695 = vmatpush2.bf16.xpose.msra.mxu0 0
    %1696 = vmatprep.subr.bf16.mxu0 0
    %1697 = vmatpush2.bf16.xpose.msra.mxu0 0
    %1698 = vmatprep.subr.bf16.mxu0 0
    %1699 = vmatpush2.bf16.xpose.msra.mxu0 0
    %1700 = vmatprep.subr.bf16.mxu0 0
    %1701 = vmatpush2.bf16.xpose.msra.mxu0 0
    %1702 = vmatprep.mubr.bf16.mxu0 0
    %1703 = vmatmul.mubr.bf16.gmra.mxu0 %v1665
    %v1704 = vpop.f32.mrf.mxu0
    %v1705 = vadd.f32 %v37, %v1704
    %v1706 = vpop.f32.mrf.mxu0
    %v1707 = vpop.f32.mrf.mxu0
    %v1708 = vpop.f32.mrf.mxu0
    %1709 = vdwg.mxu0
    %1711 = vrot.lane.b32.xlu0 %v1510, 96
    %v1712 = vpop.permute.xlu0 %1711
    %v1714 = vsel %vm188, %v1510, 0
    %v1717 = vsel %vm188, %v1712, 0
    %1719 = vmatprep.subr.bf16.mxu0 0
    %1720 = vmatpush1.bf16.xpose.msra.mxu0 0
    %1721 = vmatprep.subr.bf16.mxu0 0
    %1722 = vmatpush1.bf16.xpose.msra.mxu0 0
    %1723 = vmatprep.subr.bf16.mxu0 0
    %1724 = vmatpush1.bf16.xpose.msra.mxu0 0
    %1725 = vmatprep.subr.bf16.mxu0 0
    %1726 = vmatpush1.bf16.xpose.msra.mxu0 0
    %1727 = vmatprep.subr.bf16.mxu0 0
    %1728 = vmatpush1.bf16.xpose.msra.mxu0 0
    %1729 = vmatprep.subr.bf16.mxu0 0
    %1730 = vmatpush1.bf16.xpose.msra.mxu0 0
    %1731 = vmatprep.subr.bf16.mxu0 0
    %1732 = vmatpush1.bf16.xpose.msra.mxu0 0
    %1733 = vmatprep.subr.bf16.mxu0 0
    %1734 = vmatpush1.bf16.xpose.msra.mxu0 %v1717
    %1735 = vmatprep.subr.bf16.mxu0 0
    %1736 = vmatpush2.bf16.xpose.msra.mxu0 0
    %1737 = vmatprep.subr.bf16.mxu0 0
    %1738 = vmatpush2.bf16.xpose.msra.mxu0 0
    %1739 = vmatprep.subr.bf16.mxu0 0
    %1740 = vmatpush2.bf16.xpose.msra.mxu0 0
    %1741 = vmatprep.subr.bf16.mxu0 0
    %1742 = vmatpush2.bf16.xpose.msra.mxu0 0
    %1743 = vmatprep.subr.bf16.mxu0 0
    %1744 = vmatpush2.bf16.xpose.msra.mxu0 0
    %1745 = vmatprep.subr.bf16.mxu0 0
    %1746 = vmatpush2.bf16.xpose.msra.mxu0 0
    %1747 = vmatprep.subr.bf16.mxu0 0
    %1748 = vmatpush2.bf16.xpose.msra.mxu0 0
    %1749 = vmatprep.subr.bf16.mxu0 0
    %1750 = vmatpush2.bf16.xpose.msra.mxu0 0
    %1751 = vmatprep.mubr.bf16.mxu0 0
    %1752 = vmatmul.mubr.bf16.gmra.mxu0 %v1714
    %v1753 = vpop.f32.mrf.mxu0
    %v1754 = vadd.f32 %v38, %v1753
    %v1755 = vpop.f32.mrf.mxu0
    %v1756 = vpop.f32.mrf.mxu0
    %v1757 = vpop.f32.mrf.mxu0
    %1758 = vdwg.mxu0
    %1760 = vrot.lane.b32.xlu0 %v1511, 96
    %v1761 = vpop.permute.xlu0 %1760
    %v1763 = vsel %vm188, %v1511, 0
    %v1766 = vsel %vm188, %v1761, 0
    %1768 = vmatprep.subr.bf16.mxu0 0
    %1769 = vmatpush1.bf16.xpose.msra.mxu0 0
    %1770 = vmatprep.subr.bf16.mxu0 0
    %1771 = vmatpush1.bf16.xpose.msra.mxu0 0
    %1772 = vmatprep.subr.bf16.mxu0 0
    %1773 = vmatpush1.bf16.xpose.msra.mxu0 0
    %1774 = vmatprep.subr.bf16.mxu0 0
    %1775 = vmatpush1.bf16.xpose.msra.mxu0 0
    %1776 = vmatprep.subr.bf16.mxu0 0
    %1777 = vmatpush1.bf16.xpose.msra.mxu0 0
    %1778 = vmatprep.subr.bf16.mxu0 0
    %1779 = vmatpush1.bf16.xpose.msra.mxu0 0
    %1780 = vmatprep.subr.bf16.mxu0 0
    %1781 = vmatpush1.bf16.xpose.msra.mxu0 0
    %1782 = vmatprep.subr.bf16.mxu0 0
    %1783 = vmatpush1.bf16.xpose.msra.mxu0 %v1766
    %1784 = vmatprep.subr.bf16.mxu0 0
    %1785 = vmatpush2.bf16.xpose.msra.mxu0 0
    %1786 = vmatprep.subr.bf16.mxu0 0
    %1787 = vmatpush2.bf16.xpose.msra.mxu0 0
    %1788 = vmatprep.subr.bf16.mxu0 0
    %1789 = vmatpush2.bf16.xpose.msra.mxu0 0
    %1790 = vmatprep.subr.bf16.mxu0 0
    %1791 = vmatpush2.bf16.xpose.msra.mxu0 0
    %1792 = vmatprep.subr.bf16.mxu0 0
    %1793 = vmatpush2.bf16.xpose.msra.mxu0 0
    %1794 = vmatprep.subr.bf16.mxu0 0
    %1795 = vmatpush2.bf16.xpose.msra.mxu0 0
    %1796 = vmatprep.subr.bf16.mxu0 0
    %1797 = vmatpush2.bf16.xpose.msra.mxu0 0
    %1798 = vmatprep.subr.bf16.mxu0 0
    %1799 = vmatpush2.bf16.xpose.msra.mxu0 0
    %1800 = vmatprep.mubr.bf16.mxu0 0
    %1801 = vmatmul.mubr.bf16.gmra.mxu0 %v1763
    %v1802 = vpop.f32.mrf.mxu0
    %v1803 = vadd.f32 %v39, %v1802
    %v1804 = vpop.f32.mrf.mxu0
    %v1805 = vpop.f32.mrf.mxu0
    %v1806 = vpop.f32.mrf.mxu0
    %1807 = vdwg.mxu0
    %1809 = vrot.lane.b32.xlu0 %v1512, 96
    %v1810 = vpop.permute.xlu0 %1809
    %v1812 = vsel %vm188, %v1512, 0
    %v1815 = vsel %vm188, %v1810, 0
    %1817 = vmatprep.subr.bf16.mxu0 0
    %1818 = vmatpush1.bf16.xpose.msra.mxu0 0
    %1819 = vmatprep.subr.bf16.mxu0 0
    %1820 = vmatpush1.bf16.xpose.msra.mxu0 0
    %1821 = vmatprep.subr.bf16.mxu0 0
    %1822 = vmatpush1.bf16.xpose.msra.mxu0 0
    %1823 = vmatprep.subr.bf16.mxu0 0
    %1824 = vmatpush1.bf16.xpose.msra.mxu0 0
    %1825 = vmatprep.subr.bf16.mxu0 0
    %1826 = vmatpush1.bf16.xpose.msra.mxu0 0
    %1827 = vmatprep.subr.bf16.mxu0 0
    %1828 = vmatpush1.bf16.xpose.msra.mxu0 0
    %1829 = vmatprep.subr.bf16.mxu0 0
    %1830 = vmatpush1.bf16.xpose.msra.mxu0 0
    %1831 = vmatprep.subr.bf16.mxu0 0
    %1832 = vmatpush1.bf16.xpose.msra.mxu0 %v1815
    %1833 = vmatprep.subr.bf16.mxu0 0
    %1834 = vmatpush2.bf16.xpose.msra.mxu0 0
    %1835 = vmatprep.subr.bf16.mxu0 0
    %1836 = vmatpush2.bf16.xpose.msra.mxu0 0
    %1837 = vmatprep.subr.bf16.mxu0 0
    %1838 = vmatpush2.bf16.xpose.msra.mxu0 0
    %1839 = vmatprep.subr.bf16.mxu0 0
    %1840 = vmatpush2.bf16.xpose.msra.mxu0 0
    %1841 = vmatprep.subr.bf16.mxu0 0
    %1842 = vmatpush2.bf16.xpose.msra.mxu0 0
    %1843 = vmatprep.subr.bf16.mxu0 0
    %1844 = vmatpush2.bf16.xpose.msra.mxu0 0
    %1845 = vmatprep.subr.bf16.mxu0 0
    %1846 = vmatpush2.bf16.xpose.msra.mxu0 0
    %1847 = vmatprep.subr.bf16.mxu0 0
    %1848 = vmatpush2.bf16.xpose.msra.mxu0 0
    %1849 = vmatprep.mubr.bf16.mxu0 0
    %1850 = vmatmul.mubr.bf16.gmra.mxu0 %v1812
    %v1851 = vpop.f32.mrf.mxu0
    %v1852 = vadd.f32 %v40, %v1851
    %v1853 = vpop.f32.mrf.mxu0
    %v1854 = vpop.f32.mrf.mxu0
    %v1855 = vpop.f32.mrf.mxu0
    %1856 = vdwg.mxu0
    %1858 = vrot.lane.b32.xlu0 %v1513, 96
    %v1859 = vpop.permute.xlu0 %1858
    %v1861 = vsel %vm188, %v1513, 0
    %v1864 = vsel %vm188, %v1859, 0
    %1866 = vmatprep.subr.bf16.mxu0 0
    %1867 = vmatpush1.bf16.xpose.msra.mxu0 0
    %1868 = vmatprep.subr.bf16.mxu0 0
    %1869 = vmatpush1.bf16.xpose.msra.mxu0 0
    %1870 = vmatprep.subr.bf16.mxu0 0
    %1871 = vmatpush1.bf16.xpose.msra.mxu0 0
    %1872 = vmatprep.subr.bf16.mxu0 0
    %1873 = vmatpush1.bf16.xpose.msra.mxu0 0
    %1874 = vmatprep.subr.bf16.mxu0 0
    %1875 = vmatpush1.bf16.xpose.msra.mxu0 0
    %1876 = vmatprep.subr.bf16.mxu0 0
    %1877 = vmatpush1.bf16.xpose.msra.mxu0 0
    %1878 = vmatprep.subr.bf16.mxu0 0
    %1879 = vmatpush1.bf16.xpose.msra.mxu0 0
    %1880 = vmatprep.subr.bf16.mxu0 0
    %1881 = vmatpush1.bf16.xpose.msra.mxu0 %v1864
    %1882 = vmatprep.subr.bf16.mxu0 0
    %1883 = vmatpush2.bf16.xpose.msra.mxu0 0
    %1884 = vmatprep.subr.bf16.mxu0 0
    %1885 = vmatpush2.bf16.xpose.msra.mxu0 0
    %1886 = vmatprep.subr.bf16.mxu0 0
    %1887 = vmatpush2.bf16.xpose.msra.mxu0 0
    %1888 = vmatprep.subr.bf16.mxu0 0
    %1889 = vmatpush2.bf16.xpose.msra.mxu0 0
    %1890 = vmatprep.subr.bf16.mxu0 0
    %1891 = vmatpush2.bf16.xpose.msra.mxu0 0
    %1892 = vmatprep.subr.bf16.mxu0 0
    %1893 = vmatpush2.bf16.xpose.msra.mxu0 0
    %1894 = vmatprep.subr.bf16.mxu0 0
    %1895 = vmatpush2.bf16.xpose.msra.mxu0 0
    %1896 = vmatprep.subr.bf16.mxu0 0
    %1897 = vmatpush2.bf16.xpose.msra.mxu0 0
    %1898 = vmatprep.mubr.bf16.mxu0 0
    %1899 = vmatmul.mubr.bf16.gmra.mxu0 %v1861
    %v1900 = vpop.f32.mrf.mxu0
    %v1901 = vadd.f32 %v41, %v1900
    %v1902 = vpop.f32.mrf.mxu0
    %v1903 = vpop.f32.mrf.mxu0
    %v1904 = vpop.f32.mrf.mxu0
    %1905 = vdwg.mxu0
    %v1906 = vsel %vm188, %v1558, -inf
    %1907 = vmax.xlane.f32.xlu0 %v1906
    %v1908 = vpop.xlane.xlu0 %1907
    %v1909 = vsel %vm188, %v1607, -inf
    %1910 = vmax.xlane.f32.xlu0 %v1909
    %v1911 = vpop.xlane.xlu0 %1910
    %v1912 = vsel %vm188, %v1656, -inf
    %1913 = vmax.xlane.f32.xlu0 %v1912
    %v1914 = vpop.xlane.xlu0 %1913
    %v1915 = vsel %vm188, %v1705, -inf
    %1916 = vmax.xlane.f32.xlu0 %v1915
    %v1917 = vpop.xlane.xlu0 %1916
    %v1918 = vsel %vm188, %v1754, -inf
    %1919 = vmax.xlane.f32.xlu0 %v1918
    %v1920 = vpop.xlane.xlu0 %1919
    %v1921 = vsel %vm188, %v1803, -inf
    %1922 = vmax.xlane.f32.xlu0 %v1921
    %v1923 = vpop.xlane.xlu0 %1922
    %v1924 = vsel %vm188, %v1852, -inf
    %1925 = vmax.xlane.f32.xlu0 %v1924
    %v1926 = vpop.xlane.xlu0 %1925
    %v1927 = vsel %vm188, %v1901, -inf
    %1928 = vmax.xlane.f32.xlu0 %v1927
    %v1929 = vpop.xlane.xlu0 %1928
    %v1930 = vsub.f32 %v1558, %v1908
    %v1931 = vsub.f32 %v1607, %v1911
    %v1932 = vsub.f32 %v1656, %v1914
    %v1933 = vsub.f32 %v1705, %v1917
    %v1934 = vsub.f32 %v1754, %v1920
    %v1935 = vsub.f32 %v1803, %v1923
    %v1936 = vsub.f32 %v1852, %v1926
    %v1937 = vsub.f32 %v1901, %v1929
    %v1938 = vmul.f32 %v1930, 1.442695
    %v1939 = vpow.pop %v1938
    %v1940 = vmul.f32 %v1931, 1.442695
    %v1941 = vpow.pop %v1940
    %v1942 = vmul.f32 %v1932, 1.442695
    %v1943 = vpow.pop %v1942
    %v1944 = vmul.f32 %v1933, 1.442695
    %v1945 = vpow.pop %v1944
    %v1946 = vmul.f32 %v1934, 1.442695
    %v1947 = vpow.pop %v1946
    %v1948 = vmul.f32 %v1935, 1.442695
    %v1949 = vpow.pop %v1948
    %v1950 = vmul.f32 %v1936, 1.442695
    %v1951 = vpow.pop %v1950
    %v1952 = vmul.f32 %v1937, 1.442695
    %v1953 = vpow.pop %v1952
    %v1954 = vsel %vm188, %v1939, 0.0
    %1955 = vadd.xlane.f32.xlu0 %v1954
    %v1956 = vpop.xlane.xlu0 %1955
    %v1957 = vsel %vm188, %v1941, 0.0
    %1958 = vadd.xlane.f32.xlu0 %v1957
    %v1959 = vpop.xlane.xlu0 %1958
    %v1960 = vsel %vm188, %v1943, 0.0
    %1961 = vadd.xlane.f32.xlu0 %v1960
    %v1962 = vpop.xlane.xlu0 %1961
    %v1963 = vsel %vm188, %v1945, 0.0
    %1964 = vadd.xlane.f32.xlu0 %v1963
    %v1965 = vpop.xlane.xlu0 %1964
    %v1966 = vsel %vm188, %v1947, 0.0
    %1967 = vadd.xlane.f32.xlu0 %v1966
    %v1968 = vpop.xlane.xlu0 %1967
    %v1969 = vsel %vm188, %v1949, 0.0
    %1970 = vadd.xlane.f32.xlu0 %v1969
    %v1971 = vpop.xlane.xlu0 %1970
    %v1972 = vsel %vm188, %v1951, 0.0
    %1973 = vadd.xlane.f32.xlu0 %v1972
    %v1974 = vpop.xlane.xlu0 %1973
    %v1975 = vsel %vm188, %v1953, 0.0
    %1976 = vadd.xlane.f32.xlu0 %v1975
    %v1977 = vpop.xlane.xlu0 %1976
    %v1978 = vrcp.pop %v1956
    %v1979 = vrcp.pop %v1959
    %v1980 = vrcp.pop %v1962
    %v1981 = vrcp.pop %v1965
    %v1982 = vrcp.pop %v1968
    %v1983 = vrcp.pop %v1971
    %v1984 = vrcp.pop %v1974
    %v1985 = vrcp.pop %v1977
    %v1986 = vmul.f32 %v1939, %v1978
    %v1987 = vmul.f32 %v1941, %v1979
    %v1988 = vmul.f32 %v1943, %v1980
    %v1989 = vmul.f32 %v1945, %v1981
    %v1990 = vmul.f32 %v1947, %v1982
    %v1991 = vmul.f32 %v1949, %v1983
    %v1992 = vmul.f32 %v1951, %v1984
    %v1993 = vmul.f32 %v1953, %v1985
    %v1994 = vpack.c.bf16 %v1986, %v1986
    %v1995 = vpack.c.bf16 %v1987, %v1987
    %v1996 = vpack.c.bf16 %v1988, %v1988
    %v1997 = vpack.c.bf16 %v1989, %v1989
    %v1998 = vpack.c.bf16 %v1990, %v1990
    %v1999 = vpack.c.bf16 %v1991, %v1991
    %v2000 = vpack.c.bf16 %v1992, %v1992
    %v2001 = vpack.c.bf16 %v1993, %v1993
    %2002 = vrot.lane.b32.xlu0 %v1506, 64
    %v2003 = vpop.permute.xlu0 %2002
    %v2005 = vsel %vm188, %v1994, 0
    %v2008 = vsel %vm679, %v2003, 0
    %2010 = vmatprep.subr.bf16.mxu0 0
    %2011 = vmatpush1.bf16.msra.mxu0 0
    %2012 = vmatprep.subr.bf16.mxu0 0
    %2013 = vmatpush1.bf16.msra.mxu0 0
    %2014 = vmatprep.subr.bf16.mxu0 0
    %2015 = vmatpush1.bf16.msra.mxu0 0
    %2016 = vmatprep.subr.bf16.mxu0 0
    %2017 = vmatpush1.bf16.msra.mxu0 0
    %2018 = vmatprep.subr.bf16.mxu0 0
    %2019 = vmatpush1.bf16.msra.mxu0 0
    %2020 = vmatprep.subr.bf16.mxu0 0
    %2021 = vmatpush1.bf16.msra.mxu0 0
    %2022 = vmatprep.subr.bf16.mxu0 0
    %2023 = vmatpush1.bf16.msra.mxu0 0
    %2024 = vmatprep.subr.bf16.mxu0 0
    %2025 = vmatpush1.bf16.msra.mxu0 %v2008
    %2026 = vmatprep.subr.bf16.mxu0 0
    %2027 = vmatpush2.bf16.msra.mxu0 0
    %2028 = vmatprep.subr.bf16.mxu0 0
    %2029 = vmatpush2.bf16.msra.mxu0 0
    %2030 = vmatprep.subr.bf16.mxu0 0
    %2031 = vmatpush2.bf16.msra.mxu0 0
    %2032 = vmatprep.subr.bf16.mxu0 0
    %2033 = vmatpush2.bf16.msra.mxu0 0
    %2034 = vmatprep.subr.bf16.mxu0 0
    %2035 = vmatpush2.bf16.msra.mxu0 0
    %2036 = vmatprep.subr.bf16.mxu0 0
    %2037 = vmatpush2.bf16.msra.mxu0 0
    %2038 = vmatprep.subr.bf16.mxu0 0
    %2039 = vmatpush2.bf16.msra.mxu0 0
    %2040 = vmatprep.subr.bf16.mxu0 0
    %2041 = vmatpush2.bf16.msra.mxu0 0
    %2042 = vmatprep.mubr.bf16.mxu0 0
    %2043 = vmatmul.mubr.bf16.gmra.mxu0 %v2005
    %v2044 = vpop.f32.mrf.mxu0
    %v2045 = vadd.f32 0.0, %v2044
    %v2046 = vpop.f32.mrf.mxu0
    %v2047 = vpop.f32.mrf.mxu0
    %v2048 = vpop.f32.mrf.mxu0
    %2049 = vdwg.mxu0
    %2050 = vrot.lane.b32.xlu0 %v1507, 64
    %v2051 = vpop.permute.xlu0 %2050
    %v2053 = vsel %vm188, %v1995, 0
    %v2056 = vsel %vm679, %v2051, 0
    %2058 = vmatprep.subr.bf16.mxu0 0
    %2059 = vmatpush1.bf16.msra.mxu0 0
    %2060 = vmatprep.subr.bf16.mxu0 0
    %2061 = vmatpush1.bf16.msra.mxu0 0
    %2062 = vmatprep.subr.bf16.mxu0 0
    %2063 = vmatpush1.bf16.msra.mxu0 0
    %2064 = vmatprep.subr.bf16.mxu0 0
    %2065 = vmatpush1.bf16.msra.mxu0 0
    %2066 = vmatprep.subr.bf16.mxu0 0
    %2067 = vmatpush1.bf16.msra.mxu0 0
    %2068 = vmatprep.subr.bf16.mxu0 0
    %2069 = vmatpush1.bf16.msra.mxu0 0
    %2070 = vmatprep.subr.bf16.mxu0 0
    %2071 = vmatpush1.bf16.msra.mxu0 0
    %2072 = vmatprep.subr.bf16.mxu0 0
    %2073 = vmatpush1.bf16.msra.mxu0 %v2056
    %2074 = vmatprep.subr.bf16.mxu0 0
    %2075 = vmatpush2.bf16.msra.mxu0 0
    %2076 = vmatprep.subr.bf16.mxu0 0
    %2077 = vmatpush2.bf16.msra.mxu0 0
    %2078 = vmatprep.subr.bf16.mxu0 0
    %2079 = vmatpush2.bf16.msra.mxu0 0
    %2080 = vmatprep.subr.bf16.mxu0 0
    %2081 = vmatpush2.bf16.msra.mxu0 0
    %2082 = vmatprep.subr.bf16.mxu0 0
    %2083 = vmatpush2.bf16.msra.mxu0 0
    %2084 = vmatprep.subr.bf16.mxu0 0
    %2085 = vmatpush2.bf16.msra.mxu0 0
    %2086 = vmatprep.subr.bf16.mxu0 0
    %2087 = vmatpush2.bf16.msra.mxu0 0
    %2088 = vmatprep.subr.bf16.mxu0 0
    %2089 = vmatpush2.bf16.msra.mxu0 0
    %2090 = vmatprep.mubr.bf16.mxu0 0
    %2091 = vmatmul.mubr.bf16.gmra.mxu0 %v2053
    %v2092 = vpop.f32.mrf.mxu0
    %v2093 = vadd.f32 0.0, %v2092
    %v2094 = vpop.f32.mrf.mxu0
    %v2095 = vpop.f32.mrf.mxu0
    %v2096 = vpop.f32.mrf.mxu0
    %2097 = vdwg.mxu0
    %2098 = vrot.lane.b32.xlu0 %v1508, 64
    %v2099 = vpop.permute.xlu0 %2098
    %v2101 = vsel %vm188, %v1996, 0
    %v2104 = vsel %vm679, %v2099, 0
    %2106 = vmatprep.subr.bf16.mxu0 0
    %2107 = vmatpush1.bf16.msra.mxu0 0
    %2108 = vmatprep.subr.bf16.mxu0 0
    %2109 = vmatpush1.bf16.msra.mxu0 0
    %2110 = vmatprep.subr.bf16.mxu0 0
    %2111 = vmatpush1.bf16.msra.mxu0 0
    %2112 = vmatprep.subr.bf16.mxu0 0
    %2113 = vmatpush1.bf16.msra.mxu0 0
    %2114 = vmatprep.subr.bf16.mxu0 0
    %2115 = vmatpush1.bf16.msra.mxu0 0
    %2116 = vmatprep.subr.bf16.mxu0 0
    %2117 = vmatpush1.bf16.msra.mxu0 0
    %2118 = vmatprep.subr.bf16.mxu0 0
    %2119 = vmatpush1.bf16.msra.mxu0 0
    %2120 = vmatprep.subr.bf16.mxu0 0
    %2121 = vmatpush1.bf16.msra.mxu0 %v2104
    %2122 = vmatprep.subr.bf16.mxu0 0
    %2123 = vmatpush2.bf16.msra.mxu0 0
    %2124 = vmatprep.subr.bf16.mxu0 0
    %2125 = vmatpush2.bf16.msra.mxu0 0
    %2126 = vmatprep.subr.bf16.mxu0 0
    %2127 = vmatpush2.bf16.msra.mxu0 0
    %2128 = vmatprep.subr.bf16.mxu0 0
    %2129 = vmatpush2.bf16.msra.mxu0 0
    %2130 = vmatprep.subr.bf16.mxu0 0
    %2131 = vmatpush2.bf16.msra.mxu0 0
    %2132 = vmatprep.subr.bf16.mxu0 0
    %2133 = vmatpush2.bf16.msra.mxu0 0
    %2134 = vmatprep.subr.bf16.mxu0 0
    %2135 = vmatpush2.bf16.msra.mxu0 0
    %2136 = vmatprep.subr.bf16.mxu0 0
    %2137 = vmatpush2.bf16.msra.mxu0 0
    %2138 = vmatprep.mubr.bf16.mxu0 0
    %2139 = vmatmul.mubr.bf16.gmra.mxu0 %v2101
    %v2140 = vpop.f32.mrf.mxu0
    %v2141 = vadd.f32 0.0, %v2140
    %v2142 = vpop.f32.mrf.mxu0
    %v2143 = vpop.f32.mrf.mxu0
    %v2144 = vpop.f32.mrf.mxu0
    %2145 = vdwg.mxu0
    %2146 = vrot.lane.b32.xlu0 %v1509, 64
    %v2147 = vpop.permute.xlu0 %2146
    %v2149 = vsel %vm188, %v1997, 0
    %v2152 = vsel %vm679, %v2147, 0
    %2154 = vmatprep.subr.bf16.mxu0 0
    %2155 = vmatpush1.bf16.msra.mxu0 0
    %2156 = vmatprep.subr.bf16.mxu0 0
    %2157 = vmatpush1.bf16.msra.mxu0 0
    %2158 = vmatprep.subr.bf16.mxu0 0
    %2159 = vmatpush1.bf16.msra.mxu0 0
    %2160 = vmatprep.subr.bf16.mxu0 0
    %2161 = vmatpush1.bf16.msra.mxu0 0
    %2162 = vmatprep.subr.bf16.mxu0 0
    %2163 = vmatpush1.bf16.msra.mxu0 0
    %2164 = vmatprep.subr.bf16.mxu0 0
    %2165 = vmatpush1.bf16.msra.mxu0 0
    %2166 = vmatprep.subr.bf16.mxu0 0
    %2167 = vmatpush1.bf16.msra.mxu0 0
    %2168 = vmatprep.subr.bf16.mxu0 0
    %2169 = vmatpush1.bf16.msra.mxu0 %v2152
    %2170 = vmatprep.subr.bf16.mxu0 0
    %2171 = vmatpush2.bf16.msra.mxu0 0
    %2172 = vmatprep.subr.bf16.mxu0 0
    %2173 = vmatpush2.bf16.msra.mxu0 0
    %2174 = vmatprep.subr.bf16.mxu0 0
    %2175 = vmatpush2.bf16.msra.mxu0 0
    %2176 = vmatprep.subr.bf16.mxu0 0
    %2177 = vmatpush2.bf16.msra.mxu0 0
    %2178 = vmatprep.subr.bf16.mxu0 0
    %2179 = vmatpush2.bf16.msra.mxu0 0
    %2180 = vmatprep.subr.bf16.mxu0 0
    %2181 = vmatpush2.bf16.msra.mxu0 0
    %2182 = vmatprep.subr.bf16.mxu0 0
    %2183 = vmatpush2.bf16.msra.mxu0 0
    %2184 = vmatprep.subr.bf16.mxu0 0
    %2185 = vmatpush2.bf16.msra.mxu0 0
    %2186 = vmatprep.mubr.bf16.mxu0 0
    %2187 = vmatmul.mubr.bf16.gmra.mxu0 %v2149
    %v2188 = vpop.f32.mrf.mxu0
    %v2189 = vadd.f32 0.0, %v2188
    %v2190 = vpop.f32.mrf.mxu0
    %v2191 = vpop.f32.mrf.mxu0
    %v2192 = vpop.f32.mrf.mxu0
    %2193 = vdwg.mxu0
    %2194 = vrot.lane.b32.xlu0 %v1510, 64
    %v2195 = vpop.permute.xlu0 %2194
    %v2197 = vsel %vm188, %v1998, 0
    %v2200 = vsel %vm679, %v2195, 0
    %2202 = vmatprep.subr.bf16.mxu0 0
    %2203 = vmatpush1.bf16.msra.mxu0 0
    %2204 = vmatprep.subr.bf16.mxu0 0
    %2205 = vmatpush1.bf16.msra.mxu0 0
    %2206 = vmatprep.subr.bf16.mxu0 0
    %2207 = vmatpush1.bf16.msra.mxu0 0
    %2208 = vmatprep.subr.bf16.mxu0 0
    %2209 = vmatpush1.bf16.msra.mxu0 0
    %2210 = vmatprep.subr.bf16.mxu0 0
    %2211 = vmatpush1.bf16.msra.mxu0 0
    %2212 = vmatprep.subr.bf16.mxu0 0
    %2213 = vmatpush1.bf16.msra.mxu0 0
    %2214 = vmatprep.subr.bf16.mxu0 0
    %2215 = vmatpush1.bf16.msra.mxu0 0
    %2216 = vmatprep.subr.bf16.mxu0 0
    %2217 = vmatpush1.bf16.msra.mxu0 %v2200
    %2218 = vmatprep.subr.bf16.mxu0 0
    %2219 = vmatpush2.bf16.msra.mxu0 0
    %2220 = vmatprep.subr.bf16.mxu0 0
    %2221 = vmatpush2.bf16.msra.mxu0 0
    %2222 = vmatprep.subr.bf16.mxu0 0
    %2223 = vmatpush2.bf16.msra.mxu0 0
    %2224 = vmatprep.subr.bf16.mxu0 0
    %2225 = vmatpush2.bf16.msra.mxu0 0
    %2226 = vmatprep.subr.bf16.mxu0 0
    %2227 = vmatpush2.bf16.msra.mxu0 0
    %2228 = vmatprep.subr.bf16.mxu0 0
    %2229 = vmatpush2.bf16.msra.mxu0 0
    %2230 = vmatprep.subr.bf16.mxu0 0
    %2231 = vmatpush2.bf16.msra.mxu0 0
    %2232 = vmatprep.subr.bf16.mxu0 0
    %2233 = vmatpush2.bf16.msra.mxu0 0
    %2234 = vmatprep.mubr.bf16.mxu0 0
    %2235 = vmatmul.mubr.bf16.gmra.mxu0 %v2197
    %v2236 = vpop.f32.mrf.mxu0
    %v2237 = vadd.f32 0.0, %v2236
    %v2238 = vpop.f32.mrf.mxu0
    %v2239 = vpop.f32.mrf.mxu0
    %v2240 = vpop.f32.mrf.mxu0
    %2241 = vdwg.mxu0
    %2242 = vrot.lane.b32.xlu0 %v1511, 64
    %v2243 = vpop.permute.xlu0 %2242
    %v2245 = vsel %vm188, %v1999, 0
    %v2248 = vsel %vm679, %v2243, 0
    %2250 = vmatprep.subr.bf16.mxu0 0
    %2251 = vmatpush1.bf16.msra.mxu0 0
    %2252 = vmatprep.subr.bf16.mxu0 0
    %2253 = vmatpush1.bf16.msra.mxu0 0
    %2254 = vmatprep.subr.bf16.mxu0 0
    %2255 = vmatpush1.bf16.msra.mxu0 0
    %2256 = vmatprep.subr.bf16.mxu0 0
    %2257 = vmatpush1.bf16.msra.mxu0 0
    %2258 = vmatprep.subr.bf16.mxu0 0
    %2259 = vmatpush1.bf16.msra.mxu0 0
    %2260 = vmatprep.subr.bf16.mxu0 0
    %2261 = vmatpush1.bf16.msra.mxu0 0
    %2262 = vmatprep.subr.bf16.mxu0 0
    %2263 = vmatpush1.bf16.msra.mxu0 0
    %2264 = vmatprep.subr.bf16.mxu0 0
    %2265 = vmatpush1.bf16.msra.mxu0 %v2248
    %2266 = vmatprep.subr.bf16.mxu0 0
    %2267 = vmatpush2.bf16.msra.mxu0 0
    %2268 = vmatprep.subr.bf16.mxu0 0
    %2269 = vmatpush2.bf16.msra.mxu0 0
    %2270 = vmatprep.subr.bf16.mxu0 0
    %2271 = vmatpush2.bf16.msra.mxu0 0
    %2272 = vmatprep.subr.bf16.mxu0 0
    %2273 = vmatpush2.bf16.msra.mxu0 0
    %2274 = vmatprep.subr.bf16.mxu0 0
    %2275 = vmatpush2.bf16.msra.mxu0 0
    %2276 = vmatprep.subr.bf16.mxu0 0
    %2277 = vmatpush2.bf16.msra.mxu0 0
    %2278 = vmatprep.subr.bf16.mxu0 0
    %2279 = vmatpush2.bf16.msra.mxu0 0
    %2280 = vmatprep.subr.bf16.mxu0 0
    %2281 = vmatpush2.bf16.msra.mxu0 0
    %2282 = vmatprep.mubr.bf16.mxu0 0
    %2283 = vmatmul.mubr.bf16.gmra.mxu0 %v2245
    %v2284 = vpop.f32.mrf.mxu0
    %v2285 = vadd.f32 0.0, %v2284
    %v2286 = vpop.f32.mrf.mxu0
    %v2287 = vpop.f32.mrf.mxu0
    %v2288 = vpop.f32.mrf.mxu0
    %2289 = vdwg.mxu0
    %2290 = vrot.lane.b32.xlu0 %v1512, 64
    %v2291 = vpop.permute.xlu0 %2290
    %v2293 = vsel %vm188, %v2000, 0
    %v2296 = vsel %vm679, %v2291, 0
    %2298 = vmatprep.subr.bf16.mxu0 0
    %2299 = vmatpush1.bf16.msra.mxu0 0
    %2300 = vmatprep.subr.bf16.mxu0 0
    %2301 = vmatpush1.bf16.msra.mxu0 0
    %2302 = vmatprep.subr.bf16.mxu0 0
    %2303 = vmatpush1.bf16.msra.mxu0 0
    %2304 = vmatprep.subr.bf16.mxu0 0
    %2305 = vmatpush1.bf16.msra.mxu0 0
    %2306 = vmatprep.subr.bf16.mxu0 0
    %2307 = vmatpush1.bf16.msra.mxu0 0
    %2308 = vmatprep.subr.bf16.mxu0 0
    %2309 = vmatpush1.bf16.msra.mxu0 0
    %2310 = vmatprep.subr.bf16.mxu0 0
    %2311 = vmatpush1.bf16.msra.mxu0 0
    %2312 = vmatprep.subr.bf16.mxu0 0
    %2313 = vmatpush1.bf16.msra.mxu0 %v2296
    %2314 = vmatprep.subr.bf16.mxu0 0
    %2315 = vmatpush2.bf16.msra.mxu0 0
    %2316 = vmatprep.subr.bf16.mxu0 0
    %2317 = vmatpush2.bf16.msra.mxu0 0
    %2318 = vmatprep.subr.bf16.mxu0 0
    %2319 = vmatpush2.bf16.msra.mxu0 0
    %2320 = vmatprep.subr.bf16.mxu0 0
    %2321 = vmatpush2.bf16.msra.mxu0 0
    %2322 = vmatprep.subr.bf16.mxu0 0
    %2323 = vmatpush2.bf16.msra.mxu0 0
    %2324 = vmatprep.subr.bf16.mxu0 0
    %2325 = vmatpush2.bf16.msra.mxu0 0
    %2326 = vmatprep.subr.bf16.mxu0 0
    %2327 = vmatpush2.bf16.msra.mxu0 0
    %2328 = vmatprep.subr.bf16.mxu0 0
    %2329 = vmatpush2.bf16.msra.mxu0 0
    %2330 = vmatprep.mubr.bf16.mxu0 0
    %2331 = vmatmul.mubr.bf16.gmra.mxu0 %v2293
    %v2332 = vpop.f32.mrf.mxu0
    %v2333 = vadd.f32 0.0, %v2332
    %v2334 = vpop.f32.mrf.mxu0
    %v2335 = vpop.f32.mrf.mxu0
    %v2336 = vpop.f32.mrf.mxu0
    %2337 = vdwg.mxu0
    %2338 = vrot.lane.b32.xlu0 %v1513, 64
    %v2339 = vpop.permute.xlu0 %2338
    %v2341 = vsel %vm188, %v2001, 0
    %v2344 = vsel %vm679, %v2339, 0
    %2346 = vmatprep.subr.bf16.mxu0 0
    %2347 = vmatpush1.bf16.msra.mxu0 0
    %2348 = vmatprep.subr.bf16.mxu0 0
    %2349 = vmatpush1.bf16.msra.mxu0 0
    %2350 = vmatprep.subr.bf16.mxu0 0
    %2351 = vmatpush1.bf16.msra.mxu0 0
    %2352 = vmatprep.subr.bf16.mxu0 0
    %2353 = vmatpush1.bf16.msra.mxu0 0
    %2354 = vmatprep.subr.bf16.mxu0 0
    %2355 = vmatpush1.bf16.msra.mxu0 0
    %2356 = vmatprep.subr.bf16.mxu0 0
    %2357 = vmatpush1.bf16.msra.mxu0 0
    %2358 = vmatprep.subr.bf16.mxu0 0
    %2359 = vmatpush1.bf16.msra.mxu0 0
    %2360 = vmatprep.subr.bf16.mxu0 0
    %2361 = vmatpush1.bf16.msra.mxu0 %v2344
    %2362 = vmatprep.subr.bf16.mxu0 0
    %2363 = vmatpush2.bf16.msra.mxu0 0
    %2364 = vmatprep.subr.bf16.mxu0 0
    %2365 = vmatpush2.bf16.msra.mxu0 0
    %2366 = vmatprep.subr.bf16.mxu0 0
    %2367 = vmatpush2.bf16.msra.mxu0 0
    %2368 = vmatprep.subr.bf16.mxu0 0
    %2369 = vmatpush2.bf16.msra.mxu0 0
    %2370 = vmatprep.subr.bf16.mxu0 0
    %2371 = vmatpush2.bf16.msra.mxu0 0
    %2372 = vmatprep.subr.bf16.mxu0 0
    %2373 = vmatpush2.bf16.msra.mxu0 0
    %2374 = vmatprep.subr.bf16.mxu0 0
    %2375 = vmatpush2.bf16.msra.mxu0 0
    %2376 = vmatprep.subr.bf16.mxu0 0
    %2377 = vmatpush2.bf16.msra.mxu0 0
    %2378 = vmatprep.mubr.bf16.mxu0 0
    %2379 = vmatmul.mubr.bf16.gmra.mxu0 %v2341
    %v2380 = vpop.f32.mrf.mxu0
    %v2381 = vadd.f32 0.0, %v2380
    %v2382 = vpop.f32.mrf.mxu0
    %v2383 = vpop.f32.mrf.mxu0
    %v2384 = vpop.f32.mrf.mxu0
    %2385 = vdwg.mxu0
    %2388 = vrot.lane.b32.xlu0 %v2141, 8
    %v2389 = vpop.permute.xlu0 %2388
    %2390 = vrot.lane.b32.xlu0 %v2189, 8
    %v2391 = vpop.permute.xlu0 %2390
    %2396 = vrot.lane.b32.xlu0 %v2237, 16
    %v2397 = vpop.permute.xlu0 %2396
    %2398 = vrot.lane.b32.xlu0 %v2285, 16
    %v2399 = vpop.permute.xlu0 %2398
    %2404 = vrot.lane.b32.xlu0 %v2333, 24
    %v2405 = vpop.permute.xlu0 %2404
    %2406 = vrot.lane.b32.xlu0 %v2381, 24
    %v2407 = vpop.permute.xlu0 %2406
    %v2410 = vsel %vm188, %v2045, %v2389
    %v2411 = vsel %vm188, %v2093, %v2391
    %v2412 = vsel %vm1085, %v2410, %v2397
    %v2413 = vsel %vm1085, %v2411, %v2399
    %v2414 = vsel %vm1088, %v2412, %v2405
    %v2415 = vsel %vm1088, %v2413, %v2407
    %v2416 = vpack.c.bf16 %v2415, %v2414
    %s2417 = scalar_lea.vmem %s5, 16
    %v2418 = vld [vmem:[%s2417] sm:$0xf]
    %v2419 = vld [vmem:[%s2417 + $0x4] sm:$0xf]
    %v2420 = vld [vmem:[%s2417 + $0x8] sm:$0xf]
    %v2421 = vld [vmem:[%s2417 + $0xc] sm:$0xf]
    %v2422 = vld [vmem:[%s1422] sm:$0x1]
    %v2424 = vlaneseq
    %v2425 = vshrl.u32 %v2424, 7
    %v2426 = vsub.s32 0, %v2425
    %v2427 = vrot.slane %v2422, %v2426
    %v2432 = vunpack.c.l.b16 %v2418
    %v2433 = vunpack.c.l.b16 %v2419
    %v2434 = vunpack.c.l.b16 %v2420
    %v2435 = vunpack.c.l.b16 %v2421
    %v2436 = vpack.c.b16 %v2433, %v2432
    %v2437 = vpack.c.b16 %v2435, %v2434
    %2440 = vrot.lane.b32.xlu0 %v2427, 32
    %v2441 = vpop.permute.xlu0 %2440
    %v2444 = vsel %vm45, %v2416, 0
    %2446 = vmatprep.subr.bf16.mxu0 0
    %2447 = vmatpush1.bf16.msra.mxu0 0
    %2448 = vmatprep.subr.bf16.mxu0 0
    %2449 = vmatpush1.bf16.msra.mxu0 0
    %2450 = vmatprep.subr.bf16.mxu0 0
    %2451 = vmatpush1.bf16.msra.mxu0 0
    %2452 = vmatprep.subr.bf16.mxu0 0
    %2453 = vmatpush1.bf16.msra.mxu0 0
    %2454 = vmatprep.subr.bf16.mxu0 0
    %2455 = vmatpush1.bf16.msra.mxu0 0
    %2456 = vmatprep.subr.bf16.mxu0 0
    %2457 = vmatpush1.bf16.msra.mxu0 0
    %2458 = vmatprep.subr.bf16.mxu0 0
    %2459 = vmatpush1.bf16.msra.mxu0 %v2437
    %2460 = vmatprep.subr.bf16.mxu0 0
    %2461 = vmatpush1.bf16.msra.mxu0 %v2436
    %2462 = vmatprep.subr.bf16.mxu0 0
    %2463 = vmatpush2.bf16.msra.mxu0 0
    %2464 = vmatprep.subr.bf16.mxu0 0
    %2465 = vmatpush2.bf16.msra.mxu0 0
    %2466 = vmatprep.subr.bf16.mxu0 0
    %2467 = vmatpush2.bf16.msra.mxu0 0
    %2468 = vmatprep.subr.bf16.mxu0 0
    %2469 = vmatpush2.bf16.msra.mxu0 0
    %2470 = vmatprep.subr.bf16.mxu0 0
    %2471 = vmatpush2.bf16.msra.mxu0 0
    %2472 = vmatprep.subr.bf16.mxu0 0
    %2473 = vmatpush2.bf16.msra.mxu0 0
    %2474 = vmatprep.subr.bf16.mxu0 0
    %2475 = vmatpush2.bf16.msra.mxu0 0
    %2476 = vmatprep.subr.bf16.mxu0 0
    %2477 = vmatpush2.bf16.msra.mxu0 0
    %2478 = vmatprep.mubr.bf16.mxu0 0
    %2479 = vmatmul.mubr.bf16.gmra.mxu0 %v2444
    %v2480 = vpop.f32.mrf.mxu0
    %v2481 = vadd.f32 %v2441, %v2480
    %v2482 = vpop.f32.mrf.mxu0
    %v2483 = vpop.f32.mrf.mxu0
    %v2484 = vadd.f32 %v2441, %v2483
    %v2485 = vpop.f32.mrf.mxu0
    %2486 = vdwg.mxu0
    %v2487 = vadd.f32 %v1414, %v2481
    %v2488 = vadd.f32 %v1415, %v2484
    %v2489 = vld [vmem:[%s1422 + $0x1] sm:$0x1]
    %v2490 = vsel %vm45, %v2487, 0.0
    %2491 = vadd.xlane.f32.xlu0 %v2490
    %v2492 = vpop.xlane.xlu0 %2491
    %v2493 = vsel %vm45, %v2488, 0.0
    %2494 = vadd.xlane.f32.xlu0 %v2493
    %v2495 = vpop.xlane.xlu0 %2494
    %v2496 = vmul.f32 %v2487, %v2487
    %v2497 = vmul.f32 %v2488, %v2488
    %v2498 = vsel %vm45, %v2496, 0.0
    %2499 = vadd.xlane.f32.xlu0 %v2498
    %v2500 = vpop.xlane.xlu0 %2499
    %v2501 = vsel %vm45, %v2497, 0.0
    %2502 = vadd.xlane.f32.xlu0 %v2501
    %v2503 = vpop.xlane.xlu0 %2502
    %v2504 = vmul.f32 %v2492, 0.03125
    %v2505 = vmul.f32 %v2495, 0.03125
    %v2506 = vmul.f32 %v2500, 0.03125
    %v2507 = vmul.f32 %v2503, 0.03125
    %v2508 = vmul.f32 %v2504, %v2504
    %v2509 = vmul.f32 %v2505, %v2505
    %v2510 = vsub.f32 %v2506, %v2508
    %v2511 = vsub.f32 %v2507, %v2509
    %v2512 = vsub.f32 %v2487, %v2504
    %v2513 = vsub.f32 %v2488, %v2505
    %v2514 = vadd.f32 %v2510, 1e-12
    %v2515 = vadd.f32 %v2511, 1e-12
    %v2516 = vrsqrt.pop %v2514
    %v2517 = vrsqrt.pop %v2515
    %v2518 = vmul.f32 %v2512, %v2516
    %v2519 = vmul.f32 %v2513, %v2517
    %v2521 = vlaneseq
    %v2522 = vshrl.u32 %v2521, 7
    %v2523 = vsub.s32 0, %v2522
    %v2524 = vrot.slane %v2489, %v2523
    %v2526 = vmul.f32 %v2518, %v2524
    %v2527 = vmul.f32 %v2519, %v2524
    %2528 = vrot.lane.b32.xlu0 %v2524, 96
    %v2529 = vpop.permute.xlu0 %2528
    %v2531 = vadd.f32 %v2526, %v2529
    %v2532 = vadd.f32 %v2527, %v2529
    %v2533 = vpack.c.bf16 %v2532, %v2531
    %s2534 = scalar_lea.vmem %s6, 16
    %v2535 = vld [vmem:[%s2534] sm:$0xf]
    %v2536 = vld [vmem:[%s2534 + $0x4] sm:$0xf]
    %v2537 = vld [vmem:[%s2534 + $0x8] sm:$0xf]
    %v2538 = vld [vmem:[%s2534 + $0xc] sm:$0xf]
    %v2543 = vunpack.c.l.b16 %v2535
    %v2544 = vunpack.c.l.b16 %v2536
    %v2545 = vunpack.c.l.b16 %v2537
    %v2546 = vunpack.c.l.b16 %v2538
    %v2547 = vpack.c.b16 %v2544, %v2543
    %v2548 = vpack.c.b16 %v2546, %v2545
    %2551 = vrot.lane.b32.xlu0 %v2524, 64
    %v2552 = vpop.permute.xlu0 %2551
    %v2555 = vsel %vm45, %v2533, 0
    %2557 = vmatprep.subr.bf16.mxu0 0
    %2558 = vmatpush1.bf16.msra.mxu0 0
    %2559 = vmatprep.subr.bf16.mxu0 0
    %2560 = vmatpush1.bf16.msra.mxu0 0
    %2561 = vmatprep.subr.bf16.mxu0 0
    %2562 = vmatpush1.bf16.msra.mxu0 0
    %2563 = vmatprep.subr.bf16.mxu0 0
    %2564 = vmatpush1.bf16.msra.mxu0 0
    %2565 = vmatprep.subr.bf16.mxu0 0
    %2566 = vmatpush1.bf16.msra.mxu0 0
    %2567 = vmatprep.subr.bf16.mxu0 0
    %2568 = vmatpush1.bf16.msra.mxu0 0
    %2569 = vmatprep.subr.bf16.mxu0 0
    %2570 = vmatpush1.bf16.msra.mxu0 %v2548
    %2571 = vmatprep.subr.bf16.mxu0 0
    %2572 = vmatpush1.bf16.msra.mxu0 %v2547
    %2573 = vmatprep.subr.bf16.mxu0 0
    %2574 = vmatpush2.bf16.msra.mxu0 0
    %2575 = vmatprep.subr.bf16.mxu0 0
    %2576 = vmatpush2.bf16.msra.mxu0 0
    %2577 = vmatprep.subr.bf16.mxu0 0
    %2578 = vmatpush2.bf16.msra.mxu0 0
    %2579 = vmatprep.subr.bf16.mxu0 0
    %2580 = vmatpush2.bf16.msra.mxu0 0
    %2581 = vmatprep.subr.bf16.mxu0 0
    %2582 = vmatpush2.bf16.msra.mxu0 0
    %2583 = vmatprep.subr.bf16.mxu0 0
    %2584 = vmatpush2.bf16.msra.mxu0 0
    %2585 = vmatprep.subr.bf16.mxu0 0
    %2586 = vmatpush2.bf16.msra.mxu0 0
    %2587 = vmatprep.subr.bf16.mxu0 0
    %2588 = vmatpush2.bf16.msra.mxu0 0
    %2589 = vmatprep.mubr.bf16.mxu0 0
    %2590 = vmatmul.mubr.bf16.gmra.mxu0 %v2555
    %v2591 = vpop.f32.mrf.mxu0
    %v2592 = vadd.f32 %v2552, %v2591
    %v2593 = vpop.f32.mrf.mxu0
    %v2594 = vpop.f32.mrf.mxu0
    %v2595 = vadd.f32 %v2552, %v2594
    %v2596 = vpop.f32.mrf.mxu0
    %2597 = vdwg.mxu0
    %v2598 = vmul.f32 %v2592, %v2592
    %v2599 = vmul.f32 %v2595, %v2595
    %v2600 = vmul.f32 %v2592, %v2598
    %v2601 = vmul.f32 %v2595, %v2599
    %v2602 = vmul.f32 %v2600, 0.044715
    %v2603 = vmul.f32 %v2601, 0.044715
    %v2604 = vadd.f32 %v2592, %v2602
    %v2605 = vadd.f32 %v2595, %v2603
    %v2606 = vmul.f32 %v2604, 0.7978846
    %v2607 = vmul.f32 %v2605, 0.7978846
    %v2608 = vtanh.pop %v2606
    %v2609 = vtanh.pop %v2607
    %v2610 = vadd.f32 %v2608, 1.0
    %v2611 = vadd.f32 %v2609, 1.0
    %v2612 = vmul.f32 %v2610, 0.5
    %v2613 = vmul.f32 %v2611, 0.5
    %v2614 = vmul.f32 %v2592, %v2612
    %v2615 = vmul.f32 %v2595, %v2613
    %v2616 = vpack.c.bf16 %v2615, %v2614
    %s2617 = scalar_lea.vmem %s7, 32
    %v2618 = vld [vmem:[%s2617] sm:$0xf]
    %v2619 = vld [vmem:[%s2617 + $0x4] sm:$0xf]
    %v2620 = vld [vmem:[%s2617 + $0x8] sm:$0xf]
    %v2621 = vld [vmem:[%s2617 + $0xc] sm:$0xf]
    %v2622 = vld [vmem:[%s2617 + $0x10] sm:$0xf]
    %v2623 = vld [vmem:[%s2617 + $0x14] sm:$0xf]
    %v2624 = vld [vmem:[%s2617 + $0x18] sm:$0xf]
    %v2625 = vld [vmem:[%s2617 + $0x1c] sm:$0xf]
    %v2626 = vld [vmem:[%s1422 + $0x2] sm:$0x1]
    %v2628 = vlaneseq
    %v2629 = vshrl.u32 %v2628, 7
    %v2630 = vsub.s32 0, %v2629
    %v2631 = vrot.slane %v2626, %v2630
    %v2641 = vunpack.c.l.b16 %v2618
    %v2642 = vunpack.c.l.b16 %v2619
    %v2643 = vunpack.c.l.b16 %v2620
    %v2644 = vunpack.c.l.b16 %v2621
    %v2645 = vunpack.c.l.b16 %v2622
    %v2646 = vunpack.c.l.b16 %v2623
    %v2647 = vunpack.c.l.b16 %v2624
    %v2648 = vunpack.c.l.b16 %v2625
    %v2649 = vpack.c.b16 %v2642, %v2641
    %v2650 = vpack.c.b16 %v2644, %v2643
    %v2651 = vpack.c.b16 %v2646, %v2645
    %v2652 = vpack.c.b16 %v2648, %v2647
    %v2658 = vsel %vm1329, %v2616, 0
    %2660 = vmatprep.subr.bf16.mxu0 0
    %2661 = vmatpush1.bf16.msra.mxu0 0
    %2662 = vmatprep.subr.bf16.mxu0 0
    %2663 = vmatpush1.bf16.msra.mxu0 0
    %2664 = vmatprep.subr.bf16.mxu0 0
    %2665 = vmatpush1.bf16.msra.mxu0 0
    %2666 = vmatprep.subr.bf16.mxu0 0
    %2667 = vmatpush1.bf16.msra.mxu0 0
    %2668 = vmatprep.subr.bf16.mxu0 0
    %2669 = vmatpush1.bf16.msra.mxu0 %v2652
    %2670 = vmatprep.subr.bf16.mxu0 0
    %2671 = vmatpush1.bf16.msra.mxu0 %v2651
    %2672 = vmatprep.subr.bf16.mxu0 0
    %2673 = vmatpush1.bf16.msra.mxu0 %v2650
    %2674 = vmatprep.subr.bf16.mxu0 0
    %2675 = vmatpush1.bf16.msra.mxu0 %v2649
    %2676 = vmatprep.subr.bf16.mxu0 0
    %2677 = vmatpush2.bf16.msra.mxu0 0
    %2678 = vmatprep.subr.bf16.mxu0 0
    %2679 = vmatpush2.bf16.msra.mxu0 0
    %2680 = vmatprep.subr.bf16.mxu0 0
    %2681 = vmatpush2.bf16.msra.mxu0 0
    %2682 = vmatprep.subr.bf16.mxu0 0
    %2683 = vmatpush2.bf16.msra.mxu0 0
    %2684 = vmatprep.subr.bf16.mxu0 0
    %2685 = vmatpush2.bf16.msra.mxu0 0
    %2686 = vmatprep.subr.bf16.mxu0 0
    %2687 = vmatpush2.bf16.msra.mxu0 0
    %2688 = vmatprep.subr.bf16.mxu0 0
    %2689 = vmatpush2.bf16.msra.mxu0 0
    %2690 = vmatprep.subr.bf16.mxu0 0
    %2691 = vmatpush2.bf16.msra.mxu0 0
    %2692 = vmatprep.mubr.bf16.mxu0 0
    %2693 = vmatmul.mubr.bf16.gmra.mxu0 %v2658
    %v2694 = vpop.f32.mrf.mxu0
    %v2695 = vadd.f32 %v2631, %v2694
    %v2696 = vpop.f32.mrf.mxu0
    %v2697 = vpop.f32.mrf.mxu0
    %v2698 = vadd.f32 %v2631, %v2697
    %v2699 = vpop.f32.mrf.mxu0
    %2700 = vdwg.mxu0
    %v2701 = vadd.f32 %v2531, %v2695
    %v2702 = vadd.f32 %v2532, %v2698
    %v2703 = vsel %vm45, %v2701, 0.0
    %2704 = vadd.xlane.f32.xlu0 %v2703
    %v2705 = vpop.xlane.xlu0 %2704
    %v2706 = vsel %vm45, %v2702, 0.0
    %2707 = vadd.xlane.f32.xlu0 %v2706
    %v2708 = vpop.xlane.xlu0 %2707
    %v2709 = vmul.f32 %v2701, %v2701
    %v2710 = vmul.f32 %v2702, %v2702
    %v2711 = vsel %vm45, %v2709, 0.0
    %2712 = vadd.xlane.f32.xlu0 %v2711
    %v2713 = vpop.xlane.xlu0 %2712
    %v2714 = vsel %vm45, %v2710, 0.0
    %2715 = vadd.xlane.f32.xlu0 %v2714
    %v2716 = vpop.xlane.xlu0 %2715
    %v2717 = vmul.f32 %v2705, 0.03125
    %v2718 = vmul.f32 %v2708, 0.03125
    %v2719 = vmul.f32 %v2713, 0.03125
    %v2720 = vmul.f32 %v2716, 0.03125
    %v2721 = vmul.f32 %v2717, %v2717
    %v2722 = vmul.f32 %v2718, %v2718
    %v2723 = vsub.f32 %v2719, %v2721
    %v2724 = vsub.f32 %v2720, %v2722
    %v2725 = vsub.f32 %v2701, %v2717
    %v2726 = vsub.f32 %v2702, %v2718
    %v2727 = vadd.f32 %v2723, 1e-12
    %v2728 = vadd.f32 %v2724, 1e-12
    %v2729 = vrsqrt.pop %v2727
    %v2730 = vrsqrt.pop %v2728
    %v2731 = vmul.f32 %v2725, %v2729
    %v2732 = vmul.f32 %v2726, %v2730
    %2733 = vrot.lane.b32.xlu0 %v2631, 96
    %v2734 = vpop.permute.xlu0 %2733
    %v2736 = vmul.f32 %v2731, %v2734
    %v2737 = vmul.f32 %v2732, %v2734
    %2738 = vrot.lane.b32.xlu0 %v2631, 64
    %v2739 = vpop.permute.xlu0 %2738
    %v2741 = vadd.f32 %v2736, %v2739
    %v2742 = vadd.f32 %v2737, %v2739
    %v2743 = vpack.c.bf16 %v2742, %v2741
    %v2744 = vld [vmem:[%s8] sm:$0xf]
    %v2745 = vld [vmem:[%s8 + $0x4] sm:$0xf]
    %v2746 = vld [vmem:[%s8 + $0x8] sm:$0xf]
    %v2747 = vld [vmem:[%s8 + $0xc] sm:$0xf]
    %v2752 = vunpack.c.l.b16 %v2744
    %v2753 = vunpack.c.l.b16 %v2745
    %v2754 = vunpack.c.l.b16 %v2746
    %v2755 = vunpack.c.l.b16 %v2747
    %v2756 = vpack.c.b16 %v2753, %v2752
    %v2757 = vpack.c.b16 %v2755, %v2754
    %2760 = vrot.lane.b32.xlu0 %v80, 64
    %v2761 = vpop.permute.xlu0 %2760
    %v2764 = vsel %vm45, %v2743, 0
    %2766 = vmatprep.subr.bf16.mxu0 0
    %2767 = vmatpush1.bf16.msra.mxu0 0
    %2768 = vmatprep.subr.bf16.mxu0 0
    %2769 = vmatpush1.bf16.msra.mxu0 0
    %2770 = vmatprep.subr.bf16.mxu0 0
    %2771 = vmatpush1.bf16.msra.mxu0 0
    %2772 = vmatprep.subr.bf16.mxu0 0
    %2773 = vmatpush1.bf16.msra.mxu0 0
    %2774 = vmatprep.subr.bf16.mxu0 0
    %2775 = vmatpush1.bf16.msra.mxu0 0
    %2776 = vmatprep.subr.bf16.mxu0 0
    %2777 = vmatpush1.bf16.msra.mxu0 0
    %2778 = vmatprep.subr.bf16.mxu0 0
    %2779 = vmatpush1.bf16.msra.mxu0 %v2757
    %2780 = vmatprep.subr.bf16.mxu0 0
    %2781 = vmatpush1.bf16.msra.mxu0 %v2756
    %2782 = vmatprep.subr.bf16.mxu0 0
    %2783 = vmatpush2.bf16.msra.mxu0 0
    %2784 = vmatprep.subr.bf16.mxu0 0
    %2785 = vmatpush2.bf16.msra.mxu0 0
    %2786 = vmatprep.subr.bf16.mxu0 0
    %2787 = vmatpush2.bf16.msra.mxu0 0
    %2788 = vmatprep.subr.bf16.mxu0 0
    %2789 = vmatpush2.bf16.msra.mxu0 0
    %2790 = vmatprep.subr.bf16.mxu0 0
    %2791 = vmatpush2.bf16.msra.mxu0 0
    %2792 = vmatprep.subr.bf16.mxu0 0
    %2793 = vmatpush2.bf16.msra.mxu0 0
    %2794 = vmatprep.subr.bf16.mxu0 0
    %2795 = vmatpush2.bf16.msra.mxu0 0
    %2796 = vmatprep.subr.bf16.mxu0 0
    %2797 = vmatpush2.bf16.msra.mxu0 0
    %2798 = vmatprep.mubr.bf16.mxu0 0
    %2799 = vmatmul.mubr.bf16.gmra.mxu0 %v2764
    %v2800 = vpop.f32.mrf.mxu0
    %v2801 = vadd.f32 %v2761, %v2800
    %v2802 = vpop.f32.mrf.mxu0
    %v2803 = vpop.f32.mrf.mxu0
    %v2804 = vadd.f32 %v2761, %v2803
    %v2805 = vpop.f32.mrf.mxu0
    %2806 = vdwg.mxu0
    %v2809 = vrot.slane %v2804, 7
    %vm2810 = vcmask 1041409
    %v2811 = vsel %vm2810, %v2809, %v2801
    %vm2813 = vcmask 17408
    %2814 = vst.msk [vmem:[#allocation2] sm:$0x3] %vm2813, %v2811
    // Predicated region
    $region38: #{chemberta_classifier_forward.1} parent=1 // pred_check
      _
    $region39: #{chemberta_classifier_forward.1} parent=1 // pred_check_branch
      %2816 = sbr.rel (0) target = $region41
    $region40: #{chemberta_classifier_forward.1} parent=1 // pred_region
      %s2818 = ssub.s32 32, 32
      %2819 = vsyncadd [#allocation3], %s2818
      %s2821 = sshll.u32 [#allocation2], 4
      %s2822 = int_to_ptr.vmem [resolvable:$true] %s2821
      %2824 = dma.vmem_to_hbm [thread:$0]  %s2822, 32, %s9, [#allocation3]
    $region41: #{chemberta_classifier_forward.1} parent=1 // pred_fallthru
      _
    // Predicated region
    $region42: #{chemberta_classifier_forward.1} parent=1 // pred_check
      _
    $region43: #{chemberta_classifier_forward.1} parent=1 // pred_check_branch
      %2826 = sbr.rel (0) target = $region45
    $region44: #{chemberta_classifier_forward.1} parent=1 // pred_region
      %2827 = dma.done [#allocation3], 32
    $region45: #{chemberta_classifier_forward.1} parent=1 // pred_fallthru
      _
    %2828 = vsyncpa [#allocation3], 1

</llo_original>
